<compile_context>
chip_gen: v7x
topology: tpu7x:2x2x1
jax: 0.10.0
libtpu: 0.0.40
codegen_flags: <defaults>
</compile_context>

<pallas_src>
import jax
import jax.numpy as jnp
from jax import lax
from jax.experimental import pallas as pl
from jax.experimental.pallas import tpu as pltpu


def _round_up(x, m):
    return (x + m - 1) // m * m


def _vmem_budget_bytes():
    """Per-core VMEM budget used for tiling decisions (conservative per gen)."""
    try:
        kind = jax.devices()[0].device_kind.lower()
    except Exception:
        kind = ""
    if "v7" in kind:                 # v7x: 64 MiB physical per TensorCore
        return 48 * 1024 * 1024
    return 96 * 1024 * 1024          # v5e / v6e: 128 MiB physical


def _working_set_bytes(H, W, CP, F, WPAD, TH):
    """Rough f32 VMEM working set for a given row-tile height."""
    m = TH * W
    step = 4 * (9 * CP * m                 # im2col patches (upper bound, all taps)
                + 4 * F * m                # f32 accumulator + double-buffered out
                + CP * (TH + 2) * (W + 2))  # padded row slab loaded per step
    fixed = 4 * (CP * (H + 2) * WPAD        # persistent padded-image scratch
                 + 2 * CP * H * W           # double-buffered resident input block
                 + 2 * (3 * F * 3 * CP + F))  # weights + bias
    return fixed + step


def _pick_tile_h(H, W, CP, F, WPAD, budget):
    """Largest TH (multiple of 8, H % TH == 0, (TH*W) % 128 == 0) that fits the
    VMEM budget, preferring M = TH*W <= 8192.  Falls back to TH = H (always a
    legal full-extent block)."""
    legal = [th for th in range(8, H + 1, 8)
             if H % th == 0 and (th * W) % 128 == 0]
    if not legal:
        return H
    fits = [th for th in legal
            if _working_set_bytes(H, W, CP, F, WPAD, th) <= budget]
    if not fits:
        return min(legal)
    pref = [th for th in fits if th * W <= 8192]
    return max(pref) if pref else min(fits)


def motion_diff_conv(x, w_kw, b):
    """Fused 3x3 conv over C' input channels (the collapsed Conv3d).

    x:    (B, C', H, W)  float32, channels-first, UNPADDED
    w_kw: (3, F, 3*C')   per-kw weight slabs, K ordered as (kh, c')
    b:    (F, 1)
    returns (B, F, H*W)  float32 (lane-dense; caller reshapes to (B, F, H, W))
    """
    B, CP, H, W = x.shape
    _, F, K3 = w_kw.shape
    assert K3 == 3 * CP

    WPAD = _round_up(W + 2, 128)             # lane-padded scratch width (free)
    budget = _vmem_budget_bytes()
    TH = _pick_tile_h(H, W, CP, F, WPAD, budget)
    n_row_tiles = H // TH
    M = TH * W

    vmem_limit = int(min(budget,
                         max(32 * 1024 * 1024,
                             _working_set_bytes(H, W, CP, F, WPAD, TH) * 5 // 4
                             + (2 << 20))))

    def kernel(x_ref, w_ref, b_ref, o_ref, xp_ref):
        ri = pl.program_id(1)

        # Fill the padded-image scratch once per batch element (row tile 0):
        # zero only the 1-wide borders, then store the image into the interior.
        # No concatenation relayouts, no full-buffer memset.
        @pl.when(ri == 0)
        def _fill_padded():
            zrow = jnp.zeros((CP, 1, WPAD), jnp.float32)
            xp_ref[:, pl.ds(0, 1), :] = zrow                  # top pad row
            xp_ref[:, pl.ds(H + 1, 1), :] = zrow              # bottom pad row
            zcol = jnp.zeros((CP, H + 2, 1), jnp.float32)
            xp_ref[:, :, pl.ds(0, 1)] = zcol                  # left pad column
            xp_ref[:, :, pl.ds(W + 1, 1)] = zcol              # right pad column
            xp_ref[:, pl.ds(1, H), pl.ds(1, W)] = x_ref[0]    # interior = image

        # Output rows [ri*TH, ri*TH+TH) need padded rows [ri*TH, ri*TH+TH+2).
        row0 = pl.multiple_of(ri * TH, TH)
        xp = xp_ref[:, pl.ds(row0, TH + 2), pl.ds(0, W + 2)]  # (C', TH+2, W+2)

        # im2col with 3 kw-shifted copies (not 9 taps); each kw slab fuses its
        # 3 kh rows into one K = 3*C' MXU contraction.
        acc = jnp.zeros((F, M), jnp.float32)
        for kw in range(3):
            s = xp[:, :, kw:kw + W]                           # (C', TH+2, W)
            p = jnp.concatenate([s[:, kh:kh + TH, :] for kh in range(3)],
                                axis=0)                       # (3C', TH, W)
            acc = acc + jnp.dot(w_ref[kw], p.reshape(3 * CP, M),
                                preferred_element_type=jnp.float32)
        acc = acc + b_ref[...]                                # (F, 1) broadcast
        o_ref[0] = acc.astype(o_ref.dtype)                    # lane-dense store

    return pl.pallas_call(
        kernel,
        out_shape=jax.ShapeDtypeStruct((B, F, H * W), jnp.float32),
        grid=(B, n_row_tiles),
        in_specs=[
            # Whole (C', H, W) image per batch element; the index map ignores the
            # row-tile axis so the block stays resident across row tiles.
            pl.BlockSpec((1, CP, H, W), lambda bi, ri: (bi, 0, 0, 0)),
            pl.BlockSpec((3, F, K3), lambda bi, ri: (0, 0, 0)),
            pl.BlockSpec((F, 1), lambda bi, ri: (0, 0)),
        ],
        # Lane-dense output block: last dim M is a multiple of 128 (or the full
        # extent) -> unmasked vst.
        out_specs=pl.BlockSpec((1, F, M), lambda bi, ri: (bi, 0, ri)),
        scratch_shapes=[pltpu.VMEM((CP, H + 2, WPAD), jnp.float32)],
        compiler_params=pltpu.CompilerParams(
            # Batch axis parallel (megacore); row axis sequential because the
            # padded-image scratch is filled at ri == 0.
            dimension_semantics=("parallel", "arbitrary"),
            vmem_limit_bytes=vmem_limit,
        ),
    )(x, w_kw, b)


def spatiotemporal_forward(x, w3d, bias):
    """Pallas implementation of Spatiotemporal.forward (motion_diff + squeeze).

    x:    (B, num_frames, 3, H, W)   -- same axis convention as the nn.Module
    w3d:  (F, 3, T, 3, 3)            -- PyTorch Conv3d weight layout
    bias: (F,)
    Returns the squeezed motion_diff output in NCHW: (B, F, H, W).
    """
    B, T, Cin, H, W = x.shape
    F, Cin_w, Tw, KH, KW = w3d.shape
    assert Cin == 3 and Cin_w == 3 and KH == 3 and KW == 3
    # Temporal kernel spans the whole clip -> Conv3d output depth == 1 (squeezed).
    assert T == Tw, "squeeze() to 2D requires num_frames == frames_per_group"
    CP = Cin * T

    # FREE reshape (T and channel axes adjacent): (B, T, 3, H, W) -> (B, C', H, W)
    # with fused channel index c' = t*3 + c.  No HBM permute pass.
    x_k = x.reshape(B, CP, H, W).astype(jnp.float32)

    # Weight (F, c, t, kh, kw) -> (kw, F, kh, t, c) -> (3, F, 3*C'), matching the
    # kernel's per-kw K ordering (kh, t*3 + c).  Tiny tensor, negligible cost.
    w_k = jnp.transpose(w3d, (4, 0, 3, 2, 1)).reshape(3, F, 3 * CP)
    w_k = w_k.astype(jnp.float32)
    b_k = bias.reshape(F, 1).astype(jnp.float32)

    out_flat = motion_diff_conv(x_k, w_k, b_k)          # (B, F, H*W)
    # == Conv3d(...).squeeze() in NCHW; final reshape is free (no transpose pass).
    return out_flat.reshape(B, F, H, W)


def _reference_forward(x, w3d, bias):
    """Independent XLA reference (Conv3d collapsed to 2D conv) for validation."""
    B, T, _, H, W = x.shape
    F = w3d.shape[0]
    x_cl = jnp.transpose(x, (0, 2, 1, 3, 4)).reshape(B, 3 * T, H, W)   # C'=c*T+t
    w2d = w3d.reshape(F, 3 * w3d.shape[2], 3, 3)                       # same order
    out = lax.conv_general_dilated(
        x_cl, w2d, window_strides=(1, 1), padding=((1, 1), (1, 1)),
        dimension_numbers=("NCHW", "OIHW", "NCHW"))
    return out + bias[None, :, None, None]


if __name__ == "__main__":
    # Small config implied by the module: frames_per_group=4, motion-diff features=8.
    B, T, C, H, W = 2, 4, 3, 16, 16
    F_out = 8

    key = jax.random.PRNGKey(0)
    kx, kw_key, kb = jax.random.split(key, 3)
    x = jax.random.normal(kx, (B, T, C, H, W), dtype=jnp.float32)
    w3d = jax.random.normal(kw_key, (F_out, C, T, 3, 3), dtype=jnp.float32) * 0.1
    bias = jax.random.normal(kb, (F_out,), dtype=jnp.float32) * 0.1

    out = jax.block_until_ready(spatiotemporal_forward(x, w3d, bias))
    ref = jax.block_until_ready(_reference_forward(x, w3d, bias))

    assert out.shape == (B, F_out, H, W)
    assert jnp.allclose(out, ref, atol=5e-4, rtol=5e-4), "mismatch vs reference conv"

    print("KERNEL_OK")
</pallas_src>

<mosaic_0001>
module attributes {stable_mosaic.version = 11 : i64} {
  func.func @kernel(%arg0: i32, %arg1: i32, %arg2: memref<1x12x16x16xf32, #tpu.memory_space<vmem>>, %arg3: memref<3x8x36xf32, #tpu.memory_space<vmem>>, %arg4: memref<8x1xf32, #tpu.memory_space<vmem>>, %arg5: memref<1x8x256xf32, #tpu.memory_space<vmem>>, %arg6: memref<12x18x128xf32, #tpu.memory_space<vmem>>) attributes {dimension_semantics = [#tpu.dimension_semantics<parallel>, #tpu.dimension_semantics<arbitrary>], iteration_bounds = array<i64: 2, 1>, scalar_prefetch = 0 : i64, scratch_operands = 1 : i64, tpu.core_type = #tpu.core_type<tc>, window_params = [{transform_indices = @transform_0, window_bounds = array<i64: 1, 12, 16, 16>}, {pipeline_mode = #tpu.pipeline_mode<synchronous>, transform_indices = @transform_1, window_bounds = array<i64: 3, 8, 36>}, {pipeline_mode = #tpu.pipeline_mode<synchronous>, transform_indices = @transform_2, window_bounds = array<i64: 8, 1>}, {transform_indices = @transform_3, window_bounds = array<i64: 1, 8, 256>}]} {
    %c0_i32 = arith.constant 0 : i32
    %0 = arith.cmpi eq, %arg1, %c0_i32 : i32
    %1 = arith.extui %0 : i1 to i32
    %c0_i32_0 = arith.constant 0 : i32
    %2 = arith.cmpi ne, %1, %c0_i32_0 : i32
    scf.if %2 {
      %cst_17 = arith.constant 0.000000e+00 : f32
      %44 = vector.broadcast %cst_17 : f32 to vector<12x1x128xf32>
      %c0_18 = arith.constant 0 : index
      %c0_19 = arith.constant 0 : index
      %c0_20 = arith.constant 0 : index
      %45 = vector.load %arg6[%c0_18, %c0_19, %c0_20] : memref<12x18x128xf32, #tpu.memory_space<vmem>>, vector<12x1x128xf32>
      tpu.vector_store %arg6[%c0_18, %c0_19, %c0_20], %44 {strides = array<i32>} : memref<12x18x128xf32, #tpu.memory_space<vmem>>, vector<12x1x128xf32>,
      %c0_21 = arith.constant 0 : index
      %c17 = arith.constant 17 : index
      %c0_22 = arith.constant 0 : index
      %46 = vector.load %arg6[%c0_21, %c17, %c0_22] : memref<12x18x128xf32, #tpu.memory_space<vmem>>, vector<12x1x128xf32>
      tpu.vector_store %arg6[%c0_21, %c17, %c0_22], %44 {strides = array<i32>} : memref<12x18x128xf32, #tpu.memory_space<vmem>>, vector<12x1x128xf32>,
      %cst_23 = arith.constant 0.000000e+00 : f32
      %47 = vector.broadcast %cst_23 : f32 to vector<12x18x1xf32>
      %c0_24 = arith.constant 0 : index
      %c0_25 = arith.constant 0 : index
      %c0_26 = arith.constant 0 : index
      %48 = vector.load %arg6[%c0_24, %c0_25, %c0_26] : memref<12x18x128xf32, #tpu.memory_space<vmem>>, vector<12x18x1xf32>
      tpu.vector_store %arg6[%c0_24, %c0_25, %c0_26], %47 {strides = array<i32>} : memref<12x18x128xf32, #tpu.memory_space<vmem>>, vector<12x18x1xf32>,
      %c0_27 = arith.constant 0 : index
      %c0_28 = arith.constant 0 : index
      %c17_29 = arith.constant 17 : index
      %49 = vector.load %arg6[%c0_27, %c0_28, %c17_29] : memref<12x18x128xf32, #tpu.memory_space<vmem>>, vector<12x18x1xf32>
      tpu.vector_store %arg6[%c0_27, %c0_28, %c17_29], %47 {strides = array<i32>} : memref<12x18x128xf32, #tpu.memory_space<vmem>>, vector<12x18x1xf32>,
      %c0_30 = arith.constant 0 : index
      %c0_31 = arith.constant 0 : index
      %c0_32 = arith.constant 0 : index
      %c0_33 = arith.constant 0 : index
      %50 = vector.load %arg2[%c0_30, %c0_31, %c0_32, %c0_33] : memref<1x12x16x16xf32, #tpu.memory_space<vmem>>, vector<1x12x16x16xf32>
      %51 = vector.shape_cast %50 : vector<1x12x16x16xf32> to vector<12x16x16xf32>
      %c0_34 = arith.constant 0 : index
      %c1_35 = arith.constant 1 : index
      %c1_36 = arith.constant 1 : index
      %52 = vector.load %arg6[%c0_34, %c1_35, %c1_36] : memref<12x18x128xf32, #tpu.memory_space<vmem>>, vector<12x16x16xf32>
      tpu.vector_store %arg6[%c0_34, %c1_35, %c1_36], %51 {strides = array<i32>} : memref<12x18x128xf32, #tpu.memory_space<vmem>>, vector<12x16x16xf32>,
    } else {
    }
    %c16_i32 = arith.constant 16 : i32
    %3 = arith.muli %arg1, %c16_i32 : i32
    %4 = tpu.assume_multiple %3, 16 : i32
    %c0 = arith.constant 0 : index
    %5 = arith.index_cast %4 : i32 to index
    %c0_1 = arith.constant 0 : index
    %6 = vector.load %arg6[%c0, %5, %c0_1] : memref<12x18x128xf32, #tpu.memory_space<vmem>>, vector<12x18x18xf32>
    %cst = arith.constant 0.000000e+00 : f32
    %7 = vector.broadcast %cst : f32 to vector<8x256xf32>
    %8 = vector.extract_strided_slice %6 {offsets = [0, 0, 0], sizes = [12, 18, 16], strides = [1, 1, 1]} : vector<12x18x18xf32> to vector<12x18x16xf32>
    %9 = vector.extract_strided_slice %8 {offsets = [0, 0, 0], sizes = [12, 16, 16], strides = [1, 1, 1]} : vector<12x18x16xf32> to vector<12x16x16xf32>
    %10 = vector.extract_strided_slice %8 {offsets = [0, 1, 0], sizes = [12, 16, 16], strides = [1, 1, 1]} : vector<12x18x16xf32> to vector<12x16x16xf32>
    %11 = vector.extract_strided_slice %8 {offsets = [0, 2, 0], sizes = [12, 16, 16], strides = [1, 1, 1]} : vector<12x18x16xf32> to vector<12x16x16xf32>
    %12 = tpu.concatenate %9, %10, %11 in 0 : vector<12x16x16xf32>, vector<12x16x16xf32>, vector<12x16x16xf32> -> vector<36x16x16xf32>
    %c0_2 = arith.constant 0 : index
    %c0_3 = arith.constant 0 : index
    %c0_4 = arith.constant 0 : index
    %13 = vector.load %arg3[%c0_2, %c0_3, %c0_4] : memref<3x8x36xf32, #tpu.memory_space<vmem>>, vector<1x8x36xf32>
    %14 = vector.shape_cast %13 : vector<1x8x36xf32> to vector<8x36xf32>
    %15 = vector.shape_cast %12 : vector<36x16x16xf32> to vector<36x256xf32>
    %cst_5 = arith.constant dense<0.000000e+00> : vector<8x256xf32>
    %16 = tpu.matmul %14, %15, %cst_5 {dimension_numbers = #tpu.dot_dimension_numbers<[1], [0], [0], [1], [0, 0, 1, 1], [], []>} : vector<8x36xf32>, vector<36x256xf32>, vector<8x256xf32> -> vector<8x256xf32>
    %17 = arith.addf %7, %16 : vector<8x256xf32>
    %18 = vector.extract_strided_slice %6 {offsets = [0, 0, 1], sizes = [12, 18, 16], strides = [1, 1, 1]} : vector<12x18x18xf32> to vector<12x18x16xf32>
    %19 = vector.extract_strided_slice %18 {offsets = [0, 0, 0], sizes = [12, 16, 16], strides = [1, 1, 1]} : vector<12x18x16xf32> to vector<12x16x16xf32>
    %20 = vector.extract_strided_slice %18 {offsets = [0, 1, 0], sizes = [12, 16, 16], strides = [1, 1, 1]} : vector<12x18x16xf32> to vector<12x16x16xf32>
    %21 = vector.extract_strided_slice %18 {offsets = [0, 2, 0], sizes = [12, 16, 16], strides = [1, 1, 1]} : vector<12x18x16xf32> to vector<12x16x16xf32>
    %22 = tpu.concatenate %19, %20, %21 in 0 : vector<12x16x16xf32>, vector<12x16x16xf32>, vector<12x16x16xf32> -> vector<36x16x16xf32>
    %c1 = arith.constant 1 : index
    %c0_6 = arith.constant 0 : index
    %c0_7 = arith.constant 0 : index
    %23 = vector.load %arg3[%c1, %c0_6, %c0_7] : memref<3x8x36xf32, #tpu.memory_space<vmem>>, vector<1x8x36xf32>
    %24 = vector.shape_cast %23 : vector<1x8x36xf32> to vector<8x36xf32>
    %25 = vector.shape_cast %22 : vector<36x16x16xf32> to vector<36x256xf32>
    %cst_8 = arith.constant dense<0.000000e+00> : vector<8x256xf32>
    %26 = tpu.matmul %24, %25, %cst_8 {dimension_numbers = #tpu.dot_dimension_numbers<[1], [0], [0], [1], [0, 0, 1, 1], [], []>} : vector<8x36xf32>, vector<36x256xf32>, vector<8x256xf32> -> vector<8x256xf32>
    %27 = arith.addf %17, %26 : vector<8x256xf32>
    %28 = vector.extract_strided_slice %6 {offsets = [0, 0, 2], sizes = [12, 18, 16], strides = [1, 1, 1]} : vector<12x18x18xf32> to vector<12x18x16xf32>
    %29 = vector.extract_strided_slice %28 {offsets = [0, 0, 0], sizes = [12, 16, 16], strides = [1, 1, 1]} : vector<12x18x16xf32> to vector<12x16x16xf32>
    %30 = vector.extract_strided_slice %28 {offsets = [0, 1, 0], sizes = [12, 16, 16], strides = [1, 1, 1]} : vector<12x18x16xf32> to vector<12x16x16xf32>
    %31 = vector.extract_strided_slice %28 {offsets = [0, 2, 0], sizes = [12, 16, 16], strides = [1, 1, 1]} : vector<12x18x16xf32> to vector<12x16x16xf32>
    %32 = tpu.concatenate %29, %30, %31 in 0 : vector<12x16x16xf32>, vector<12x16x16xf32>, vector<12x16x16xf32> -> vector<36x16x16xf32>
    %c2 = arith.constant 2 : index
    %c0_9 = arith.constant 0 : index
    %c0_10 = arith.constant 0 : index
    %33 = vector.load %arg3[%c2, %c0_9, %c0_10] : memref<3x8x36xf32, #tpu.memory_space<vmem>>, vector<1x8x36xf32>
    %34 = vector.shape_cast %33 : vector<1x8x36xf32> to vector<8x36xf32>
    %35 = vector.shape_cast %32 : vector<36x16x16xf32> to vector<36x256xf32>
    %cst_11 = arith.constant dense<0.000000e+00> : vector<8x256xf32>
    %36 = tpu.matmul %34, %35, %cst_11 {dimension_numbers = #tpu.dot_dimension_numbers<[1], [0], [0], [1], [0, 0, 1, 1], [], []>} : vector<8x36xf32>, vector<36x256xf32>, vector<8x256xf32> -> vector<8x256xf32>
    %37 = arith.addf %27, %36 : vector<8x256xf32>
    %c0_12 = arith.constant 0 : index
    %c0_13 = arith.constant 0 : index
    %38 = vector.load %arg4[%c0_12, %c0_13] : memref<8x1xf32, #tpu.memory_space<vmem>>, vector<8x1xf32>
    %39 = vector.broadcast %38 : vector<8x1xf32> to vector<8x256xf32>
    %40 = arith.addf %37, %39 : vector<8x256xf32>
    %c0_14 = arith.constant 0 : index
    %c0_15 = arith.constant 0 : index
    %c0_16 = arith.constant 0 : index
    %41 = vector.load %arg5[%c0_14, %c0_15, %c0_16] : memref<1x8x256xf32, #tpu.memory_space<vmem>>, vector<1x8x256xf32>
    %42 = vector.shape_cast %41 : vector<1x8x256xf32> to vector<8x256xf32>
    %43 = vector.shape_cast %40 : vector<8x256xf32> to vector<1x8x256xf32>
    tpu.vector_store %arg5[%c0_14, %c0_15, %c0_16], %43 {strides = array<i32>} : memref<1x8x256xf32, #tpu.memory_space<vmem>>, vector<1x8x256xf32>,
    return
  }
  func.func @transform_0(%arg0: i32, %arg1: i32) -> (i32, i32, i32, i32) {
    %c0_i32 = arith.constant 0 : i32
    %c0_i32_0 = arith.constant 0 : i32
    %c0_i32_1 = arith.constant 0 : i32
    %c0_i32_2 = arith.constant 0 : i32
    return %arg0, %c0_i32, %c0_i32_0, %c0_i32_1 : i32, i32, i32, i32
  }
  func.func @transform_1(%arg0: i32, %arg1: i32) -> (i32, i32, i32) {
    %c0_i32 = arith.constant 0 : i32
    %c0_i32_0 = arith.constant 0 : i32
    %c0_i32_1 = arith.constant 0 : i32
    %c0_i32_2 = arith.constant 0 : i32
    return %c0_i32, %c0_i32_0, %c0_i32_1 : i32, i32, i32
  }
  func.func @transform_2(%arg0: i32, %arg1: i32) -> (i32, i32) {
    %c0_i32 = arith.constant 0 : i32
    %c0_i32_0 = arith.constant 0 : i32
    %c0_i32_1 = arith.constant 0 : i32
    return %c0_i32, %c0_i32_0 : i32, i32
  }
  func.func @transform_3(%arg0: i32, %arg1: i32) -> (i32, i32, i32) {
    %c0_i32 = arith.constant 0 : i32
    %c0_i32_0 = arith.constant 0 : i32
    return %arg0, %c0_i32, %arg1 : i32, i32, i32
  }
}

</mosaic_0001>

<llo_original>
// kernel: tpu_custom_call.1
$region0: #{tpu_custom_call.1}
  #allocation0 [shape = 'u32[]', space=smem, size = 0x4, offset = 0x4, fixed_abs, tag = 'smem constant byte address 0x4 - core index']
  #allocation1 [shape = 'u32[144,128]{1,0:T(1,128)}', space=vmem, size = 0x12000, scoped, tag = 'internal scratch']
  #allocation2 [shape = 'f32[12,18,128]{2,1,0:T(8,128)}', space=vmem, size = 0x24000, scoped, tag = 'scratch operand']
  %s0 = inlined_call_operand.hbm [shape: f32[2,12,16,16], index: 0, kind: input, shape index: {}]
  %s1 = inlined_call_operand.hbm [shape: f32[3,8,36], index: 1, kind: input, shape index: {}]
  %s2 = inlined_call_operand.vmem [shape: f32[8,1], index: 2, kind: input, shape index: {}]
  %s3 = inlined_call_operand.hbm [shape: f32[2,8,256], index: 3, kind: output, shape index: {}]
  %s4 = sld [smem:[#allocation0]]
  $region57: #{tpu_custom_call.1} parent=0
    _
  %s6 = ssub.s32 1, %s4
  %s7 = scalar_select 0, %s6, %s4
  $region1: #{tpu_custom_call.1} parent=0
    #allocation3 [shape = 'u8[196608]{0}', space=vmem, size = 0x30000, scoped, tag = 'input window, operand 0']
    #allocation4 [shape = 's32[2]{0}', space=sflag, size = 0x8, scoped, tag = 'scoped memory for tpu_custom_call.1']
    #allocation5 [shape = 's32[2]{0}', space=sflag, size = 0x8, scoped, tag = 'scoped memory for tpu_custom_call.1']
    #allocation6 [shape = 'u8[12288]{0}', space=vmem, size = 0x3000, scoped, tag = 'input window, operand 1, single buffered']
    #allocation7 [shape = 's32[1]{0}', space=sflag, size = 0x4, scoped, tag = 'scoped memory for tpu_custom_call.1']
    #allocation8 [shape = 'u8[16384]{0}', space=vmem, size = 0x4000, scoped, tag = 'output window, operand 0']
    %8 = vsyncpa [#allocation4], 0
    %s9 = scalar_lea.sflag [#allocation4], 1
    %10 = vsyncpa %s9, 0
    %11 = vsyncpa [#allocation7], 0
    %12 = vsyncpa [#allocation5], 0
    %s13 = scalar_lea.sflag [#allocation5], 1
    %14 = vsyncpa %s13, 0
    loop: start=0, step=1, limit=4
    $region2: #{tpu_custom_call.1} parent=1 // loop_pre_header
      _
    $region3: #{tpu_custom_call.1} parent=1 // loop_header
      %s16 = sphi 0, %s20
      %p17 = scmp.ge.s32.totalorder %s16, 4
      %s23 = sphi 0, %s35
      %s24 = sphi 0, %s31
      %s25 = sphi 0, %s23
      %s26 = sphi 0, %s24
      %s27 = sphi 0, %s25
      %s28 = sphi 0, %s26
      %s38 = sphi 0, %s40
      %s41 = sphi 0, %s38
      %s42 = sphi 0, %s41
      %s58 = sphi 0, %s42
      %s62 = sphi 0, %s62
      %s64 = sphi 0, %s62
      %s65 = sphi 0, %s64
      %s79 = sphi 0, %s65
      %s83 = sphi 0, %s83
      %s85 = sphi 0, %s83
      %s86 = sphi 0, %s85
      %s100 = sphi 0, %s86
      %s108 = sphi 0, %s110
      %s111 = sphi 0, %s108
      %s112 = sphi 0, %s111
      %s128 = sphi 0, %s112
    $region4: #{tpu_custom_call.1} parent=1 // loop_header_branch
      %19 = sbr.rel (%p17) target = $region8
    $region5: #{tpu_custom_call.1} parent=1 // loop_body
      %s21 = ssub.s32 %s16, 1
      %s22 = ssub.s32 %s16, 2
      %s29 = sadd.s32 1, %s24
      %p30 = scmp.ge.s32.totalorder %s29, 1
      %s31 = scalar_select %p30, 0, %s29
      %s32 = sadd.s32 1, %s23
      %s33 = scalar_select %p30, %s32, %s23
      %p34 = scmp.ge.s32.totalorder %s33, 2
      %s35 = scalar_select %p34, 0, %s33
      %s36 = ssub.s32 %s23, %s35
      %p37 = scmp.eq.s32.totalorder %s36, 0
      %s39 = sadd.s32 %s38, 1
      %s40 = scalar_select %p37, %s38, %s39
      %p43 = pneg %p37
      %p44 = scmp.eq.s32.totalorder %s16, 1
      %p45 = por %p43, %p44
      %p46 = scmp.ne.s32.totalorder %s38, %s41
      %p47 = scmp.eq.s32.totalorder %s16, 0
      %p48 = por %p46, %p47
      %p49 = scmp.ne.s32.totalorder %s38, %s41
      %p50 = scmp.eq.s32.totalorder %s21, 1
      %p51 = por %p49, %p50
      %p52 = scmp.ne.s32.totalorder %s41, %s42
      %p53 = scmp.eq.s32.totalorder %s21, 0
      %p54 = por %p52, %p53
      %p55 = scmp.ne.s32.totalorder %s41, %s42
      %p56 = scmp.eq.s32.totalorder %s22, 1
      %p57 = por %p55, %p56
      %p59 = scmp.ne.s32.totalorder %s42, %s58
      %p60 = scmp.eq.s32.totalorder %s22, 0
      %p61 = por %p59, %p60
      %s63 = sadd.s32 %s62, 1
      %p66 = scmp.eq.s32.totalorder %s16, 1
      %p67 = scmp.ne.s32.totalorder %s62, %s64
      %p68 = scmp.eq.s32.totalorder %s16, 0
      %p69 = por %p67, %p68
      %p70 = scmp.ne.s32.totalorder %s62, %s64
      %p71 = scmp.eq.s32.totalorder %s21, 1
      %p72 = por %p70, %p71
      %p73 = scmp.ne.s32.totalorder %s64, %s65
      %p74 = scmp.eq.s32.totalorder %s21, 0
      %p75 = por %p73, %p74
      %p76 = scmp.ne.s32.totalorder %s64, %s65
      %p77 = scmp.eq.s32.totalorder %s22, 1
      %p78 = por %p76, %p77
      %p80 = scmp.ne.s32.totalorder %s65, %s79
      %p81 = scmp.eq.s32.totalorder %s22, 0
      %p82 = por %p80, %p81
      %s84 = sadd.s32 %s83, 1
      %p87 = scmp.eq.s32.totalorder %s16, 1
      %p88 = scmp.ne.s32.totalorder %s83, %s85
      %p89 = scmp.eq.s32.totalorder %s16, 0
      %p90 = por %p88, %p89
      %p91 = scmp.ne.s32.totalorder %s83, %s85
      %p92 = scmp.eq.s32.totalorder %s21, 1
      %p93 = por %p91, %p92
      %p94 = scmp.ne.s32.totalorder %s85, %s86
      %p95 = scmp.eq.s32.totalorder %s21, 0
      %p96 = por %p94, %p95
      %p97 = scmp.ne.s32.totalorder %s85, %s86
      %p98 = scmp.eq.s32.totalorder %s22, 1
      %p99 = por %p97, %p98
      %p101 = scmp.ne.s32.totalorder %s86, %s100
      %p102 = scmp.eq.s32.totalorder %s22, 0
      %p103 = por %p101, %p102
      %s104 = ssub.s32 %s23, %s35
      %s105 = ssub.s32 %s24, %s31
      %s106 = sor.u32 %s104, %s105
      %p107 = scmp.eq.s32.totalorder %s106, 0
      %s109 = sadd.s32 %s108, 1
      %s110 = scalar_select %p107, %s108, %s109
      %p113 = pneg %p107
      %p114 = scmp.eq.s32.totalorder %s16, 1
      %p115 = por %p113, %p114
      %p116 = scmp.ne.s32.totalorder %s108, %s111
      %p117 = scmp.eq.s32.totalorder %s16, 0
      %p118 = por %p116, %p117
      %p119 = scmp.ne.s32.totalorder %s108, %s111
      %p120 = scmp.eq.s32.totalorder %s21, 1
      %p121 = por %p119, %p120
      %p122 = scmp.ne.s32.totalorder %s111, %s112
      %p123 = scmp.eq.s32.totalorder %s21, 0
      %p124 = por %p122, %p123
      %p125 = scmp.ne.s32.totalorder %s111, %s112
      %p126 = scmp.eq.s32.totalorder %s22, 1
      %p127 = por %p125, %p126
      %p129 = scmp.ne.s32.totalorder %s112, %s128
      %p130 = scmp.eq.s32.totalorder %s22, 0
      %p131 = por %p129, %p130
      %p132 = scmp.le.s32.totalorder 1, %s16
      %p133 = scmp.lt.s32.totalorder %s16, 3
      %p134 = pnand %p132, %p133
      %p135 = pneg %p134
      // Predicated region
      $region9: #{tpu_custom_call.1} parent=5 // pred_check
        _
      $region10: #{tpu_custom_call.1} parent=5 // pred_check_branch
        %137 = sbr.rel (%p134) target = $region12
      $region11: #{tpu_custom_call.1} parent=5 // pred_region
        %s138 = ssub.s32 %s16, 1
        // Predicated region
        $region13: #{tpu_custom_call.1} parent=11 // pred_check
          %p139 = pneg %p75
        $region14: #{tpu_custom_call.1} parent=11 // pred_check_branch
          %141 = sbr.rel (%p139) target = $region16
        $region15: #{tpu_custom_call.1} parent=11 // pred_region
          %s143 = ssub.s32 384, 384
          %144 = vsyncadd [#allocation7], %s143
          %s145 = sshll.u32 [#allocation6], 4
          %s146 = int_to_ptr.vmem [resolvable:$true] %s145
          %151 = dma.hbm_to_vmem [thread:$0]  %s1, 384, %s146, [#allocation7], 128, 128, 8
        $region16: #{tpu_custom_call.1} parent=11 // pred_fallthru
          _
        // Predicated region
        $region17: #{tpu_custom_call.1} parent=11 // pred_check
          %p152 = pneg %p96
        $region18: #{tpu_custom_call.1} parent=11 // pred_check_branch
          %154 = sbr.rel (%p152) target = $region20
        $region19: #{tpu_custom_call.1} parent=11 // pred_region
          _
        $region20: #{tpu_custom_call.1} parent=11 // pred_fallthru
          _
      $region12: #{tpu_custom_call.1} parent=5 // pred_fallthru
        _
      %p155 = scmp.lt.s32.totalorder %s16, 2
      // Predicated region
      $region21: #{tpu_custom_call.1} parent=5 // pred_check
        %p156 = pneg %p155
      $region22: #{tpu_custom_call.1} parent=5 // pred_check_branch
        %158 = sbr.rel (%p156) target = $region24
      $region23: #{tpu_custom_call.1} parent=5 // pred_region
        // Predicated region
        $region25: #{tpu_custom_call.1} parent=23 // pred_check
          %p159 = pneg %p48
        $region26: #{tpu_custom_call.1} parent=23 // pred_check_branch
          %161 = sbr.rel (%p159) target = $region28
        $region27: #{tpu_custom_call.1} parent=23 // pred_region
          %s162 = sand.u32 %s38, 1
          %s163 = scalar_lea.sflag [#allocation4], %s162
          %s164 = sand.u32 %s38, 1
          %s165 = smul.addr %s164, 192
          %s166 = scalar_lea.vmem [#allocation3], %s165
          %s168 = ssub.s32 3072, 3072
          %169 = vsyncadd %s163, %s168
          %s170 = smul.addr %s23, 24
          %s171 = smul.addr %s170, 128
          %s172 = scalar_lea.hbm %s0, %s171
          %s173 = sshll.u32 %s166, 4
          %s174 = int_to_ptr.vmem [resolvable:$true] %s173
          %179 = dma.hbm_to_vmem [thread:$0]  %s172, 3072, %s174, %s163, 128, 128, 8
        $region28: #{tpu_custom_call.1} parent=23 // pred_fallthru
          _
      $region24: #{tpu_custom_call.1} parent=5 // pred_fallthru
        _
      %p180 = scmp.le.s32.totalorder 1, %s16
      %p181 = scmp.lt.s32.totalorder %s16, 3
      %p182 = pnand %p180, %p181
      %p183 = pneg %p182
      // Predicated region
      $region29: #{tpu_custom_call.1} parent=5 // pred_check
        _
      $region30: #{tpu_custom_call.1} parent=5 // pred_check_branch
        %185 = sbr.rel (%p182) target = $region32
      $region31: #{tpu_custom_call.1} parent=5 // pred_region
        %s186 = ssub.s32 %s16, 1
        %s187 = sand.u32 %s41, 1
        %s188 = scalar_lea.sflag [#allocation4], %s187
        %s189 = sand.u32 %s41, 1
        %s190 = smul.addr %s189, 192
        %s191 = scalar_lea.vmem [#allocation3], %s190
        // Predicated region
        $region33: #{tpu_custom_call.1} parent=31 // pred_check
          %p192 = pneg %p54
        $region34: #{tpu_custom_call.1} parent=31 // pred_check_branch
          %194 = sbr.rel (%p192) target = $region36
        $region35: #{tpu_custom_call.1} parent=31 // pred_region
          %195 = dma.done %s188, 3072
        $region36: #{tpu_custom_call.1} parent=31 // pred_fallthru
          _
        // Predicated region
        $region37: #{tpu_custom_call.1} parent=31 // pred_check
          %p196 = pneg %p75
        $region38: #{tpu_custom_call.1} parent=31 // pred_check_branch
          %198 = sbr.rel (%p196) target = $region40
        $region39: #{tpu_custom_call.1} parent=31 // pred_region
          %199 = dma.done [#allocation7], 384
        $region40: #{tpu_custom_call.1} parent=31 // pred_fallthru
          _
        %s200 = sand.u32 %s41, 1
        %s201 = scalar_lea.sflag [#allocation4], %s200
        %s202 = sand.u32 %s41, 1
        %s203 = smul.addr %s202, 192
        %s204 = scalar_lea.vmem [#allocation3], %s203
        %p205 = pneg %p54
        %p206 = pneg %p51
        %p207 = pneg %p75
        %p208 = pneg %p72
        %p209 = pneg %p96
        %p210 = pneg %p93
        %p211 = pneg %p124
        %p212 = pneg %p121
        %s213 = sand.u32 %s111, 1
        %s214 = scalar_lea.sflag [#allocation5], %s213
        %s215 = sand.u32 %s111, 1
        %s216 = smul.addr %s215, 16
        %s217 = scalar_lea.vmem [#allocation8], %s216
        %s218 = smul.u32 2, %s26
        %p219 = scmp.eq.s32.totalorder %s26, 0
        // Predicated region
        $region41: #{tpu_custom_call.1} parent=31 // pred_check
          %p220 = pneg %p219
        $region42: #{tpu_custom_call.1} parent=31 // pred_check_branch
          %222 = sbr.rel (%p220) target = $region44
        $region43: #{tpu_custom_call.1} parent=31 // pred_region
          %223 = vst [vmem:[#allocation2] sm:$0x1] 0.0
          %224 = vst [vmem:[#allocation2 + $0x18] sm:$0x1] 0.0
          %225 = vst [vmem:[#allocation2 + $0x30] sm:$0x1] 0.0
          %226 = vst [vmem:[#allocation2 + $0x48] sm:$0x1] 0.0
          %227 = vst [vmem:[#allocation2 + $0x60] sm:$0x1] 0.0
          %228 = vst [vmem:[#allocation2 + $0x78] sm:$0x1] 0.0
          %229 = vst [vmem:[#allocation2 + $0x90] sm:$0x1] 0.0
          %230 = vst [vmem:[#allocation2 + $0xa8] sm:$0x1] 0.0
          %231 = vst [vmem:[#allocation2 + $0xc0] sm:$0x1] 0.0
          %232 = vst [vmem:[#allocation2 + $0xd8] sm:$0x1] 0.0
          %233 = vst [vmem:[#allocation2 + $0xf0] sm:$0x1] 0.0
          %234 = vst [vmem:[#allocation2 + $0x108] sm:$0x1] 0.0
          %235 = vst [vmem:[#allocation2 + $0x11] sm:$0x1] 0.0
          %236 = vst [vmem:[#allocation2 + $0x29] sm:$0x1] 0.0
          %237 = vst [vmem:[#allocation2 + $0x41] sm:$0x1] 0.0
          %238 = vst [vmem:[#allocation2 + $0x59] sm:$0x1] 0.0
          %239 = vst [vmem:[#allocation2 + $0x71] sm:$0x1] 0.0
          %240 = vst [vmem:[#allocation2 + $0x89] sm:$0x1] 0.0
          %241 = vst [vmem:[#allocation2 + $0xa1] sm:$0x1] 0.0
          %242 = vst [vmem:[#allocation2 + $0xb9] sm:$0x1] 0.0
          %243 = vst [vmem:[#allocation2 + $0xd1] sm:$0x1] 0.0
          %244 = vst [vmem:[#allocation2 + $0xe9] sm:$0x1] 0.0
          %245 = vst [vmem:[#allocation2 + $0x101] sm:$0x1] 0.0
          %246 = vst [vmem:[#allocation2 + $0x119] sm:$0x1] 0.0
          %vm247 = vcmask 7168
          %248 = vst.msk [vmem:[#allocation2] sm:$0xff] %vm247, 0.0
          %249 = vst.msk [vmem:[#allocation2 + $0x8] sm:$0xff] %vm247, 0.0
          %vm250 = vcmask 1024
          %251 = vst.msk [vmem:[#allocation2 + $0x10] sm:$0x3] %vm250, 0.0
          %252 = vst.msk [vmem:[#allocation2 + $0x18] sm:$0xff] %vm247, 0.0
          %253 = vst.msk [vmem:[#allocation2 + $0x20] sm:$0xff] %vm247, 0.0
          %254 = vst.msk [vmem:[#allocation2 + $0x28] sm:$0x3] %vm250, 0.0
          %255 = vst.msk [vmem:[#allocation2 + $0x30] sm:$0xff] %vm247, 0.0
          %256 = vst.msk [vmem:[#allocation2 + $0x38] sm:$0xff] %vm247, 0.0
          %257 = vst.msk [vmem:[#allocation2 + $0x40] sm:$0x3] %vm250, 0.0
          %258 = vst.msk [vmem:[#allocation2 + $0x48] sm:$0xff] %vm247, 0.0
          %259 = vst.msk [vmem:[#allocation2 + $0x50] sm:$0xff] %vm247, 0.0
          %260 = vst.msk [vmem:[#allocation2 + $0x58] sm:$0x3] %vm250, 0.0
          %261 = vst.msk [vmem:[#allocation2 + $0x60] sm:$0xff] %vm247, 0.0
          %262 = vst.msk [vmem:[#allocation2 + $0x68] sm:$0xff] %vm247, 0.0
          %263 = vst.msk [vmem:[#allocation2 + $0x70] sm:$0x3] %vm250, 0.0
          %264 = vst.msk [vmem:[#allocation2 + $0x78] sm:$0xff] %vm247, 0.0
          %265 = vst.msk [vmem:[#allocation2 + $0x80] sm:$0xff] %vm247, 0.0
          %266 = vst.msk [vmem:[#allocation2 + $0x88] sm:$0x3] %vm250, 0.0
          %267 = vst.msk [vmem:[#allocation2 + $0x90] sm:$0xff] %vm247, 0.0
          %268 = vst.msk [vmem:[#allocation2 + $0x98] sm:$0xff] %vm247, 0.0
          %269 = vst.msk [vmem:[#allocation2 + $0xa0] sm:$0x3] %vm250, 0.0
          %270 = vst.msk [vmem:[#allocation2 + $0xa8] sm:$0xff] %vm247, 0.0
          %271 = vst.msk [vmem:[#allocation2 + $0xb0] sm:$0xff] %vm247, 0.0
          %272 = vst.msk [vmem:[#allocation2 + $0xb8] sm:$0x3] %vm250, 0.0
          %273 = vst.msk [vmem:[#allocation2 + $0xc0] sm:$0xff] %vm247, 0.0
          %274 = vst.msk [vmem:[#allocation2 + $0xc8] sm:$0xff] %vm247, 0.0
          %275 = vst.msk [vmem:[#allocation2 + $0xd0] sm:$0x3] %vm250, 0.0
          %276 = vst.msk [vmem:[#allocation2 + $0xd8] sm:$0xff] %vm247, 0.0
          %277 = vst.msk [vmem:[#allocation2 + $0xe0] sm:$0xff] %vm247, 0.0
          %278 = vst.msk [vmem:[#allocation2 + $0xe8] sm:$0x3] %vm250, 0.0
          %279 = vst.msk [vmem:[#allocation2 + $0xf0] sm:$0xff] %vm247, 0.0
          %280 = vst.msk [vmem:[#allocation2 + $0xf8] sm:$0xff] %vm247, 0.0
          %281 = vst.msk [vmem:[#allocation2 + $0x100] sm:$0x3] %vm250, 0.0
          %282 = vst.msk [vmem:[#allocation2 + $0x108] sm:$0xff] %vm247, 0.0
          %283 = vst.msk [vmem:[#allocation2 + $0x110] sm:$0xff] %vm247, 0.0
          %284 = vst.msk [vmem:[#allocation2 + $0x118] sm:$0x3] %vm250, 0.0
          %vm285 = vcmask 146568
          %286 = vst.msk [vmem:[#allocation2] sm:$0xff] %vm285, 0.0
          %287 = vst.msk [vmem:[#allocation2 + $0x8] sm:$0xff] %vm285, 0.0
          %vm288 = vcmask 140424
          %289 = vst.msk [vmem:[#allocation2 + $0x10] sm:$0x3] %vm288, 0.0
          %290 = vst.msk [vmem:[#allocation2 + $0x18] sm:$0xff] %vm285, 0.0
          %291 = vst.msk [vmem:[#allocation2 + $0x20] sm:$0xff] %vm285, 0.0
          %292 = vst.msk [vmem:[#allocation2 + $0x28] sm:$0x3] %vm288, 0.0
          %293 = vst.msk [vmem:[#allocation2 + $0x30] sm:$0xff] %vm285, 0.0
          %294 = vst.msk [vmem:[#allocation2 + $0x38] sm:$0xff] %vm285, 0.0
          %295 = vst.msk [vmem:[#allocation2 + $0x40] sm:$0x3] %vm288, 0.0
          %296 = vst.msk [vmem:[#allocation2 + $0x48] sm:$0xff] %vm285, 0.0
          %297 = vst.msk [vmem:[#allocation2 + $0x50] sm:$0xff] %vm285, 0.0
          %298 = vst.msk [vmem:[#allocation2 + $0x58] sm:$0x3] %vm288, 0.0
          %299 = vst.msk [vmem:[#allocation2 + $0x60] sm:$0xff] %vm285, 0.0
          %300 = vst.msk [vmem:[#allocation2 + $0x68] sm:$0xff] %vm285, 0.0
          %301 = vst.msk [vmem:[#allocation2 + $0x70] sm:$0x3] %vm288, 0.0
          %302 = vst.msk [vmem:[#allocation2 + $0x78] sm:$0xff] %vm285, 0.0
          %303 = vst.msk [vmem:[#allocation2 + $0x80] sm:$0xff] %vm285, 0.0
          %304 = vst.msk [vmem:[#allocation2 + $0x88] sm:$0x3] %vm288, 0.0
          %305 = vst.msk [vmem:[#allocation2 + $0x90] sm:$0xff] %vm285, 0.0
          %306 = vst.msk [vmem:[#allocation2 + $0x98] sm:$0xff] %vm285, 0.0
          %307 = vst.msk [vmem:[#allocation2 + $0xa0] sm:$0x3] %vm288, 0.0
          %308 = vst.msk [vmem:[#allocation2 + $0xa8] sm:$0xff] %vm285, 0.0
          %309 = vst.msk [vmem:[#allocation2 + $0xb0] sm:$0xff] %vm285, 0.0
          %310 = vst.msk [vmem:[#allocation2 + $0xb8] sm:$0x3] %vm288, 0.0
          %311 = vst.msk [vmem:[#allocation2 + $0xc0] sm:$0xff] %vm285, 0.0
          %312 = vst.msk [vmem:[#allocation2 + $0xc8] sm:$0xff] %vm285, 0.0
          %313 = vst.msk [vmem:[#allocation2 + $0xd0] sm:$0x3] %vm288, 0.0
          %314 = vst.msk [vmem:[#allocation2 + $0xd8] sm:$0xff] %vm285, 0.0
          %315 = vst.msk [vmem:[#allocation2 + $0xe0] sm:$0xff] %vm285, 0.0
          %316 = vst.msk [vmem:[#allocation2 + $0xe8] sm:$0x3] %vm288, 0.0
          %317 = vst.msk [vmem:[#allocation2 + $0xf0] sm:$0xff] %vm285, 0.0
          %318 = vst.msk [vmem:[#allocation2 + $0xf8] sm:$0xff] %vm285, 0.0
          %319 = vst.msk [vmem:[#allocation2 + $0x100] sm:$0x3] %vm288, 0.0
          %320 = vst.msk [vmem:[#allocation2 + $0x108] sm:$0xff] %vm285, 0.0
          %321 = vst.msk [vmem:[#allocation2 + $0x110] sm:$0xff] %vm285, 0.0
          %322 = vst.msk [vmem:[#allocation2 + $0x118] sm:$0x3] %vm288, 0.0
          %v323 = vld [vmem:[%s191] sm:$0xff]
          %v324 = vld [vmem:[%s191 + $0x8] sm:$0xff]
          %v325 = vld [vmem:[%s191 + $0x10] sm:$0xff]
          %v326 = vld [vmem:[%s191 + $0x18] sm:$0xff]
          %v327 = vld [vmem:[%s191 + $0x20] sm:$0xff]
          %v328 = vld [vmem:[%s191 + $0x28] sm:$0xff]
          %v329 = vld [vmem:[%s191 + $0x30] sm:$0xff]
          %v330 = vld [vmem:[%s191 + $0x38] sm:$0xff]
          %v331 = vld [vmem:[%s191 + $0x40] sm:$0xff]
          %v332 = vld [vmem:[%s191 + $0x48] sm:$0xff]
          %v333 = vld [vmem:[%s191 + $0x50] sm:$0xff]
          %v334 = vld [vmem:[%s191 + $0x58] sm:$0xff]
          %v335 = vld [vmem:[%s191 + $0x60] sm:$0xff]
          %v336 = vld [vmem:[%s191 + $0x68] sm:$0xff]
          %v337 = vld [vmem:[%s191 + $0x70] sm:$0xff]
          %v338 = vld [vmem:[%s191 + $0x78] sm:$0xff]
          %v339 = vld [vmem:[%s191 + $0x80] sm:$0xff]
          %v340 = vld [vmem:[%s191 + $0x88] sm:$0xff]
          %v341 = vld [vmem:[%s191 + $0x90] sm:$0xff]
          %v342 = vld [vmem:[%s191 + $0x98] sm:$0xff]
          %v343 = vld [vmem:[%s191 + $0xa0] sm:$0xff]
          %v344 = vld [vmem:[%s191 + $0xa8] sm:$0xff]
          %v345 = vld [vmem:[%s191 + $0xb0] sm:$0xff]
          %v346 = vld [vmem:[%s191 + $0xb8] sm:$0xff]
          %371 = vrot.lane.b32.xlu0 %v323, 1
          %v372 = vpop.permute.xlu0 %371
          %373 = vrot.lane.b32.xlu0 %v324, 1
          %v374 = vpop.permute.xlu0 %373
          %375 = vrot.lane.b32.xlu0 %v325, 1
          %v376 = vpop.permute.xlu0 %375
          %377 = vrot.lane.b32.xlu0 %v326, 1
          %v378 = vpop.permute.xlu0 %377
          %379 = vrot.lane.b32.xlu0 %v327, 1
          %v380 = vpop.permute.xlu0 %379
          %381 = vrot.lane.b32.xlu0 %v328, 1
          %v382 = vpop.permute.xlu0 %381
          %383 = vrot.lane.b32.xlu0 %v329, 1
          %v384 = vpop.permute.xlu0 %383
          %385 = vrot.lane.b32.xlu0 %v330, 1
          %v386 = vpop.permute.xlu0 %385
          %387 = vrot.lane.b32.xlu0 %v331, 1
          %v388 = vpop.permute.xlu0 %387
          %389 = vrot.lane.b32.xlu0 %v332, 1
          %v390 = vpop.permute.xlu0 %389
          %391 = vrot.lane.b32.xlu0 %v333, 1
          %v392 = vpop.permute.xlu0 %391
          %393 = vrot.lane.b32.xlu0 %v334, 1
          %v394 = vpop.permute.xlu0 %393
          %395 = vrot.lane.b32.xlu0 %v335, 1
          %v396 = vpop.permute.xlu0 %395
          %397 = vrot.lane.b32.xlu0 %v336, 1
          %v398 = vpop.permute.xlu0 %397
          %399 = vrot.lane.b32.xlu0 %v337, 1
          %v400 = vpop.permute.xlu0 %399
          %401 = vrot.lane.b32.xlu0 %v338, 1
          %v402 = vpop.permute.xlu0 %401
          %403 = vrot.lane.b32.xlu0 %v339, 1
          %v404 = vpop.permute.xlu0 %403
          %405 = vrot.lane.b32.xlu0 %v340, 1
          %v406 = vpop.permute.xlu0 %405
          %407 = vrot.lane.b32.xlu0 %v341, 1
          %v408 = vpop.permute.xlu0 %407
          %409 = vrot.lane.b32.xlu0 %v342, 1
          %v410 = vpop.permute.xlu0 %409
          %411 = vrot.lane.b32.xlu0 %v343, 1
          %v412 = vpop.permute.xlu0 %411
          %413 = vrot.lane.b32.xlu0 %v344, 1
          %v414 = vpop.permute.xlu0 %413
          %415 = vrot.lane.b32.xlu0 %v345, 1
          %v416 = vpop.permute.xlu0 %415
          %417 = vrot.lane.b32.xlu0 %v346, 1
          %v418 = vpop.permute.xlu0 %417
          %vm443 = vcmask 138248
          %444 = vst.msk [vmem:[#allocation2 + $0x1] sm:$0xff] %vm443, %v372
          %445 = vst.msk [vmem:[#allocation2 + $0x9] sm:$0xff] %vm443, %v374
          %446 = vst.msk [vmem:[#allocation2 + $0x19] sm:$0xff] %vm443, %v376
          %447 = vst.msk [vmem:[#allocation2 + $0x21] sm:$0xff] %vm443, %v378
          %448 = vst.msk [vmem:[#allocation2 + $0x31] sm:$0xff] %vm443, %v380
          %449 = vst.msk [vmem:[#allocation2 + $0x39] sm:$0xff] %vm443, %v382
          %450 = vst.msk [vmem:[#allocation2 + $0x49] sm:$0xff] %vm443, %v384
          %451 = vst.msk [vmem:[#allocation2 + $0x51] sm:$0xff] %vm443, %v386
          %452 = vst.msk [vmem:[#allocation2 + $0x61] sm:$0xff] %vm443, %v388
          %453 = vst.msk [vmem:[#allocation2 + $0x69] sm:$0xff] %vm443, %v390
          %454 = vst.msk [vmem:[#allocation2 + $0x79] sm:$0xff] %vm443, %v392
          %455 = vst.msk [vmem:[#allocation2 + $0x81] sm:$0xff] %vm443, %v394
          %456 = vst.msk [vmem:[#allocation2 + $0x91] sm:$0xff] %vm443, %v396
          %457 = vst.msk [vmem:[#allocation2 + $0x99] sm:$0xff] %vm443, %v398
          %458 = vst.msk [vmem:[#allocation2 + $0xa9] sm:$0xff] %vm443, %v400
          %459 = vst.msk [vmem:[#allocation2 + $0xb1] sm:$0xff] %vm443, %v402
          %460 = vst.msk [vmem:[#allocation2 + $0xc1] sm:$0xff] %vm443, %v404
          %461 = vst.msk [vmem:[#allocation2 + $0xc9] sm:$0xff] %vm443, %v406
          %462 = vst.msk [vmem:[#allocation2 + $0xd9] sm:$0xff] %vm443, %v408
          %463 = vst.msk [vmem:[#allocation2 + $0xe1] sm:$0xff] %vm443, %v410
          %464 = vst.msk [vmem:[#allocation2 + $0xf1] sm:$0xff] %vm443, %v412
          %465 = vst.msk [vmem:[#allocation2 + $0xf9] sm:$0xff] %vm443, %v414
          %466 = vst.msk [vmem:[#allocation2 + $0x109] sm:$0xff] %vm443, %v416
          %467 = vst.msk [vmem:[#allocation2 + $0x111] sm:$0xff] %vm443, %v418
        $region44: #{tpu_custom_call.1} parent=31 // pred_fallthru
          _
        %s468 = smul.u32 %s26, 16
        %s469 = scalar_lea.vmem [#allocation2], %s468
        %v470 = vld [vmem:[%s469] sm:$0xff]
        %v471 = vld [vmem:[%s469 + $0x8] sm:$0xff]
        %v472 = vld [vmem:[%s469 + $0x10] sm:$0x3]
        %v473 = vld [vmem:[%s469 + $0x18] sm:$0xff]
        %v474 = vld [vmem:[%s469 + $0x20] sm:$0xff]
        %v475 = vld [vmem:[%s469 + $0x28] sm:$0x3]
        %v476 = vld [vmem:[%s469 + $0x30] sm:$0xff]
        %v477 = vld [vmem:[%s469 + $0x38] sm:$0xff]
        %v478 = vld [vmem:[%s469 + $0x40] sm:$0x3]
        %v479 = vld [vmem:[%s469 + $0x48] sm:$0xff]
        %v480 = vld [vmem:[%s469 + $0x50] sm:$0xff]
        %v481 = vld [vmem:[%s469 + $0x58] sm:$0x3]
        %v482 = vld [vmem:[%s469 + $0x60] sm:$0xff]
        %v483 = vld [vmem:[%s469 + $0x68] sm:$0xff]
        %v484 = vld [vmem:[%s469 + $0x70] sm:$0x3]
        %v485 = vld [vmem:[%s469 + $0x78] sm:$0xff]
        %v486 = vld [vmem:[%s469 + $0x80] sm:$0xff]
        %v487 = vld [vmem:[%s469 + $0x88] sm:$0x3]
        %v488 = vld [vmem:[%s469 + $0x90] sm:$0xff]
        %v489 = vld [vmem:[%s469 + $0x98] sm:$0xff]
        %v490 = vld [vmem:[%s469 + $0xa0] sm:$0x3]
        %v491 = vld [vmem:[%s469 + $0xa8] sm:$0xff]
        %v492 = vld [vmem:[%s469 + $0xb0] sm:$0xff]
        %v493 = vld [vmem:[%s469 + $0xb8] sm:$0x3]
        %v494 = vld [vmem:[%s469 + $0xc0] sm:$0xff]
        %v495 = vld [vmem:[%s469 + $0xc8] sm:$0xff]
        %v496 = vld [vmem:[%s469 + $0xd0] sm:$0x3]
        %v497 = vld [vmem:[%s469 + $0xd8] sm:$0xff]
        %v498 = vld [vmem:[%s469 + $0xe0] sm:$0xff]
        %v499 = vld [vmem:[%s469 + $0xe8] sm:$0x3]
        %v500 = vld [vmem:[%s469 + $0xf0] sm:$0xff]
        %v501 = vld [vmem:[%s469 + $0xf8] sm:$0xff]
        %v502 = vld [vmem:[%s469 + $0x100] sm:$0x3]
        %v503 = vld [vmem:[%s469 + $0x108] sm:$0xff]
        %v504 = vld [vmem:[%s469 + $0x110] sm:$0xff]
        %v505 = vld [vmem:[%s469 + $0x118] sm:$0x3]
        %vm542 = vcmask 1046528
        %v543 = vrot.slane %v470, 1
        %v544 = vrot.slane %v471, 1
        %v545 = vsel %vm542, %v543, %v544
        %v546 = vrot.slane %v472, 1
        %v547 = vsel %vm542, %v544, %v546
        %v548 = vrot.slane %v473, 1
        %v549 = vrot.slane %v474, 1
        %v550 = vsel %vm542, %v548, %v549
        %v551 = vrot.slane %v475, 1
        %v552 = vsel %vm542, %v549, %v551
        %v553 = vrot.slane %v476, 1
        %v554 = vrot.slane %v477, 1
        %v555 = vsel %vm542, %v553, %v554
        %v556 = vrot.slane %v478, 1
        %v557 = vsel %vm542, %v554, %v556
        %v558 = vrot.slane %v479, 1
        %v559 = vrot.slane %v480, 1
        %v560 = vsel %vm542, %v558, %v559
        %v561 = vrot.slane %v481, 1
        %v562 = vsel %vm542, %v559, %v561
        %v563 = vrot.slane %v482, 1
        %v564 = vrot.slane %v483, 1
        %v565 = vsel %vm542, %v563, %v564
        %v566 = vrot.slane %v484, 1
        %v567 = vsel %vm542, %v564, %v566
        %v568 = vrot.slane %v485, 1
        %v569 = vrot.slane %v486, 1
        %v570 = vsel %vm542, %v568, %v569
        %v571 = vrot.slane %v487, 1
        %v572 = vsel %vm542, %v569, %v571
        %v573 = vrot.slane %v488, 1
        %v574 = vrot.slane %v489, 1
        %v575 = vsel %vm542, %v573, %v574
        %v576 = vrot.slane %v490, 1
        %v577 = vsel %vm542, %v574, %v576
        %v578 = vrot.slane %v491, 1
        %v579 = vrot.slane %v492, 1
        %v580 = vsel %vm542, %v578, %v579
        %v581 = vrot.slane %v493, 1
        %v582 = vsel %vm542, %v579, %v581
        %v583 = vrot.slane %v494, 1
        %v584 = vrot.slane %v495, 1
        %v585 = vsel %vm542, %v583, %v584
        %v586 = vrot.slane %v496, 1
        %v587 = vsel %vm542, %v584, %v586
        %v588 = vrot.slane %v497, 1
        %v589 = vrot.slane %v498, 1
        %v590 = vsel %vm542, %v588, %v589
        %v591 = vrot.slane %v499, 1
        %v592 = vsel %vm542, %v589, %v591
        %v593 = vrot.slane %v500, 1
        %v594 = vrot.slane %v501, 1
        %v595 = vsel %vm542, %v593, %v594
        %v596 = vrot.slane %v502, 1
        %v597 = vsel %vm542, %v594, %v596
        %v598 = vrot.slane %v503, 1
        %v599 = vrot.slane %v504, 1
        %v600 = vsel %vm542, %v598, %v599
        %v601 = vrot.slane %v505, 1
        %v602 = vsel %vm542, %v599, %v601
        %vm627 = vcmask 1045504
        %v628 = vrot.slane %v470, 2
        %v629 = vrot.slane %v471, 2
        %v630 = vsel %vm627, %v628, %v629
        %v631 = vrot.slane %v472, 2
        %v632 = vsel %vm627, %v629, %v631
        %v633 = vrot.slane %v473, 2
        %v634 = vrot.slane %v474, 2
        %v635 = vsel %vm627, %v633, %v634
        %v636 = vrot.slane %v475, 2
        %v637 = vsel %vm627, %v634, %v636
        %v638 = vrot.slane %v476, 2
        %v639 = vrot.slane %v477, 2
        %v640 = vsel %vm627, %v638, %v639
        %v641 = vrot.slane %v478, 2
        %v642 = vsel %vm627, %v639, %v641
        %v643 = vrot.slane %v479, 2
        %v644 = vrot.slane %v480, 2
        %v645 = vsel %vm627, %v643, %v644
        %v646 = vrot.slane %v481, 2
        %v647 = vsel %vm627, %v644, %v646
        %v648 = vrot.slane %v482, 2
        %v649 = vrot.slane %v483, 2
        %v650 = vsel %vm627, %v648, %v649
        %v651 = vrot.slane %v484, 2
        %v652 = vsel %vm627, %v649, %v651
        %v653 = vrot.slane %v485, 2
        %v654 = vrot.slane %v486, 2
        %v655 = vsel %vm627, %v653, %v654
        %v656 = vrot.slane %v487, 2
        %v657 = vsel %vm627, %v654, %v656
        %v658 = vrot.slane %v488, 2
        %v659 = vrot.slane %v489, 2
        %v660 = vsel %vm627, %v658, %v659
        %v661 = vrot.slane %v490, 2
        %v662 = vsel %vm627, %v659, %v661
        %v663 = vrot.slane %v491, 2
        %v664 = vrot.slane %v492, 2
        %v665 = vsel %vm627, %v663, %v664
        %v666 = vrot.slane %v493, 2
        %v667 = vsel %vm627, %v664, %v666
        %v668 = vrot.slane %v494, 2
        %v669 = vrot.slane %v495, 2
        %v670 = vsel %vm627, %v668, %v669
        %v671 = vrot.slane %v496, 2
        %v672 = vsel %vm627, %v669, %v671
        %v673 = vrot.slane %v497, 2
        %v674 = vrot.slane %v498, 2
        %v675 = vsel %vm627, %v673, %v674
        %v676 = vrot.slane %v499, 2
        %v677 = vsel %vm627, %v674, %v676
        %v678 = vrot.slane %v500, 2
        %v679 = vrot.slane %v501, 2
        %v680 = vsel %vm627, %v678, %v679
        %v681 = vrot.slane %v502, 2
        %v682 = vsel %vm627, %v679, %v681
        %v683 = vrot.slane %v503, 2
        %v684 = vrot.slane %v504, 2
        %v685 = vsel %vm627, %v683, %v684
        %v686 = vrot.slane %v505, 2
        %v687 = vsel %vm627, %v684, %v686
        %v712 = vld [vmem:[#allocation6] sm:$0xff]
        %v713 = vcombine.low %v470, %v476
        %v714 = vcombine.high %v470, %v476
        %v716 = vunpack.c.l.s4 1983009808
        %v717 = vunpack.c.0.s8 %v716
        %v718 = vlaneseq
        %v719 = vshrl.u32 %v718, 7
        %v720 = vsub.s32 %v717, %v719
        %v721 = vrot.slane %v713, %v720
        %v723 = vunpack.c.l.s4 1983009808
        %v724 = vunpack.c.0.s8 %v723
        %v725 = vlaneseq
        %v726 = vshrl.u32 %v725, 7
        %v727 = vsub.s32 %v724, %v726
        %v728 = vrot.slane %v714, %v727
        %v729 = vcombine.low %v473, %v479
        %v730 = vcombine.high %v473, %v479
        %v732 = vunpack.c.l.s4 1983009808
        %v733 = vunpack.c.0.s8 %v732
        %v734 = vlaneseq
        %v735 = vshrl.u32 %v734, 7
        %v736 = vsub.s32 %v733, %v735
        %v737 = vrot.slane %v729, %v736
        %v739 = vunpack.c.l.s4 1983009808
        %v740 = vunpack.c.0.s8 %v739
        %v741 = vlaneseq
        %v742 = vshrl.u32 %v741, 7
        %v743 = vsub.s32 %v740, %v742
        %v744 = vrot.slane %v730, %v743
        %v745 = vcombine.low %v482, %v488
        %v746 = vcombine.high %v482, %v488
        %v748 = vunpack.c.l.s4 1983009808
        %v749 = vunpack.c.0.s8 %v748
        %v750 = vlaneseq
        %v751 = vshrl.u32 %v750, 7
        %v752 = vsub.s32 %v749, %v751
        %v753 = vrot.slane %v745, %v752
        %v755 = vunpack.c.l.s4 1983009808
        %v756 = vunpack.c.0.s8 %v755
        %v757 = vlaneseq
        %v758 = vshrl.u32 %v757, 7
        %v759 = vsub.s32 %v756, %v758
        %v760 = vrot.slane %v746, %v759
        %v761 = vcombine.low %v485, %v491
        %v762 = vcombine.high %v485, %v491
        %v764 = vunpack.c.l.s4 1983009808
        %v765 = vunpack.c.0.s8 %v764
        %v766 = vlaneseq
        %v767 = vshrl.u32 %v766, 7
        %v768 = vsub.s32 %v765, %v767
        %v769 = vrot.slane %v761, %v768
        %v771 = vunpack.c.l.s4 1983009808
        %v772 = vunpack.c.0.s8 %v771
        %v773 = vlaneseq
        %v774 = vshrl.u32 %v773, 7
        %v775 = vsub.s32 %v772, %v774
        %v776 = vrot.slane %v762, %v775
        %v777 = vcombine.low %v721, %v737
        %v778 = vcombine.high %v721, %v737
        %v780 = vunpack.c.l.s4 1934713408
        %v781 = vunpack.c.0.s8 %v780
        %v782 = vlaneseq
        %v783 = vshrl.u32 %v782, 7
        %v784 = vsub.s32 %v781, %v783
        %v785 = vrot.slane %v777, %v784
        %v787 = vunpack.c.l.s4 1934713408
        %v788 = vunpack.c.0.s8 %v787
        %v789 = vlaneseq
        %v790 = vshrl.u32 %v789, 7
        %v791 = vsub.s32 %v788, %v790
        %v792 = vrot.slane %v778, %v791
        %v793 = vcombine.low %v728, %v744
        %v794 = vcombine.high %v728, %v744
        %v796 = vunpack.c.l.s4 1934713408
        %v797 = vunpack.c.0.s8 %v796
        %v798 = vlaneseq
        %v799 = vshrl.u32 %v798, 7
        %v800 = vsub.s32 %v797, %v799
        %v801 = vrot.slane %v793, %v800
        %v803 = vunpack.c.l.s4 1934713408
        %v804 = vunpack.c.0.s8 %v803
        %v805 = vlaneseq
        %v806 = vshrl.u32 %v805, 7
        %v807 = vsub.s32 %v804, %v806
        %v808 = vrot.slane %v794, %v807
        %v809 = vcombine.low %v753, %v769
        %v810 = vcombine.high %v753, %v769
        %v812 = vunpack.c.l.s4 1934713408
        %v813 = vunpack.c.0.s8 %v812
        %v814 = vlaneseq
        %v815 = vshrl.u32 %v814, 7
        %v816 = vsub.s32 %v813, %v815
        %v817 = vrot.slane %v809, %v816
        %v819 = vunpack.c.l.s4 1934713408
        %v820 = vunpack.c.0.s8 %v819
        %v821 = vlaneseq
        %v822 = vshrl.u32 %v821, 7
        %v823 = vsub.s32 %v820, %v822
        %v824 = vrot.slane %v810, %v823
        %v825 = vcombine.low %v760, %v776
        %v826 = vcombine.high %v760, %v776
        %v828 = vunpack.c.l.s4 1934713408
        %v829 = vunpack.c.0.s8 %v828
        %v830 = vlaneseq
        %v831 = vshrl.u32 %v830, 7
        %v832 = vsub.s32 %v829, %v831
        %v833 = vrot.slane %v825, %v832
        %v835 = vunpack.c.l.s4 1934713408
        %v836 = vunpack.c.0.s8 %v835
        %v837 = vlaneseq
        %v838 = vshrl.u32 %v837, 7
        %v839 = vsub.s32 %v836, %v838
        %v840 = vrot.slane %v826, %v839
        %v841 = vcombine.low %v785, %v817
        %v842 = vcombine.high %v785, %v817
        %v843 = vcombine.low %v792, %v824
        %v844 = vcombine.high %v792, %v824
        %v845 = vcombine.low %v801, %v833
        %v846 = vcombine.high %v801, %v833
        %v847 = vcombine.low %v808, %v840
        %v848 = vcombine.high %v808, %v840
        %v849 = vcombine.low %v494, %v500
        %v850 = vcombine.high %v494, %v500
        %v852 = vunpack.c.l.s4 1983009808
        %v853 = vunpack.c.0.s8 %v852
        %v854 = vlaneseq
        %v855 = vshrl.u32 %v854, 7
        %v856 = vsub.s32 %v853, %v855
        %v857 = vrot.slane %v849, %v856
        %v859 = vunpack.c.l.s4 1983009808
        %v860 = vunpack.c.0.s8 %v859
        %v861 = vlaneseq
        %v862 = vshrl.u32 %v861, 7
        %v863 = vsub.s32 %v860, %v862
        %v864 = vrot.slane %v850, %v863
        %v865 = vcombine.low %v497, %v503
        %v866 = vcombine.high %v497, %v503
        %v868 = vunpack.c.l.s4 1983009808
        %v869 = vunpack.c.0.s8 %v868
        %v870 = vlaneseq
        %v871 = vshrl.u32 %v870, 7
        %v872 = vsub.s32 %v869, %v871
        %v873 = vrot.slane %v865, %v872
        %v875 = vunpack.c.l.s4 1983009808
        %v876 = vunpack.c.0.s8 %v875
        %v877 = vlaneseq
        %v878 = vshrl.u32 %v877, 7
        %v879 = vsub.s32 %v876, %v878
        %v880 = vrot.slane %v866, %v879
        %v881 = vcombine.low %v545, %v555
        %v882 = vcombine.high %v545, %v555
        %v884 = vunpack.c.l.s4 1983009808
        %v885 = vunpack.c.0.s8 %v884
        %v886 = vlaneseq
        %v887 = vshrl.u32 %v886, 7
        %v888 = vsub.s32 %v885, %v887
        %v889 = vrot.slane %v881, %v888
        %v891 = vunpack.c.l.s4 1983009808
        %v892 = vunpack.c.0.s8 %v891
        %v893 = vlaneseq
        %v894 = vshrl.u32 %v893, 7
        %v895 = vsub.s32 %v892, %v894
        %v896 = vrot.slane %v882, %v895
        %v897 = vcombine.low %v550, %v560
        %v898 = vcombine.high %v550, %v560
        %v900 = vunpack.c.l.s4 1983009808
        %v901 = vunpack.c.0.s8 %v900
        %v902 = vlaneseq
        %v903 = vshrl.u32 %v902, 7
        %v904 = vsub.s32 %v901, %v903
        %v905 = vrot.slane %v897, %v904
        %v907 = vunpack.c.l.s4 1983009808
        %v908 = vunpack.c.0.s8 %v907
        %v909 = vlaneseq
        %v910 = vshrl.u32 %v909, 7
        %v911 = vsub.s32 %v908, %v910
        %v912 = vrot.slane %v898, %v911
        %v913 = vcombine.low %v857, %v873
        %v914 = vcombine.high %v857, %v873
        %v916 = vunpack.c.l.s4 1934713408
        %v917 = vunpack.c.0.s8 %v916
        %v918 = vlaneseq
        %v919 = vshrl.u32 %v918, 7
        %v920 = vsub.s32 %v917, %v919
        %v921 = vrot.slane %v913, %v920
        %v923 = vunpack.c.l.s4 1934713408
        %v924 = vunpack.c.0.s8 %v923
        %v925 = vlaneseq
        %v926 = vshrl.u32 %v925, 7
        %v927 = vsub.s32 %v924, %v926
        %v928 = vrot.slane %v914, %v927
        %v929 = vcombine.low %v864, %v880
        %v930 = vcombine.high %v864, %v880
        %v932 = vunpack.c.l.s4 1934713408
        %v933 = vunpack.c.0.s8 %v932
        %v934 = vlaneseq
        %v935 = vshrl.u32 %v934, 7
        %v936 = vsub.s32 %v933, %v935
        %v937 = vrot.slane %v929, %v936
        %v939 = vunpack.c.l.s4 1934713408
        %v940 = vunpack.c.0.s8 %v939
        %v941 = vlaneseq
        %v942 = vshrl.u32 %v941, 7
        %v943 = vsub.s32 %v940, %v942
        %v944 = vrot.slane %v930, %v943
        %v945 = vcombine.low %v889, %v905
        %v946 = vcombine.high %v889, %v905
        %v948 = vunpack.c.l.s4 1934713408
        %v949 = vunpack.c.0.s8 %v948
        %v950 = vlaneseq
        %v951 = vshrl.u32 %v950, 7
        %v952 = vsub.s32 %v949, %v951
        %v953 = vrot.slane %v945, %v952
        %v955 = vunpack.c.l.s4 1934713408
        %v956 = vunpack.c.0.s8 %v955
        %v957 = vlaneseq
        %v958 = vshrl.u32 %v957, 7
        %v959 = vsub.s32 %v956, %v958
        %v960 = vrot.slane %v946, %v959
        %v961 = vcombine.low %v896, %v912
        %v962 = vcombine.high %v896, %v912
        %v964 = vunpack.c.l.s4 1934713408
        %v965 = vunpack.c.0.s8 %v964
        %v966 = vlaneseq
        %v967 = vshrl.u32 %v966, 7
        %v968 = vsub.s32 %v965, %v967
        %v969 = vrot.slane %v961, %v968
        %v971 = vunpack.c.l.s4 1934713408
        %v972 = vunpack.c.0.s8 %v971
        %v973 = vlaneseq
        %v974 = vshrl.u32 %v973, 7
        %v975 = vsub.s32 %v972, %v974
        %v976 = vrot.slane %v962, %v975
        %v977 = vcombine.low %v921, %v953
        %v978 = vcombine.high %v921, %v953
        %v979 = vcombine.low %v928, %v960
        %v980 = vcombine.high %v928, %v960
        %v981 = vcombine.low %v937, %v969
        %v982 = vcombine.high %v937, %v969
        %v983 = vcombine.low %v944, %v976
        %v984 = vcombine.high %v944, %v976
        %v985 = vcombine.low %v565, %v575
        %v986 = vcombine.high %v565, %v575
        %v988 = vunpack.c.l.s4 1983009808
        %v989 = vunpack.c.0.s8 %v988
        %v990 = vlaneseq
        %v991 = vshrl.u32 %v990, 7
        %v992 = vsub.s32 %v989, %v991
        %v993 = vrot.slane %v985, %v992
        %v995 = vunpack.c.l.s4 1983009808
        %v996 = vunpack.c.0.s8 %v995
        %v997 = vlaneseq
        %v998 = vshrl.u32 %v997, 7
        %v999 = vsub.s32 %v996, %v998
        %v1000 = vrot.slane %v986, %v999
        %v1001 = vcombine.low %v570, %v580
        %v1002 = vcombine.high %v570, %v580
        %v1004 = vunpack.c.l.s4 1983009808
        %v1005 = vunpack.c.0.s8 %v1004
        %v1006 = vlaneseq
        %v1007 = vshrl.u32 %v1006, 7
        %v1008 = vsub.s32 %v1005, %v1007
        %v1009 = vrot.slane %v1001, %v1008
        %v1011 = vunpack.c.l.s4 1983009808
        %v1012 = vunpack.c.0.s8 %v1011
        %v1013 = vlaneseq
        %v1014 = vshrl.u32 %v1013, 7
        %v1015 = vsub.s32 %v1012, %v1014
        %v1016 = vrot.slane %v1002, %v1015
        %v1017 = vcombine.low %v585, %v595
        %v1018 = vcombine.high %v585, %v595
        %v1020 = vunpack.c.l.s4 1983009808
        %v1021 = vunpack.c.0.s8 %v1020
        %v1022 = vlaneseq
        %v1023 = vshrl.u32 %v1022, 7
        %v1024 = vsub.s32 %v1021, %v1023
        %v1025 = vrot.slane %v1017, %v1024
        %v1027 = vunpack.c.l.s4 1983009808
        %v1028 = vunpack.c.0.s8 %v1027
        %v1029 = vlaneseq
        %v1030 = vshrl.u32 %v1029, 7
        %v1031 = vsub.s32 %v1028, %v1030
        %v1032 = vrot.slane %v1018, %v1031
        %v1033 = vcombine.low %v590, %v600
        %v1034 = vcombine.high %v590, %v600
        %v1036 = vunpack.c.l.s4 1983009808
        %v1037 = vunpack.c.0.s8 %v1036
        %v1038 = vlaneseq
        %v1039 = vshrl.u32 %v1038, 7
        %v1040 = vsub.s32 %v1037, %v1039
        %v1041 = vrot.slane %v1033, %v1040
        %v1043 = vunpack.c.l.s4 1983009808
        %v1044 = vunpack.c.0.s8 %v1043
        %v1045 = vlaneseq
        %v1046 = vshrl.u32 %v1045, 7
        %v1047 = vsub.s32 %v1044, %v1046
        %v1048 = vrot.slane %v1034, %v1047
        %v1049 = vcombine.low %v993, %v1009
        %v1050 = vcombine.high %v993, %v1009
        %v1052 = vunpack.c.l.s4 1934713408
        %v1053 = vunpack.c.0.s8 %v1052
        %v1054 = vlaneseq
        %v1055 = vshrl.u32 %v1054, 7
        %v1056 = vsub.s32 %v1053, %v1055
        %v1057 = vrot.slane %v1049, %v1056
        %v1059 = vunpack.c.l.s4 1934713408
        %v1060 = vunpack.c.0.s8 %v1059
        %v1061 = vlaneseq
        %v1062 = vshrl.u32 %v1061, 7
        %v1063 = vsub.s32 %v1060, %v1062
        %v1064 = vrot.slane %v1050, %v1063
        %v1065 = vcombine.low %v1000, %v1016
        %v1066 = vcombine.high %v1000, %v1016
        %v1068 = vunpack.c.l.s4 1934713408
        %v1069 = vunpack.c.0.s8 %v1068
        %v1070 = vlaneseq
        %v1071 = vshrl.u32 %v1070, 7
        %v1072 = vsub.s32 %v1069, %v1071
        %v1073 = vrot.slane %v1065, %v1072
        %v1075 = vunpack.c.l.s4 1934713408
        %v1076 = vunpack.c.0.s8 %v1075
        %v1077 = vlaneseq
        %v1078 = vshrl.u32 %v1077, 7
        %v1079 = vsub.s32 %v1076, %v1078
        %v1080 = vrot.slane %v1066, %v1079
        %v1081 = vcombine.low %v1025, %v1041
        %v1082 = vcombine.high %v1025, %v1041
        %v1084 = vunpack.c.l.s4 1934713408
        %v1085 = vunpack.c.0.s8 %v1084
        %v1086 = vlaneseq
        %v1087 = vshrl.u32 %v1086, 7
        %v1088 = vsub.s32 %v1085, %v1087
        %v1089 = vrot.slane %v1081, %v1088
        %v1091 = vunpack.c.l.s4 1934713408
        %v1092 = vunpack.c.0.s8 %v1091
        %v1093 = vlaneseq
        %v1094 = vshrl.u32 %v1093, 7
        %v1095 = vsub.s32 %v1092, %v1094
        %v1096 = vrot.slane %v1082, %v1095
        %v1097 = vcombine.low %v1032, %v1048
        %v1098 = vcombine.high %v1032, %v1048
        %v1100 = vunpack.c.l.s4 1934713408
        %v1101 = vunpack.c.0.s8 %v1100
        %v1102 = vlaneseq
        %v1103 = vshrl.u32 %v1102, 7
        %v1104 = vsub.s32 %v1101, %v1103
        %v1105 = vrot.slane %v1097, %v1104
        %v1107 = vunpack.c.l.s4 1934713408
        %v1108 = vunpack.c.0.s8 %v1107
        %v1109 = vlaneseq
        %v1110 = vshrl.u32 %v1109, 7
        %v1111 = vsub.s32 %v1108, %v1110
        %v1112 = vrot.slane %v1098, %v1111
        %v1113 = vcombine.low %v1057, %v1089
        %v1114 = vcombine.high %v1057, %v1089
        %v1115 = vcombine.low %v1064, %v1096
        %v1116 = vcombine.high %v1064, %v1096
        %v1117 = vcombine.low %v1073, %v1105
        %v1118 = vcombine.high %v1073, %v1105
        %v1119 = vcombine.low %v1080, %v1112
        %v1120 = vcombine.high %v1080, %v1112
        %v1121 = vcombine.low %v630, %v640
        %v1122 = vcombine.high %v630, %v640
        %v1124 = vunpack.c.l.s4 1983009808
        %v1125 = vunpack.c.0.s8 %v1124
        %v1126 = vlaneseq
        %v1127 = vshrl.u32 %v1126, 7
        %v1128 = vsub.s32 %v1125, %v1127
        %v1129 = vrot.slane %v1121, %v1128
        %v1131 = vunpack.c.l.s4 1983009808
        %v1132 = vunpack.c.0.s8 %v1131
        %v1133 = vlaneseq
        %v1134 = vshrl.u32 %v1133, 7
        %v1135 = vsub.s32 %v1132, %v1134
        %v1136 = vrot.slane %v1122, %v1135
        %v1137 = vcombine.low %v635, %v645
        %v1138 = vcombine.high %v635, %v645
        %v1140 = vunpack.c.l.s4 1983009808
        %v1141 = vunpack.c.0.s8 %v1140
        %v1142 = vlaneseq
        %v1143 = vshrl.u32 %v1142, 7
        %v1144 = vsub.s32 %v1141, %v1143
        %v1145 = vrot.slane %v1137, %v1144
        %v1147 = vunpack.c.l.s4 1983009808
        %v1148 = vunpack.c.0.s8 %v1147
        %v1149 = vlaneseq
        %v1150 = vshrl.u32 %v1149, 7
        %v1151 = vsub.s32 %v1148, %v1150
        %v1152 = vrot.slane %v1138, %v1151
        %v1153 = vcombine.low %v650, %v660
        %v1154 = vcombine.high %v650, %v660
        %v1156 = vunpack.c.l.s4 1983009808
        %v1157 = vunpack.c.0.s8 %v1156
        %v1158 = vlaneseq
        %v1159 = vshrl.u32 %v1158, 7
        %v1160 = vsub.s32 %v1157, %v1159
        %v1161 = vrot.slane %v1153, %v1160
        %v1163 = vunpack.c.l.s4 1983009808
        %v1164 = vunpack.c.0.s8 %v1163
        %v1165 = vlaneseq
        %v1166 = vshrl.u32 %v1165, 7
        %v1167 = vsub.s32 %v1164, %v1166
        %v1168 = vrot.slane %v1154, %v1167
        %v1169 = vcombine.low %v655, %v665
        %v1170 = vcombine.high %v655, %v665
        %v1172 = vunpack.c.l.s4 1983009808
        %v1173 = vunpack.c.0.s8 %v1172
        %v1174 = vlaneseq
        %v1175 = vshrl.u32 %v1174, 7
        %v1176 = vsub.s32 %v1173, %v1175
        %v1177 = vrot.slane %v1169, %v1176
        %v1179 = vunpack.c.l.s4 1983009808
        %v1180 = vunpack.c.0.s8 %v1179
        %v1181 = vlaneseq
        %v1182 = vshrl.u32 %v1181, 7
        %v1183 = vsub.s32 %v1180, %v1182
        %v1184 = vrot.slane %v1170, %v1183
        %v1185 = vcombine.low %v1129, %v1145
        %v1186 = vcombine.high %v1129, %v1145
        %v1188 = vunpack.c.l.s4 1934713408
        %v1189 = vunpack.c.0.s8 %v1188
        %v1190 = vlaneseq
        %v1191 = vshrl.u32 %v1190, 7
        %v1192 = vsub.s32 %v1189, %v1191
        %v1193 = vrot.slane %v1185, %v1192
        %v1195 = vunpack.c.l.s4 1934713408
        %v1196 = vunpack.c.0.s8 %v1195
        %v1197 = vlaneseq
        %v1198 = vshrl.u32 %v1197, 7
        %v1199 = vsub.s32 %v1196, %v1198
        %v1200 = vrot.slane %v1186, %v1199
        %v1201 = vcombine.low %v1136, %v1152
        %v1202 = vcombine.high %v1136, %v1152
        %v1204 = vunpack.c.l.s4 1934713408
        %v1205 = vunpack.c.0.s8 %v1204
        %v1206 = vlaneseq
        %v1207 = vshrl.u32 %v1206, 7
        %v1208 = vsub.s32 %v1205, %v1207
        %v1209 = vrot.slane %v1201, %v1208
        %v1211 = vunpack.c.l.s4 1934713408
        %v1212 = vunpack.c.0.s8 %v1211
        %v1213 = vlaneseq
        %v1214 = vshrl.u32 %v1213, 7
        %v1215 = vsub.s32 %v1212, %v1214
        %v1216 = vrot.slane %v1202, %v1215
        %v1217 = vcombine.low %v1161, %v1177
        %v1218 = vcombine.high %v1161, %v1177
        %v1220 = vunpack.c.l.s4 1934713408
        %v1221 = vunpack.c.0.s8 %v1220
        %v1222 = vlaneseq
        %v1223 = vshrl.u32 %v1222, 7
        %v1224 = vsub.s32 %v1221, %v1223
        %v1225 = vrot.slane %v1217, %v1224
        %v1227 = vunpack.c.l.s4 1934713408
        %v1228 = vunpack.c.0.s8 %v1227
        %v1229 = vlaneseq
        %v1230 = vshrl.u32 %v1229, 7
        %v1231 = vsub.s32 %v1228, %v1230
        %v1232 = vrot.slane %v1218, %v1231
        %v1233 = vcombine.low %v1168, %v1184
        %v1234 = vcombine.high %v1168, %v1184
        %v1236 = vunpack.c.l.s4 1934713408
        %v1237 = vunpack.c.0.s8 %v1236
        %v1238 = vlaneseq
        %v1239 = vshrl.u32 %v1238, 7
        %v1240 = vsub.s32 %v1237, %v1239
        %v1241 = vrot.slane %v1233, %v1240
        %v1243 = vunpack.c.l.s4 1934713408
        %v1244 = vunpack.c.0.s8 %v1243
        %v1245 = vlaneseq
        %v1246 = vshrl.u32 %v1245, 7
        %v1247 = vsub.s32 %v1244, %v1246
        %v1248 = vrot.slane %v1234, %v1247
        %v1249 = vcombine.low %v1193, %v1225
        %v1250 = vcombine.high %v1193, %v1225
        %v1251 = vcombine.low %v1200, %v1232
        %v1252 = vcombine.high %v1200, %v1232
        %v1253 = vcombine.low %v1209, %v1241
        %v1254 = vcombine.high %v1209, %v1241
        %v1255 = vcombine.low %v1216, %v1248
        %v1256 = vcombine.high %v1216, %v1248
        %v1257 = vcombine.low %v670, %v680
        %v1258 = vcombine.high %v670, %v680
        %v1260 = vunpack.c.l.s4 1983009808
        %v1261 = vunpack.c.0.s8 %v1260
        %v1262 = vlaneseq
        %v1263 = vshrl.u32 %v1262, 7
        %v1264 = vsub.s32 %v1261, %v1263
        %v1265 = vrot.slane %v1257, %v1264
        %v1267 = vunpack.c.l.s4 1983009808
        %v1268 = vunpack.c.0.s8 %v1267
        %v1269 = vlaneseq
        %v1270 = vshrl.u32 %v1269, 7
        %v1271 = vsub.s32 %v1268, %v1270
        %v1272 = vrot.slane %v1258, %v1271
        %v1273 = vcombine.low %v675, %v685
        %v1274 = vcombine.high %v675, %v685
        %v1276 = vunpack.c.l.s4 1983009808
        %v1277 = vunpack.c.0.s8 %v1276
        %v1278 = vlaneseq
        %v1279 = vshrl.u32 %v1278, 7
        %v1280 = vsub.s32 %v1277, %v1279
        %v1281 = vrot.slane %v1273, %v1280
        %v1283 = vunpack.c.l.s4 1983009808
        %v1284 = vunpack.c.0.s8 %v1283
        %v1285 = vlaneseq
        %v1286 = vshrl.u32 %v1285, 7
        %v1287 = vsub.s32 %v1284, %v1286
        %v1288 = vrot.slane %v1274, %v1287
        %v1289 = vcombine.low %v1265, %v1281
        %v1290 = vcombine.high %v1265, %v1281
        %v1292 = vunpack.c.l.s4 1934713408
        %v1293 = vunpack.c.0.s8 %v1292
        %v1294 = vlaneseq
        %v1295 = vshrl.u32 %v1294, 7
        %v1296 = vsub.s32 %v1293, %v1295
        %v1297 = vrot.slane %v1289, %v1296
        %v1299 = vunpack.c.l.s4 1934713408
        %v1300 = vunpack.c.0.s8 %v1299
        %v1301 = vlaneseq
        %v1302 = vshrl.u32 %v1301, 7
        %v1303 = vsub.s32 %v1300, %v1302
        %v1304 = vrot.slane %v1290, %v1303
        %v1305 = vcombine.low %v1272, %v1288
        %v1306 = vcombine.high %v1272, %v1288
        %v1308 = vunpack.c.l.s4 1934713408
        %v1309 = vunpack.c.0.s8 %v1308
        %v1310 = vlaneseq
        %v1311 = vshrl.u32 %v1310, 7
        %v1312 = vsub.s32 %v1309, %v1311
        %v1313 = vrot.slane %v1305, %v1312
        %v1315 = vunpack.c.l.s4 1934713408
        %v1316 = vunpack.c.0.s8 %v1315
        %v1317 = vlaneseq
        %v1318 = vshrl.u32 %v1317, 7
        %v1319 = vsub.s32 %v1316, %v1318
        %v1320 = vrot.slane %v1306, %v1319
        %v1321 = vcombine.high %v1297, 0.0
        %v1322 = vcombine.high %v1304, 0.0
        %v1323 = vcombine.high %v1313, 0.0
        %v1324 = vcombine.high %v1320, 0.0
        %v1325 = vcombine.low %v471, %v477
        %v1326 = vcombine.high %v471, %v477
        %v1328 = vunpack.c.l.s4 1983009808
        %v1329 = vunpack.c.0.s8 %v1328
        %v1330 = vlaneseq
        %v1331 = vshrl.u32 %v1330, 7
        %v1332 = vsub.s32 %v1329, %v1331
        %v1333 = vrot.slane %v1325, %v1332
        %v1335 = vunpack.c.l.s4 1983009808
        %v1336 = vunpack.c.0.s8 %v1335
        %v1337 = vlaneseq
        %v1338 = vshrl.u32 %v1337, 7
        %v1339 = vsub.s32 %v1336, %v1338
        %v1340 = vrot.slane %v1326, %v1339
        %v1341 = vcombine.low %v474, %v480
        %v1342 = vcombine.high %v474, %v480
        %v1344 = vunpack.c.l.s4 1983009808
        %v1345 = vunpack.c.0.s8 %v1344
        %v1346 = vlaneseq
        %v1347 = vshrl.u32 %v1346, 7
        %v1348 = vsub.s32 %v1345, %v1347
        %v1349 = vrot.slane %v1341, %v1348
        %v1351 = vunpack.c.l.s4 1983009808
        %v1352 = vunpack.c.0.s8 %v1351
        %v1353 = vlaneseq
        %v1354 = vshrl.u32 %v1353, 7
        %v1355 = vsub.s32 %v1352, %v1354
        %v1356 = vrot.slane %v1342, %v1355
        %v1357 = vcombine.low %v483, %v489
        %v1358 = vcombine.high %v483, %v489
        %v1360 = vunpack.c.l.s4 1983009808
        %v1361 = vunpack.c.0.s8 %v1360
        %v1362 = vlaneseq
        %v1363 = vshrl.u32 %v1362, 7
        %v1364 = vsub.s32 %v1361, %v1363
        %v1365 = vrot.slane %v1357, %v1364
        %v1367 = vunpack.c.l.s4 1983009808
        %v1368 = vunpack.c.0.s8 %v1367
        %v1369 = vlaneseq
        %v1370 = vshrl.u32 %v1369, 7
        %v1371 = vsub.s32 %v1368, %v1370
        %v1372 = vrot.slane %v1358, %v1371
        %v1373 = vcombine.low %v486, %v492
        %v1374 = vcombine.high %v486, %v492
        %v1376 = vunpack.c.l.s4 1983009808
        %v1377 = vunpack.c.0.s8 %v1376
        %v1378 = vlaneseq
        %v1379 = vshrl.u32 %v1378, 7
        %v1380 = vsub.s32 %v1377, %v1379
        %v1381 = vrot.slane %v1373, %v1380
        %v1383 = vunpack.c.l.s4 1983009808
        %v1384 = vunpack.c.0.s8 %v1383
        %v1385 = vlaneseq
        %v1386 = vshrl.u32 %v1385, 7
        %v1387 = vsub.s32 %v1384, %v1386
        %v1388 = vrot.slane %v1374, %v1387
        %v1389 = vcombine.low %v1333, %v1349
        %v1390 = vcombine.high %v1333, %v1349
        %v1392 = vunpack.c.l.s4 1934713408
        %v1393 = vunpack.c.0.s8 %v1392
        %v1394 = vlaneseq
        %v1395 = vshrl.u32 %v1394, 7
        %v1396 = vsub.s32 %v1393, %v1395
        %v1397 = vrot.slane %v1389, %v1396
        %v1399 = vunpack.c.l.s4 1934713408
        %v1400 = vunpack.c.0.s8 %v1399
        %v1401 = vlaneseq
        %v1402 = vshrl.u32 %v1401, 7
        %v1403 = vsub.s32 %v1400, %v1402
        %v1404 = vrot.slane %v1390, %v1403
        %v1405 = vcombine.low %v1340, %v1356
        %v1406 = vcombine.high %v1340, %v1356
        %v1408 = vunpack.c.l.s4 1934713408
        %v1409 = vunpack.c.0.s8 %v1408
        %v1410 = vlaneseq
        %v1411 = vshrl.u32 %v1410, 7
        %v1412 = vsub.s32 %v1409, %v1411
        %v1413 = vrot.slane %v1405, %v1412
        %v1415 = vunpack.c.l.s4 1934713408
        %v1416 = vunpack.c.0.s8 %v1415
        %v1417 = vlaneseq
        %v1418 = vshrl.u32 %v1417, 7
        %v1419 = vsub.s32 %v1416, %v1418
        %v1420 = vrot.slane %v1406, %v1419
        %v1421 = vcombine.low %v1365, %v1381
        %v1422 = vcombine.high %v1365, %v1381
        %v1424 = vunpack.c.l.s4 1934713408
        %v1425 = vunpack.c.0.s8 %v1424
        %v1426 = vlaneseq
        %v1427 = vshrl.u32 %v1426, 7
        %v1428 = vsub.s32 %v1425, %v1427
        %v1429 = vrot.slane %v1421, %v1428
        %v1431 = vunpack.c.l.s4 1934713408
        %v1432 = vunpack.c.0.s8 %v1431
        %v1433 = vlaneseq
        %v1434 = vshrl.u32 %v1433, 7
        %v1435 = vsub.s32 %v1432, %v1434
        %v1436 = vrot.slane %v1422, %v1435
        %v1437 = vcombine.low %v1372, %v1388
        %v1438 = vcombine.high %v1372, %v1388
        %v1440 = vunpack.c.l.s4 1934713408
        %v1441 = vunpack.c.0.s8 %v1440
        %v1442 = vlaneseq
        %v1443 = vshrl.u32 %v1442, 7
        %v1444 = vsub.s32 %v1441, %v1443
        %v1445 = vrot.slane %v1437, %v1444
        %v1447 = vunpack.c.l.s4 1934713408
        %v1448 = vunpack.c.0.s8 %v1447
        %v1449 = vlaneseq
        %v1450 = vshrl.u32 %v1449, 7
        %v1451 = vsub.s32 %v1448, %v1450
        %v1452 = vrot.slane %v1438, %v1451
        %v1453 = vcombine.low %v1397, %v1429
        %v1454 = vcombine.high %v1397, %v1429
        %v1455 = vcombine.low %v1404, %v1436
        %v1456 = vcombine.high %v1404, %v1436
        %v1457 = vcombine.low %v1413, %v1445
        %v1458 = vcombine.high %v1413, %v1445
        %v1459 = vcombine.low %v1420, %v1452
        %v1460 = vcombine.high %v1420, %v1452
        %v1461 = vcombine.low %v495, %v501
        %v1462 = vcombine.high %v495, %v501
        %v1464 = vunpack.c.l.s4 1983009808
        %v1465 = vunpack.c.0.s8 %v1464
        %v1466 = vlaneseq
        %v1467 = vshrl.u32 %v1466, 7
        %v1468 = vsub.s32 %v1465, %v1467
        %v1469 = vrot.slane %v1461, %v1468
        %v1471 = vunpack.c.l.s4 1983009808
        %v1472 = vunpack.c.0.s8 %v1471
        %v1473 = vlaneseq
        %v1474 = vshrl.u32 %v1473, 7
        %v1475 = vsub.s32 %v1472, %v1474
        %v1476 = vrot.slane %v1462, %v1475
        %v1477 = vcombine.low %v498, %v504
        %v1478 = vcombine.high %v498, %v504
        %v1480 = vunpack.c.l.s4 1983009808
        %v1481 = vunpack.c.0.s8 %v1480
        %v1482 = vlaneseq
        %v1483 = vshrl.u32 %v1482, 7
        %v1484 = vsub.s32 %v1481, %v1483
        %v1485 = vrot.slane %v1477, %v1484
        %v1487 = vunpack.c.l.s4 1983009808
        %v1488 = vunpack.c.0.s8 %v1487
        %v1489 = vlaneseq
        %v1490 = vshrl.u32 %v1489, 7
        %v1491 = vsub.s32 %v1488, %v1490
        %v1492 = vrot.slane %v1478, %v1491
        %v1493 = vcombine.low %v547, %v557
        %v1494 = vcombine.high %v547, %v557
        %v1496 = vunpack.c.l.s4 1983009808
        %v1497 = vunpack.c.0.s8 %v1496
        %v1498 = vlaneseq
        %v1499 = vshrl.u32 %v1498, 7
        %v1500 = vsub.s32 %v1497, %v1499
        %v1501 = vrot.slane %v1493, %v1500
        %v1503 = vunpack.c.l.s4 1983009808
        %v1504 = vunpack.c.0.s8 %v1503
        %v1505 = vlaneseq
        %v1506 = vshrl.u32 %v1505, 7
        %v1507 = vsub.s32 %v1504, %v1506
        %v1508 = vrot.slane %v1494, %v1507
        %v1509 = vcombine.low %v552, %v562
        %v1510 = vcombine.high %v552, %v562
        %v1512 = vunpack.c.l.s4 1983009808
        %v1513 = vunpack.c.0.s8 %v1512
        %v1514 = vlaneseq
        %v1515 = vshrl.u32 %v1514, 7
        %v1516 = vsub.s32 %v1513, %v1515
        %v1517 = vrot.slane %v1509, %v1516
        %v1519 = vunpack.c.l.s4 1983009808
        %v1520 = vunpack.c.0.s8 %v1519
        %v1521 = vlaneseq
        %v1522 = vshrl.u32 %v1521, 7
        %v1523 = vsub.s32 %v1520, %v1522
        %v1524 = vrot.slane %v1510, %v1523
        %v1525 = vcombine.low %v1469, %v1485
        %v1526 = vcombine.high %v1469, %v1485
        %v1528 = vunpack.c.l.s4 1934713408
        %v1529 = vunpack.c.0.s8 %v1528
        %v1530 = vlaneseq
        %v1531 = vshrl.u32 %v1530, 7
        %v1532 = vsub.s32 %v1529, %v1531
        %v1533 = vrot.slane %v1525, %v1532
        %v1535 = vunpack.c.l.s4 1934713408
        %v1536 = vunpack.c.0.s8 %v1535
        %v1537 = vlaneseq
        %v1538 = vshrl.u32 %v1537, 7
        %v1539 = vsub.s32 %v1536, %v1538
        %v1540 = vrot.slane %v1526, %v1539
        %v1541 = vcombine.low %v1476, %v1492
        %v1542 = vcombine.high %v1476, %v1492
        %v1544 = vunpack.c.l.s4 1934713408
        %v1545 = vunpack.c.0.s8 %v1544
        %v1546 = vlaneseq
        %v1547 = vshrl.u32 %v1546, 7
        %v1548 = vsub.s32 %v1545, %v1547
        %v1549 = vrot.slane %v1541, %v1548
        %v1551 = vunpack.c.l.s4 1934713408
        %v1552 = vunpack.c.0.s8 %v1551
        %v1553 = vlaneseq
        %v1554 = vshrl.u32 %v1553, 7
        %v1555 = vsub.s32 %v1552, %v1554
        %v1556 = vrot.slane %v1542, %v1555
        %v1557 = vcombine.low %v1501, %v1517
        %v1558 = vcombine.high %v1501, %v1517
        %v1560 = vunpack.c.l.s4 1934713408
        %v1561 = vunpack.c.0.s8 %v1560
        %v1562 = vlaneseq
        %v1563 = vshrl.u32 %v1562, 7
        %v1564 = vsub.s32 %v1561, %v1563
        %v1565 = vrot.slane %v1557, %v1564
        %v1567 = vunpack.c.l.s4 1934713408
        %v1568 = vunpack.c.0.s8 %v1567
        %v1569 = vlaneseq
        %v1570 = vshrl.u32 %v1569, 7
        %v1571 = vsub.s32 %v1568, %v1570
        %v1572 = vrot.slane %v1558, %v1571
        %v1573 = vcombine.low %v1508, %v1524
        %v1574 = vcombine.high %v1508, %v1524
        %v1576 = vunpack.c.l.s4 1934713408
        %v1577 = vunpack.c.0.s8 %v1576
        %v1578 = vlaneseq
        %v1579 = vshrl.u32 %v1578, 7
        %v1580 = vsub.s32 %v1577, %v1579
        %v1581 = vrot.slane %v1573, %v1580
        %v1583 = vunpack.c.l.s4 1934713408
        %v1584 = vunpack.c.0.s8 %v1583
        %v1585 = vlaneseq
        %v1586 = vshrl.u32 %v1585, 7
        %v1587 = vsub.s32 %v1584, %v1586
        %v1588 = vrot.slane %v1574, %v1587
        %v1589 = vcombine.low %v1533, %v1565
        %v1590 = vcombine.high %v1533, %v1565
        %v1591 = vcombine.low %v1540, %v1572
        %v1592 = vcombine.high %v1540, %v1572
        %v1593 = vcombine.low %v1549, %v1581
        %v1594 = vcombine.high %v1549, %v1581
        %v1595 = vcombine.low %v1556, %v1588
        %v1596 = vcombine.high %v1556, %v1588
        %v1597 = vcombine.low %v567, %v577
        %v1598 = vcombine.high %v567, %v577
        %v1600 = vunpack.c.l.s4 1983009808
        %v1601 = vunpack.c.0.s8 %v1600
        %v1602 = vlaneseq
        %v1603 = vshrl.u32 %v1602, 7
        %v1604 = vsub.s32 %v1601, %v1603
        %v1605 = vrot.slane %v1597, %v1604
        %v1607 = vunpack.c.l.s4 1983009808
        %v1608 = vunpack.c.0.s8 %v1607
        %v1609 = vlaneseq
        %v1610 = vshrl.u32 %v1609, 7
        %v1611 = vsub.s32 %v1608, %v1610
        %v1612 = vrot.slane %v1598, %v1611
        %v1613 = vcombine.low %v572, %v582
        %v1614 = vcombine.high %v572, %v582
        %v1616 = vunpack.c.l.s4 1983009808
        %v1617 = vunpack.c.0.s8 %v1616
        %v1618 = vlaneseq
        %v1619 = vshrl.u32 %v1618, 7
        %v1620 = vsub.s32 %v1617, %v1619
        %v1621 = vrot.slane %v1613, %v1620
        %v1623 = vunpack.c.l.s4 1983009808
        %v1624 = vunpack.c.0.s8 %v1623
        %v1625 = vlaneseq
        %v1626 = vshrl.u32 %v1625, 7
        %v1627 = vsub.s32 %v1624, %v1626
        %v1628 = vrot.slane %v1614, %v1627
        %v1629 = vcombine.low %v587, %v597
        %v1630 = vcombine.high %v587, %v597
        %v1632 = vunpack.c.l.s4 1983009808
        %v1633 = vunpack.c.0.s8 %v1632
        %v1634 = vlaneseq
        %v1635 = vshrl.u32 %v1634, 7
        %v1636 = vsub.s32 %v1633, %v1635
        %v1637 = vrot.slane %v1629, %v1636
        %v1639 = vunpack.c.l.s4 1983009808
        %v1640 = vunpack.c.0.s8 %v1639
        %v1641 = vlaneseq
        %v1642 = vshrl.u32 %v1641, 7
        %v1643 = vsub.s32 %v1640, %v1642
        %v1644 = vrot.slane %v1630, %v1643
        %v1645 = vcombine.low %v592, %v602
        %v1646 = vcombine.high %v592, %v602
        %v1648 = vunpack.c.l.s4 1983009808
        %v1649 = vunpack.c.0.s8 %v1648
        %v1650 = vlaneseq
        %v1651 = vshrl.u32 %v1650, 7
        %v1652 = vsub.s32 %v1649, %v1651
        %v1653 = vrot.slane %v1645, %v1652
        %v1655 = vunpack.c.l.s4 1983009808
        %v1656 = vunpack.c.0.s8 %v1655
        %v1657 = vlaneseq
        %v1658 = vshrl.u32 %v1657, 7
        %v1659 = vsub.s32 %v1656, %v1658
        %v1660 = vrot.slane %v1646, %v1659
        %v1661 = vcombine.low %v1605, %v1621
        %v1662 = vcombine.high %v1605, %v1621
        %v1664 = vunpack.c.l.s4 1934713408
        %v1665 = vunpack.c.0.s8 %v1664
        %v1666 = vlaneseq
        %v1667 = vshrl.u32 %v1666, 7
        %v1668 = vsub.s32 %v1665, %v1667
        %v1669 = vrot.slane %v1661, %v1668
        %v1671 = vunpack.c.l.s4 1934713408
        %v1672 = vunpack.c.0.s8 %v1671
        %v1673 = vlaneseq
        %v1674 = vshrl.u32 %v1673, 7
        %v1675 = vsub.s32 %v1672, %v1674
        %v1676 = vrot.slane %v1662, %v1675
        %v1677 = vcombine.low %v1612, %v1628
        %v1678 = vcombine.high %v1612, %v1628
        %v1680 = vunpack.c.l.s4 1934713408
        %v1681 = vunpack.c.0.s8 %v1680
        %v1682 = vlaneseq
        %v1683 = vshrl.u32 %v1682, 7
        %v1684 = vsub.s32 %v1681, %v1683
        %v1685 = vrot.slane %v1677, %v1684
        %v1687 = vunpack.c.l.s4 1934713408
        %v1688 = vunpack.c.0.s8 %v1687
        %v1689 = vlaneseq
        %v1690 = vshrl.u32 %v1689, 7
        %v1691 = vsub.s32 %v1688, %v1690
        %v1692 = vrot.slane %v1678, %v1691
        %v1693 = vcombine.low %v1637, %v1653
        %v1694 = vcombine.high %v1637, %v1653
        %v1696 = vunpack.c.l.s4 1934713408
        %v1697 = vunpack.c.0.s8 %v1696
        %v1698 = vlaneseq
        %v1699 = vshrl.u32 %v1698, 7
        %v1700 = vsub.s32 %v1697, %v1699
        %v1701 = vrot.slane %v1693, %v1700
        %v1703 = vunpack.c.l.s4 1934713408
        %v1704 = vunpack.c.0.s8 %v1703
        %v1705 = vlaneseq
        %v1706 = vshrl.u32 %v1705, 7
        %v1707 = vsub.s32 %v1704, %v1706
        %v1708 = vrot.slane %v1694, %v1707
        %v1709 = vcombine.low %v1644, %v1660
        %v1710 = vcombine.high %v1644, %v1660
        %v1712 = vunpack.c.l.s4 1934713408
        %v1713 = vunpack.c.0.s8 %v1712
        %v1714 = vlaneseq
        %v1715 = vshrl.u32 %v1714, 7
        %v1716 = vsub.s32 %v1713, %v1715
        %v1717 = vrot.slane %v1709, %v1716
        %v1719 = vunpack.c.l.s4 1934713408
        %v1720 = vunpack.c.0.s8 %v1719
        %v1721 = vlaneseq
        %v1722 = vshrl.u32 %v1721, 7
        %v1723 = vsub.s32 %v1720, %v1722
        %v1724 = vrot.slane %v1710, %v1723
        %v1725 = vcombine.low %v1669, %v1701
        %v1726 = vcombine.high %v1669, %v1701
        %v1727 = vcombine.low %v1676, %v1708
        %v1728 = vcombine.high %v1676, %v1708
        %v1729 = vcombine.low %v1685, %v1717
        %v1730 = vcombine.high %v1685, %v1717
        %v1731 = vcombine.low %v1692, %v1724
        %v1732 = vcombine.high %v1692, %v1724
        %v1733 = vcombine.low %v632, %v642
        %v1734 = vcombine.high %v632, %v642
        %v1736 = vunpack.c.l.s4 1983009808
        %v1737 = vunpack.c.0.s8 %v1736
        %v1738 = vlaneseq
        %v1739 = vshrl.u32 %v1738, 7
        %v1740 = vsub.s32 %v1737, %v1739
        %v1741 = vrot.slane %v1733, %v1740
        %v1743 = vunpack.c.l.s4 1983009808
        %v1744 = vunpack.c.0.s8 %v1743
        %v1745 = vlaneseq
        %v1746 = vshrl.u32 %v1745, 7
        %v1747 = vsub.s32 %v1744, %v1746
        %v1748 = vrot.slane %v1734, %v1747
        %v1749 = vcombine.low %v637, %v647
        %v1750 = vcombine.high %v637, %v647
        %v1752 = vunpack.c.l.s4 1983009808
        %v1753 = vunpack.c.0.s8 %v1752
        %v1754 = vlaneseq
        %v1755 = vshrl.u32 %v1754, 7
        %v1756 = vsub.s32 %v1753, %v1755
        %v1757 = vrot.slane %v1749, %v1756
        %v1759 = vunpack.c.l.s4 1983009808
        %v1760 = vunpack.c.0.s8 %v1759
        %v1761 = vlaneseq
        %v1762 = vshrl.u32 %v1761, 7
        %v1763 = vsub.s32 %v1760, %v1762
        %v1764 = vrot.slane %v1750, %v1763
        %v1765 = vcombine.low %v652, %v662
        %v1766 = vcombine.high %v652, %v662
        %v1768 = vunpack.c.l.s4 1983009808
        %v1769 = vunpack.c.0.s8 %v1768
        %v1770 = vlaneseq
        %v1771 = vshrl.u32 %v1770, 7
        %v1772 = vsub.s32 %v1769, %v1771
        %v1773 = vrot.slane %v1765, %v1772
        %v1775 = vunpack.c.l.s4 1983009808
        %v1776 = vunpack.c.0.s8 %v1775
        %v1777 = vlaneseq
        %v1778 = vshrl.u32 %v1777, 7
        %v1779 = vsub.s32 %v1776, %v1778
        %v1780 = vrot.slane %v1766, %v1779
        %v1781 = vcombine.low %v657, %v667
        %v1782 = vcombine.high %v657, %v667
        %v1784 = vunpack.c.l.s4 1983009808
        %v1785 = vunpack.c.0.s8 %v1784
        %v1786 = vlaneseq
        %v1787 = vshrl.u32 %v1786, 7
        %v1788 = vsub.s32 %v1785, %v1787
        %v1789 = vrot.slane %v1781, %v1788
        %v1791 = vunpack.c.l.s4 1983009808
        %v1792 = vunpack.c.0.s8 %v1791
        %v1793 = vlaneseq
        %v1794 = vshrl.u32 %v1793, 7
        %v1795 = vsub.s32 %v1792, %v1794
        %v1796 = vrot.slane %v1782, %v1795
        %v1797 = vcombine.low %v1741, %v1757
        %v1798 = vcombine.high %v1741, %v1757
        %v1800 = vunpack.c.l.s4 1934713408
        %v1801 = vunpack.c.0.s8 %v1800
        %v1802 = vlaneseq
        %v1803 = vshrl.u32 %v1802, 7
        %v1804 = vsub.s32 %v1801, %v1803
        %v1805 = vrot.slane %v1797, %v1804
        %v1807 = vunpack.c.l.s4 1934713408
        %v1808 = vunpack.c.0.s8 %v1807
        %v1809 = vlaneseq
        %v1810 = vshrl.u32 %v1809, 7
        %v1811 = vsub.s32 %v1808, %v1810
        %v1812 = vrot.slane %v1798, %v1811
        %v1813 = vcombine.low %v1748, %v1764
        %v1814 = vcombine.high %v1748, %v1764
        %v1816 = vunpack.c.l.s4 1934713408
        %v1817 = vunpack.c.0.s8 %v1816
        %v1818 = vlaneseq
        %v1819 = vshrl.u32 %v1818, 7
        %v1820 = vsub.s32 %v1817, %v1819
        %v1821 = vrot.slane %v1813, %v1820
        %v1823 = vunpack.c.l.s4 1934713408
        %v1824 = vunpack.c.0.s8 %v1823
        %v1825 = vlaneseq
        %v1826 = vshrl.u32 %v1825, 7
        %v1827 = vsub.s32 %v1824, %v1826
        %v1828 = vrot.slane %v1814, %v1827
        %v1829 = vcombine.low %v1773, %v1789
        %v1830 = vcombine.high %v1773, %v1789
        %v1832 = vunpack.c.l.s4 1934713408
        %v1833 = vunpack.c.0.s8 %v1832
        %v1834 = vlaneseq
        %v1835 = vshrl.u32 %v1834, 7
        %v1836 = vsub.s32 %v1833, %v1835
        %v1837 = vrot.slane %v1829, %v1836
        %v1839 = vunpack.c.l.s4 1934713408
        %v1840 = vunpack.c.0.s8 %v1839
        %v1841 = vlaneseq
        %v1842 = vshrl.u32 %v1841, 7
        %v1843 = vsub.s32 %v1840, %v1842
        %v1844 = vrot.slane %v1830, %v1843
        %v1845 = vcombine.low %v1780, %v1796
        %v1846 = vcombine.high %v1780, %v1796
        %v1848 = vunpack.c.l.s4 1934713408
        %v1849 = vunpack.c.0.s8 %v1848
        %v1850 = vlaneseq
        %v1851 = vshrl.u32 %v1850, 7
        %v1852 = vsub.s32 %v1849, %v1851
        %v1853 = vrot.slane %v1845, %v1852
        %v1855 = vunpack.c.l.s4 1934713408
        %v1856 = vunpack.c.0.s8 %v1855
        %v1857 = vlaneseq
        %v1858 = vshrl.u32 %v1857, 7
        %v1859 = vsub.s32 %v1856, %v1858
        %v1860 = vrot.slane %v1846, %v1859
        %v1861 = vcombine.low %v1805, %v1837
        %v1862 = vcombine.high %v1805, %v1837
        %v1863 = vcombine.low %v1812, %v1844
        %v1864 = vcombine.high %v1812, %v1844
        %v1865 = vcombine.low %v1821, %v1853
        %v1866 = vcombine.high %v1821, %v1853
        %v1867 = vcombine.low %v1828, %v1860
        %v1868 = vcombine.high %v1828, %v1860
        %v1869 = vcombine.low %v672, %v682
        %v1870 = vcombine.high %v672, %v682
        %v1872 = vunpack.c.l.s4 1983009808
        %v1873 = vunpack.c.0.s8 %v1872
        %v1874 = vlaneseq
        %v1875 = vshrl.u32 %v1874, 7
        %v1876 = vsub.s32 %v1873, %v1875
        %v1877 = vrot.slane %v1869, %v1876
        %v1879 = vunpack.c.l.s4 1983009808
        %v1880 = vunpack.c.0.s8 %v1879
        %v1881 = vlaneseq
        %v1882 = vshrl.u32 %v1881, 7
        %v1883 = vsub.s32 %v1880, %v1882
        %v1884 = vrot.slane %v1870, %v1883
        %v1885 = vcombine.low %v677, %v687
        %v1886 = vcombine.high %v677, %v687
        %v1888 = vunpack.c.l.s4 1983009808
        %v1889 = vunpack.c.0.s8 %v1888
        %v1890 = vlaneseq
        %v1891 = vshrl.u32 %v1890, 7
        %v1892 = vsub.s32 %v1889, %v1891
        %v1893 = vrot.slane %v1885, %v1892
        %v1895 = vunpack.c.l.s4 1983009808
        %v1896 = vunpack.c.0.s8 %v1895
        %v1897 = vlaneseq
        %v1898 = vshrl.u32 %v1897, 7
        %v1899 = vsub.s32 %v1896, %v1898
        %v1900 = vrot.slane %v1886, %v1899
        %v1901 = vcombine.low %v1877, %v1893
        %v1902 = vcombine.high %v1877, %v1893
        %v1904 = vunpack.c.l.s4 1934713408
        %v1905 = vunpack.c.0.s8 %v1904
        %v1906 = vlaneseq
        %v1907 = vshrl.u32 %v1906, 7
        %v1908 = vsub.s32 %v1905, %v1907
        %v1909 = vrot.slane %v1901, %v1908
        %v1911 = vunpack.c.l.s4 1934713408
        %v1912 = vunpack.c.0.s8 %v1911
        %v1913 = vlaneseq
        %v1914 = vshrl.u32 %v1913, 7
        %v1915 = vsub.s32 %v1912, %v1914
        %v1916 = vrot.slane %v1902, %v1915
        %v1917 = vcombine.low %v1884, %v1900
        %v1918 = vcombine.high %v1884, %v1900
        %v1920 = vunpack.c.l.s4 1934713408
        %v1921 = vunpack.c.0.s8 %v1920
        %v1922 = vlaneseq
        %v1923 = vshrl.u32 %v1922, 7
        %v1924 = vsub.s32 %v1921, %v1923
        %v1925 = vrot.slane %v1917, %v1924
        %v1927 = vunpack.c.l.s4 1934713408
        %v1928 = vunpack.c.0.s8 %v1927
        %v1929 = vlaneseq
        %v1930 = vshrl.u32 %v1929, 7
        %v1931 = vsub.s32 %v1928, %v1930
        %v1932 = vrot.slane %v1918, %v1931
        %v1933 = vcombine.high %v1909, 0.0
        %v1934 = vcombine.high %v1916, 0.0
        %v1935 = vcombine.high %v1925, 0.0
        %v1936 = vcombine.high %v1932, 0.0
        %1942 = vrot.lane.b32.xlu0 %v842, 16
        %v1943 = vpop.permute.xlu0 %1942
        %1944 = vrot.lane.b32.xlu0 %v978, 16
        %v1945 = vpop.permute.xlu0 %1944
        %1946 = vrot.lane.b32.xlu0 %v1114, 16
        %v1947 = vpop.permute.xlu0 %1946
        %1948 = vrot.lane.b32.xlu0 %v1250, 16
        %v1949 = vpop.permute.xlu0 %1948
        %1950 = vrot.lane.b32.xlu0 %v1321, 16
        %v1951 = vpop.permute.xlu0 %1950
        %1962 = vrot.lane.b32.xlu0 %v843, 32
        %v1963 = vpop.permute.xlu0 %1962
        %1964 = vrot.lane.b32.xlu0 %v979, 32
        %v1965 = vpop.permute.xlu0 %1964
        %1966 = vrot.lane.b32.xlu0 %v1115, 32
        %v1967 = vpop.permute.xlu0 %1966
        %1968 = vrot.lane.b32.xlu0 %v1251, 32
        %v1969 = vpop.permute.xlu0 %1968
        %1970 = vrot.lane.b32.xlu0 %v1304, 32
        %v1971 = vpop.permute.xlu0 %1970
        %1982 = vrot.lane.b32.xlu0 %v844, 48
        %v1983 = vpop.permute.xlu0 %1982
        %1984 = vrot.lane.b32.xlu0 %v980, 48
        %v1985 = vpop.permute.xlu0 %1984
        %1986 = vrot.lane.b32.xlu0 %v1116, 48
        %v1987 = vpop.permute.xlu0 %1986
        %1988 = vrot.lane.b32.xlu0 %v1252, 48
        %v1989 = vpop.permute.xlu0 %1988
        %1990 = vrot.lane.b32.xlu0 %v1322, 48
        %v1991 = vpop.permute.xlu0 %1990
        %2002 = vrot.lane.b32.xlu0 %v845, 64
        %v2003 = vpop.permute.xlu0 %2002
        %2004 = vrot.lane.b32.xlu0 %v981, 64
        %v2005 = vpop.permute.xlu0 %2004
        %2006 = vrot.lane.b32.xlu0 %v1117, 64
        %v2007 = vpop.permute.xlu0 %2006
        %2008 = vrot.lane.b32.xlu0 %v1253, 64
        %v2009 = vpop.permute.xlu0 %2008
        %2010 = vrot.lane.b32.xlu0 %v1313, 64
        %v2011 = vpop.permute.xlu0 %2010
        %2022 = vrot.lane.b32.xlu0 %v846, 80
        %v2023 = vpop.permute.xlu0 %2022
        %2024 = vrot.lane.b32.xlu0 %v982, 80
        %v2025 = vpop.permute.xlu0 %2024
        %2026 = vrot.lane.b32.xlu0 %v1118, 80
        %v2027 = vpop.permute.xlu0 %2026
        %2028 = vrot.lane.b32.xlu0 %v1254, 80
        %v2029 = vpop.permute.xlu0 %2028
        %2030 = vrot.lane.b32.xlu0 %v1323, 80
        %v2031 = vpop.permute.xlu0 %2030
        %2042 = vrot.lane.b32.xlu0 %v847, 96
        %v2043 = vpop.permute.xlu0 %2042
        %2044 = vrot.lane.b32.xlu0 %v983, 96
        %v2045 = vpop.permute.xlu0 %2044
        %2046 = vrot.lane.b32.xlu0 %v1119, 96
        %v2047 = vpop.permute.xlu0 %2046
        %2048 = vrot.lane.b32.xlu0 %v1255, 96
        %v2049 = vpop.permute.xlu0 %2048
        %2050 = vrot.lane.b32.xlu0 %v1320, 96
        %v2051 = vpop.permute.xlu0 %2050
        %2062 = vrot.lane.b32.xlu0 %v848, 112
        %v2063 = vpop.permute.xlu0 %2062
        %2064 = vrot.lane.b32.xlu0 %v984, 112
        %v2065 = vpop.permute.xlu0 %2064
        %2066 = vrot.lane.b32.xlu0 %v1120, 112
        %v2067 = vpop.permute.xlu0 %2066
        %2068 = vrot.lane.b32.xlu0 %v1256, 112
        %v2069 = vpop.permute.xlu0 %2068
        %2070 = vrot.lane.b32.xlu0 %v1324, 112
        %v2071 = vpop.permute.xlu0 %2070
        %2082 = vrot.lane.b32.xlu0 %v1454, 16
        %v2083 = vpop.permute.xlu0 %2082
        %2084 = vrot.lane.b32.xlu0 %v1590, 16
        %v2085 = vpop.permute.xlu0 %2084
        %2086 = vrot.lane.b32.xlu0 %v1726, 16
        %v2087 = vpop.permute.xlu0 %2086
        %2088 = vrot.lane.b32.xlu0 %v1862, 16
        %v2089 = vpop.permute.xlu0 %2088
        %2090 = vrot.lane.b32.xlu0 %v1933, 16
        %v2091 = vpop.permute.xlu0 %2090
        %2102 = vrot.lane.b32.xlu0 %v1455, 32
        %v2103 = vpop.permute.xlu0 %2102
        %2104 = vrot.lane.b32.xlu0 %v1591, 32
        %v2105 = vpop.permute.xlu0 %2104
        %2106 = vrot.lane.b32.xlu0 %v1727, 32
        %v2107 = vpop.permute.xlu0 %2106
        %2108 = vrot.lane.b32.xlu0 %v1863, 32
        %v2109 = vpop.permute.xlu0 %2108
        %2110 = vrot.lane.b32.xlu0 %v1916, 32
        %v2111 = vpop.permute.xlu0 %2110
        %2122 = vrot.lane.b32.xlu0 %v1456, 48
        %v2123 = vpop.permute.xlu0 %2122
        %2124 = vrot.lane.b32.xlu0 %v1592, 48
        %v2125 = vpop.permute.xlu0 %2124
        %2126 = vrot.lane.b32.xlu0 %v1728, 48
        %v2127 = vpop.permute.xlu0 %2126
        %2128 = vrot.lane.b32.xlu0 %v1864, 48
        %v2129 = vpop.permute.xlu0 %2128
        %2130 = vrot.lane.b32.xlu0 %v1934, 48
        %v2131 = vpop.permute.xlu0 %2130
        %2142 = vrot.lane.b32.xlu0 %v1457, 64
        %v2143 = vpop.permute.xlu0 %2142
        %2144 = vrot.lane.b32.xlu0 %v1593, 64
        %v2145 = vpop.permute.xlu0 %2144
        %2146 = vrot.lane.b32.xlu0 %v1729, 64
        %v2147 = vpop.permute.xlu0 %2146
        %2148 = vrot.lane.b32.xlu0 %v1865, 64
        %v2149 = vpop.permute.xlu0 %2148
        %2150 = vrot.lane.b32.xlu0 %v1925, 64
        %v2151 = vpop.permute.xlu0 %2150
        %2162 = vrot.lane.b32.xlu0 %v1458, 80
        %v2163 = vpop.permute.xlu0 %2162
        %2164 = vrot.lane.b32.xlu0 %v1594, 80
        %v2165 = vpop.permute.xlu0 %2164
        %2166 = vrot.lane.b32.xlu0 %v1730, 80
        %v2167 = vpop.permute.xlu0 %2166
        %2168 = vrot.lane.b32.xlu0 %v1866, 80
        %v2169 = vpop.permute.xlu0 %2168
        %2170 = vrot.lane.b32.xlu0 %v1935, 80
        %v2171 = vpop.permute.xlu0 %2170
        %2182 = vrot.lane.b32.xlu0 %v1459, 96
        %v2183 = vpop.permute.xlu0 %2182
        %2184 = vrot.lane.b32.xlu0 %v1595, 96
        %v2185 = vpop.permute.xlu0 %2184
        %2186 = vrot.lane.b32.xlu0 %v1731, 96
        %v2187 = vpop.permute.xlu0 %2186
        %2188 = vrot.lane.b32.xlu0 %v1867, 96
        %v2189 = vpop.permute.xlu0 %2188
        %2190 = vrot.lane.b32.xlu0 %v1932, 96
        %v2191 = vpop.permute.xlu0 %2190
        %2202 = vrot.lane.b32.xlu0 %v1460, 112
        %v2203 = vpop.permute.xlu0 %2202
        %2204 = vrot.lane.b32.xlu0 %v1596, 112
        %v2205 = vpop.permute.xlu0 %2204
        %2206 = vrot.lane.b32.xlu0 %v1732, 112
        %v2207 = vpop.permute.xlu0 %2206
        %2208 = vrot.lane.b32.xlu0 %v1868, 112
        %v2209 = vpop.permute.xlu0 %2208
        %2210 = vrot.lane.b32.xlu0 %v1936, 112
        %v2211 = vpop.permute.xlu0 %2210
        %vm2217 = vcmask 130048
        %v2218 = vsel %vm2217, %v841, %v1943
        %v2219 = vsel %vm2217, %v977, %v1945
        %v2220 = vsel %vm2217, %v1113, %v1947
        %v2221 = vsel %vm2217, %v1249, %v1949
        %v2222 = vsel %vm2217, %v1297, %v1951
        %vm2223 = vcmask 261120
        %v2224 = vsel %vm2223, %v2218, %v1963
        %v2225 = vsel %vm2223, %v2219, %v1965
        %v2226 = vsel %vm2223, %v2220, %v1967
        %v2227 = vsel %vm2223, %v2221, %v1969
        %v2228 = vsel %vm2223, %v2222, %v1971
        %vm2229 = vcmask 392192
        %v2230 = vsel %vm2229, %v2224, %v1983
        %v2231 = vsel %vm2229, %v2225, %v1985
        %v2232 = vsel %vm2229, %v2226, %v1987
        %v2233 = vsel %vm2229, %v2227, %v1989
        %v2234 = vsel %vm2229, %v2228, %v1991
        %vm2235 = vcmask 523264
        %v2236 = vsel %vm2235, %v2230, %v2003
        %v2237 = vsel %vm2235, %v2231, %v2005
        %v2238 = vsel %vm2235, %v2232, %v2007
        %v2239 = vsel %vm2235, %v2233, %v2009
        %v2240 = vsel %vm2235, %v2234, %v2011
        %vm2241 = vcmask 654336
        %v2242 = vsel %vm2241, %v2236, %v2023
        %v2243 = vsel %vm2241, %v2237, %v2025
        %v2244 = vsel %vm2241, %v2238, %v2027
        %v2245 = vsel %vm2241, %v2239, %v2029
        %v2246 = vsel %vm2241, %v2240, %v2031
        %vm2247 = vcmask 785408
        %v2248 = vsel %vm2247, %v2242, %v2043
        %v2249 = vsel %vm2247, %v2243, %v2045
        %v2250 = vsel %vm2247, %v2244, %v2047
        %v2251 = vsel %vm2247, %v2245, %v2049
        %v2252 = vsel %vm2247, %v2246, %v2051
        %vm2253 = vcmask 916480
        %v2254 = vsel %vm2253, %v2248, %v2063
        %v2255 = vsel %vm2253, %v2249, %v2065
        %v2256 = vsel %vm2253, %v2250, %v2067
        %v2257 = vsel %vm2253, %v2251, %v2069
        %v2258 = vsel %vm2253, %v2252, %v2071
        %v2259 = vsel %vm2217, %v1453, %v2083
        %v2260 = vsel %vm2217, %v1589, %v2085
        %v2261 = vsel %vm2217, %v1725, %v2087
        %v2262 = vsel %vm2217, %v1861, %v2089
        %v2263 = vsel %vm2217, %v1909, %v2091
        %v2264 = vsel %vm2223, %v2259, %v2103
        %v2265 = vsel %vm2223, %v2260, %v2105
        %v2266 = vsel %vm2223, %v2261, %v2107
        %v2267 = vsel %vm2223, %v2262, %v2109
        %v2268 = vsel %vm2223, %v2263, %v2111
        %v2269 = vsel %vm2229, %v2264, %v2123
        %v2270 = vsel %vm2229, %v2265, %v2125
        %v2271 = vsel %vm2229, %v2266, %v2127
        %v2272 = vsel %vm2229, %v2267, %v2129
        %v2273 = vsel %vm2229, %v2268, %v2131
        %v2274 = vsel %vm2235, %v2269, %v2143
        %v2275 = vsel %vm2235, %v2270, %v2145
        %v2276 = vsel %vm2235, %v2271, %v2147
        %v2277 = vsel %vm2235, %v2272, %v2149
        %v2278 = vsel %vm2235, %v2273, %v2151
        %v2279 = vsel %vm2241, %v2274, %v2163
        %v2280 = vsel %vm2241, %v2275, %v2165
        %v2281 = vsel %vm2241, %v2276, %v2167
        %v2282 = vsel %vm2241, %v2277, %v2169
        %v2283 = vsel %vm2241, %v2278, %v2171
        %v2284 = vsel %vm2247, %v2279, %v2183
        %v2285 = vsel %vm2247, %v2280, %v2185
        %v2286 = vsel %vm2247, %v2281, %v2187
        %v2287 = vsel %vm2247, %v2282, %v2189
        %v2288 = vsel %vm2247, %v2283, %v2191
        %v2289 = vsel %vm2253, %v2284, %v2203
        %v2290 = vsel %vm2253, %v2285, %v2205
        %v2291 = vsel %vm2253, %v2286, %v2207
        %v2292 = vsel %vm2253, %v2287, %v2209
        %v2293 = vsel %vm2253, %v2288, %v2211
        %s2294 = scalar_lea.vmem [#allocation6], 8
        %v2295 = vld [vmem:[%s2294] sm:$0xff]
        %2296 = vrot.lane.b32.xlu0 %v470, 127
        %v2297 = vpop.permute.xlu0 %2296
        %2298 = vrot.lane.b32.xlu0 %v471, 127
        %v2299 = vpop.permute.xlu0 %2298
        %2300 = vrot.lane.b32.xlu0 %v473, 127
        %v2301 = vpop.permute.xlu0 %2300
        %2302 = vrot.lane.b32.xlu0 %v474, 127
        %v2303 = vpop.permute.xlu0 %2302
        %2304 = vrot.lane.b32.xlu0 %v476, 127
        %v2305 = vpop.permute.xlu0 %2304
        %2306 = vrot.lane.b32.xlu0 %v477, 127
        %v2307 = vpop.permute.xlu0 %2306
        %2308 = vrot.lane.b32.xlu0 %v479, 127
        %v2309 = vpop.permute.xlu0 %2308
        %2310 = vrot.lane.b32.xlu0 %v480, 127
        %v2311 = vpop.permute.xlu0 %2310
        %2312 = vrot.lane.b32.xlu0 %v482, 127
        %v2313 = vpop.permute.xlu0 %2312
        %2314 = vrot.lane.b32.xlu0 %v483, 127
        %v2315 = vpop.permute.xlu0 %2314
        %2316 = vrot.lane.b32.xlu0 %v485, 127
        %v2317 = vpop.permute.xlu0 %2316
        %2318 = vrot.lane.b32.xlu0 %v486, 127
        %v2319 = vpop.permute.xlu0 %2318
        %2320 = vrot.lane.b32.xlu0 %v488, 127
        %v2321 = vpop.permute.xlu0 %2320
        %2322 = vrot.lane.b32.xlu0 %v489, 127
        %v2323 = vpop.permute.xlu0 %2322
        %2324 = vrot.lane.b32.xlu0 %v491, 127
        %v2325 = vpop.permute.xlu0 %2324
        %2326 = vrot.lane.b32.xlu0 %v492, 127
        %v2327 = vpop.permute.xlu0 %2326
        %2328 = vrot.lane.b32.xlu0 %v494, 127
        %v2329 = vpop.permute.xlu0 %2328
        %2330 = vrot.lane.b32.xlu0 %v495, 127
        %v2331 = vpop.permute.xlu0 %2330
        %2332 = vrot.lane.b32.xlu0 %v497, 127
        %v2333 = vpop.permute.xlu0 %2332
        %2334 = vrot.lane.b32.xlu0 %v498, 127
        %v2335 = vpop.permute.xlu0 %2334
        %2336 = vrot.lane.b32.xlu0 %v500, 127
        %v2337 = vpop.permute.xlu0 %2336
        %2338 = vrot.lane.b32.xlu0 %v501, 127
        %v2339 = vpop.permute.xlu0 %2338
        %2340 = vrot.lane.b32.xlu0 %v503, 127
        %v2341 = vpop.permute.xlu0 %2340
        %2342 = vrot.lane.b32.xlu0 %v504, 127
        %v2343 = vpop.permute.xlu0 %2342
        %2344 = vrot.lane.b32.xlu0 %v545, 127
        %v2345 = vpop.permute.xlu0 %2344
        %2346 = vrot.lane.b32.xlu0 %v547, 127
        %v2347 = vpop.permute.xlu0 %2346
        %2348 = vrot.lane.b32.xlu0 %v550, 127
        %v2349 = vpop.permute.xlu0 %2348
        %2350 = vrot.lane.b32.xlu0 %v552, 127
        %v2351 = vpop.permute.xlu0 %2350
        %2352 = vrot.lane.b32.xlu0 %v555, 127
        %v2353 = vpop.permute.xlu0 %2352
        %2354 = vrot.lane.b32.xlu0 %v557, 127
        %v2355 = vpop.permute.xlu0 %2354
        %2356 = vrot.lane.b32.xlu0 %v560, 127
        %v2357 = vpop.permute.xlu0 %2356
        %2358 = vrot.lane.b32.xlu0 %v562, 127
        %v2359 = vpop.permute.xlu0 %2358
        %2360 = vrot.lane.b32.xlu0 %v565, 127
        %v2361 = vpop.permute.xlu0 %2360
        %2362 = vrot.lane.b32.xlu0 %v567, 127
        %v2363 = vpop.permute.xlu0 %2362
        %2364 = vrot.lane.b32.xlu0 %v570, 127
        %v2365 = vpop.permute.xlu0 %2364
        %2366 = vrot.lane.b32.xlu0 %v572, 127
        %v2367 = vpop.permute.xlu0 %2366
        %2368 = vrot.lane.b32.xlu0 %v575, 127
        %v2369 = vpop.permute.xlu0 %2368
        %2370 = vrot.lane.b32.xlu0 %v577, 127
        %v2371 = vpop.permute.xlu0 %2370
        %2372 = vrot.lane.b32.xlu0 %v580, 127
        %v2373 = vpop.permute.xlu0 %2372
        %2374 = vrot.lane.b32.xlu0 %v582, 127
        %v2375 = vpop.permute.xlu0 %2374
        %2376 = vrot.lane.b32.xlu0 %v585, 127
        %v2377 = vpop.permute.xlu0 %2376
        %2378 = vrot.lane.b32.xlu0 %v587, 127
        %v2379 = vpop.permute.xlu0 %2378
        %2380 = vrot.lane.b32.xlu0 %v590, 127
        %v2381 = vpop.permute.xlu0 %2380
        %2382 = vrot.lane.b32.xlu0 %v592, 127
        %v2383 = vpop.permute.xlu0 %2382
        %2384 = vrot.lane.b32.xlu0 %v595, 127
        %v2385 = vpop.permute.xlu0 %2384
        %2386 = vrot.lane.b32.xlu0 %v597, 127
        %v2387 = vpop.permute.xlu0 %2386
        %2388 = vrot.lane.b32.xlu0 %v600, 127
        %v2389 = vpop.permute.xlu0 %2388
        %2390 = vrot.lane.b32.xlu0 %v602, 127
        %v2391 = vpop.permute.xlu0 %2390
        %2392 = vrot.lane.b32.xlu0 %v630, 127
        %v2393 = vpop.permute.xlu0 %2392
        %2394 = vrot.lane.b32.xlu0 %v632, 127
        %v2395 = vpop.permute.xlu0 %2394
        %2396 = vrot.lane.b32.xlu0 %v635, 127
        %v2397 = vpop.permute.xlu0 %2396
        %2398 = vrot.lane.b32.xlu0 %v637, 127
        %v2399 = vpop.permute.xlu0 %2398
        %2400 = vrot.lane.b32.xlu0 %v640, 127
        %v2401 = vpop.permute.xlu0 %2400
        %2402 = vrot.lane.b32.xlu0 %v642, 127
        %v2403 = vpop.permute.xlu0 %2402
        %2404 = vrot.lane.b32.xlu0 %v645, 127
        %v2405 = vpop.permute.xlu0 %2404
        %2406 = vrot.lane.b32.xlu0 %v647, 127
        %v2407 = vpop.permute.xlu0 %2406
        %2408 = vrot.lane.b32.xlu0 %v650, 127
        %v2409 = vpop.permute.xlu0 %2408
        %2410 = vrot.lane.b32.xlu0 %v652, 127
        %v2411 = vpop.permute.xlu0 %2410
        %2412 = vrot.lane.b32.xlu0 %v655, 127
        %v2413 = vpop.permute.xlu0 %2412
        %2414 = vrot.lane.b32.xlu0 %v657, 127
        %v2415 = vpop.permute.xlu0 %2414
        %2416 = vrot.lane.b32.xlu0 %v660, 127
        %v2417 = vpop.permute.xlu0 %2416
        %2418 = vrot.lane.b32.xlu0 %v662, 127
        %v2419 = vpop.permute.xlu0 %2418
        %2420 = vrot.lane.b32.xlu0 %v665, 127
        %v2421 = vpop.permute.xlu0 %2420
        %2422 = vrot.lane.b32.xlu0 %v667, 127
        %v2423 = vpop.permute.xlu0 %2422
        %2424 = vrot.lane.b32.xlu0 %v670, 127
        %v2425 = vpop.permute.xlu0 %2424
        %2426 = vrot.lane.b32.xlu0 %v672, 127
        %v2427 = vpop.permute.xlu0 %2426
        %2428 = vrot.lane.b32.xlu0 %v675, 127
        %v2429 = vpop.permute.xlu0 %2428
        %2430 = vrot.lane.b32.xlu0 %v677, 127
        %v2431 = vpop.permute.xlu0 %2430
        %2432 = vrot.lane.b32.xlu0 %v680, 127
        %v2433 = vpop.permute.xlu0 %2432
        %2434 = vrot.lane.b32.xlu0 %v682, 127
        %v2435 = vpop.permute.xlu0 %2434
        %2436 = vrot.lane.b32.xlu0 %v685, 127
        %v2437 = vpop.permute.xlu0 %2436
        %2438 = vrot.lane.b32.xlu0 %v687, 127
        %v2439 = vpop.permute.xlu0 %2438
        %v2512 = vcombine.low %v2297, %v2305
        %v2513 = vcombine.high %v2297, %v2305
        %v2515 = vunpack.c.l.s4 1983009808
        %v2516 = vunpack.c.0.s8 %v2515
        %v2517 = vlaneseq
        %v2518 = vshrl.u32 %v2517, 7
        %v2519 = vsub.s32 %v2516, %v2518
        %v2520 = vrot.slane %v2512, %v2519
        %v2522 = vunpack.c.l.s4 1983009808
        %v2523 = vunpack.c.0.s8 %v2522
        %v2524 = vlaneseq
        %v2525 = vshrl.u32 %v2524, 7
        %v2526 = vsub.s32 %v2523, %v2525
        %v2527 = vrot.slane %v2513, %v2526
        %v2528 = vcombine.low %v2301, %v2309
        %v2529 = vcombine.high %v2301, %v2309
        %v2531 = vunpack.c.l.s4 1983009808
        %v2532 = vunpack.c.0.s8 %v2531
        %v2533 = vlaneseq
        %v2534 = vshrl.u32 %v2533, 7
        %v2535 = vsub.s32 %v2532, %v2534
        %v2536 = vrot.slane %v2528, %v2535
        %v2538 = vunpack.c.l.s4 1983009808
        %v2539 = vunpack.c.0.s8 %v2538
        %v2540 = vlaneseq
        %v2541 = vshrl.u32 %v2540, 7
        %v2542 = vsub.s32 %v2539, %v2541
        %v2543 = vrot.slane %v2529, %v2542
        %v2544 = vcombine.low %v2313, %v2321
        %v2545 = vcombine.high %v2313, %v2321
        %v2547 = vunpack.c.l.s4 1983009808
        %v2548 = vunpack.c.0.s8 %v2547
        %v2549 = vlaneseq
        %v2550 = vshrl.u32 %v2549, 7
        %v2551 = vsub.s32 %v2548, %v2550
        %v2552 = vrot.slane %v2544, %v2551
        %v2554 = vunpack.c.l.s4 1983009808
        %v2555 = vunpack.c.0.s8 %v2554
        %v2556 = vlaneseq
        %v2557 = vshrl.u32 %v2556, 7
        %v2558 = vsub.s32 %v2555, %v2557
        %v2559 = vrot.slane %v2545, %v2558
        %v2560 = vcombine.low %v2317, %v2325
        %v2561 = vcombine.high %v2317, %v2325
        %v2563 = vunpack.c.l.s4 1983009808
        %v2564 = vunpack.c.0.s8 %v2563
        %v2565 = vlaneseq
        %v2566 = vshrl.u32 %v2565, 7
        %v2567 = vsub.s32 %v2564, %v2566
        %v2568 = vrot.slane %v2560, %v2567
        %v2570 = vunpack.c.l.s4 1983009808
        %v2571 = vunpack.c.0.s8 %v2570
        %v2572 = vlaneseq
        %v2573 = vshrl.u32 %v2572, 7
        %v2574 = vsub.s32 %v2571, %v2573
        %v2575 = vrot.slane %v2561, %v2574
        %v2576 = vcombine.low %v2520, %v2536
        %v2577 = vcombine.high %v2520, %v2536
        %v2579 = vunpack.c.l.s4 1934713408
        %v2580 = vunpack.c.0.s8 %v2579
        %v2581 = vlaneseq
        %v2582 = vshrl.u32 %v2581, 7
        %v2583 = vsub.s32 %v2580, %v2582
        %v2584 = vrot.slane %v2576, %v2583
        %v2586 = vunpack.c.l.s4 1934713408
        %v2587 = vunpack.c.0.s8 %v2586
        %v2588 = vlaneseq
        %v2589 = vshrl.u32 %v2588, 7
        %v2590 = vsub.s32 %v2587, %v2589
        %v2591 = vrot.slane %v2577, %v2590
        %v2592 = vcombine.low %v2527, %v2543
        %v2593 = vcombine.high %v2527, %v2543
        %v2595 = vunpack.c.l.s4 1934713408
        %v2596 = vunpack.c.0.s8 %v2595
        %v2597 = vlaneseq
        %v2598 = vshrl.u32 %v2597, 7
        %v2599 = vsub.s32 %v2596, %v2598
        %v2600 = vrot.slane %v2592, %v2599
        %v2602 = vunpack.c.l.s4 1934713408
        %v2603 = vunpack.c.0.s8 %v2602
        %v2604 = vlaneseq
        %v2605 = vshrl.u32 %v2604, 7
        %v2606 = vsub.s32 %v2603, %v2605
        %v2607 = vrot.slane %v2593, %v2606
        %v2608 = vcombine.low %v2552, %v2568
        %v2609 = vcombine.high %v2552, %v2568
        %v2611 = vunpack.c.l.s4 1934713408
        %v2612 = vunpack.c.0.s8 %v2611
        %v2613 = vlaneseq
        %v2614 = vshrl.u32 %v2613, 7
        %v2615 = vsub.s32 %v2612, %v2614
        %v2616 = vrot.slane %v2608, %v2615
        %v2618 = vunpack.c.l.s4 1934713408
        %v2619 = vunpack.c.0.s8 %v2618
        %v2620 = vlaneseq
        %v2621 = vshrl.u32 %v2620, 7
        %v2622 = vsub.s32 %v2619, %v2621
        %v2623 = vrot.slane %v2609, %v2622
        %v2624 = vcombine.low %v2559, %v2575
        %v2625 = vcombine.high %v2559, %v2575
        %v2627 = vunpack.c.l.s4 1934713408
        %v2628 = vunpack.c.0.s8 %v2627
        %v2629 = vlaneseq
        %v2630 = vshrl.u32 %v2629, 7
        %v2631 = vsub.s32 %v2628, %v2630
        %v2632 = vrot.slane %v2624, %v2631
        %v2634 = vunpack.c.l.s4 1934713408
        %v2635 = vunpack.c.0.s8 %v2634
        %v2636 = vlaneseq
        %v2637 = vshrl.u32 %v2636, 7
        %v2638 = vsub.s32 %v2635, %v2637
        %v2639 = vrot.slane %v2625, %v2638
        %v2640 = vcombine.low %v2584, %v2616
        %v2641 = vcombine.high %v2584, %v2616
        %v2642 = vcombine.low %v2591, %v2623
        %v2643 = vcombine.high %v2591, %v2623
        %v2644 = vcombine.low %v2600, %v2632
        %v2645 = vcombine.high %v2600, %v2632
        %v2646 = vcombine.low %v2607, %v2639
        %v2647 = vcombine.high %v2607, %v2639
        %v2648 = vcombine.low %v2329, %v2337
        %v2649 = vcombine.high %v2329, %v2337
        %v2651 = vunpack.c.l.s4 1983009808
        %v2652 = vunpack.c.0.s8 %v2651
        %v2653 = vlaneseq
        %v2654 = vshrl.u32 %v2653, 7
        %v2655 = vsub.s32 %v2652, %v2654
        %v2656 = vrot.slane %v2648, %v2655
        %v2658 = vunpack.c.l.s4 1983009808
        %v2659 = vunpack.c.0.s8 %v2658
        %v2660 = vlaneseq
        %v2661 = vshrl.u32 %v2660, 7
        %v2662 = vsub.s32 %v2659, %v2661
        %v2663 = vrot.slane %v2649, %v2662
        %v2664 = vcombine.low %v2333, %v2341
        %v2665 = vcombine.high %v2333, %v2341
        %v2667 = vunpack.c.l.s4 1983009808
        %v2668 = vunpack.c.0.s8 %v2667
        %v2669 = vlaneseq
        %v2670 = vshrl.u32 %v2669, 7
        %v2671 = vsub.s32 %v2668, %v2670
        %v2672 = vrot.slane %v2664, %v2671
        %v2674 = vunpack.c.l.s4 1983009808
        %v2675 = vunpack.c.0.s8 %v2674
        %v2676 = vlaneseq
        %v2677 = vshrl.u32 %v2676, 7
        %v2678 = vsub.s32 %v2675, %v2677
        %v2679 = vrot.slane %v2665, %v2678
        %v2680 = vcombine.low %v2345, %v2353
        %v2681 = vcombine.high %v2345, %v2353
        %v2683 = vunpack.c.l.s4 1983009808
        %v2684 = vunpack.c.0.s8 %v2683
        %v2685 = vlaneseq
        %v2686 = vshrl.u32 %v2685, 7
        %v2687 = vsub.s32 %v2684, %v2686
        %v2688 = vrot.slane %v2680, %v2687
        %v2690 = vunpack.c.l.s4 1983009808
        %v2691 = vunpack.c.0.s8 %v2690
        %v2692 = vlaneseq
        %v2693 = vshrl.u32 %v2692, 7
        %v2694 = vsub.s32 %v2691, %v2693
        %v2695 = vrot.slane %v2681, %v2694
        %v2696 = vcombine.low %v2349, %v2357
        %v2697 = vcombine.high %v2349, %v2357
        %v2699 = vunpack.c.l.s4 1983009808
        %v2700 = vunpack.c.0.s8 %v2699
        %v2701 = vlaneseq
        %v2702 = vshrl.u32 %v2701, 7
        %v2703 = vsub.s32 %v2700, %v2702
        %v2704 = vrot.slane %v2696, %v2703
        %v2706 = vunpack.c.l.s4 1983009808
        %v2707 = vunpack.c.0.s8 %v2706
        %v2708 = vlaneseq
        %v2709 = vshrl.u32 %v2708, 7
        %v2710 = vsub.s32 %v2707, %v2709
        %v2711 = vrot.slane %v2697, %v2710
        %v2712 = vcombine.low %v2656, %v2672
        %v2713 = vcombine.high %v2656, %v2672
        %v2715 = vunpack.c.l.s4 1934713408
        %v2716 = vunpack.c.0.s8 %v2715
        %v2717 = vlaneseq
        %v2718 = vshrl.u32 %v2717, 7
        %v2719 = vsub.s32 %v2716, %v2718
        %v2720 = vrot.slane %v2712, %v2719
        %v2722 = vunpack.c.l.s4 1934713408
        %v2723 = vunpack.c.0.s8 %v2722
        %v2724 = vlaneseq
        %v2725 = vshrl.u32 %v2724, 7
        %v2726 = vsub.s32 %v2723, %v2725
        %v2727 = vrot.slane %v2713, %v2726
        %v2728 = vcombine.low %v2663, %v2679
        %v2729 = vcombine.high %v2663, %v2679
        %v2731 = vunpack.c.l.s4 1934713408
        %v2732 = vunpack.c.0.s8 %v2731
        %v2733 = vlaneseq
        %v2734 = vshrl.u32 %v2733, 7
        %v2735 = vsub.s32 %v2732, %v2734
        %v2736 = vrot.slane %v2728, %v2735
        %v2738 = vunpack.c.l.s4 1934713408
        %v2739 = vunpack.c.0.s8 %v2738
        %v2740 = vlaneseq
        %v2741 = vshrl.u32 %v2740, 7
        %v2742 = vsub.s32 %v2739, %v2741
        %v2743 = vrot.slane %v2729, %v2742
        %v2744 = vcombine.low %v2688, %v2704
        %v2745 = vcombine.high %v2688, %v2704
        %v2747 = vunpack.c.l.s4 1934713408
        %v2748 = vunpack.c.0.s8 %v2747
        %v2749 = vlaneseq
        %v2750 = vshrl.u32 %v2749, 7
        %v2751 = vsub.s32 %v2748, %v2750
        %v2752 = vrot.slane %v2744, %v2751
        %v2754 = vunpack.c.l.s4 1934713408
        %v2755 = vunpack.c.0.s8 %v2754
        %v2756 = vlaneseq
        %v2757 = vshrl.u32 %v2756, 7
        %v2758 = vsub.s32 %v2755, %v2757
        %v2759 = vrot.slane %v2745, %v2758
        %v2760 = vcombine.low %v2695, %v2711
        %v2761 = vcombine.high %v2695, %v2711
        %v2763 = vunpack.c.l.s4 1934713408
        %v2764 = vunpack.c.0.s8 %v2763
        %v2765 = vlaneseq
        %v2766 = vshrl.u32 %v2765, 7
        %v2767 = vsub.s32 %v2764, %v2766
        %v2768 = vrot.slane %v2760, %v2767
        %v2770 = vunpack.c.l.s4 1934713408
        %v2771 = vunpack.c.0.s8 %v2770
        %v2772 = vlaneseq
        %v2773 = vshrl.u32 %v2772, 7
        %v2774 = vsub.s32 %v2771, %v2773
        %v2775 = vrot.slane %v2761, %v2774
        %v2776 = vcombine.low %v2720, %v2752
        %v2777 = vcombine.high %v2720, %v2752
        %v2778 = vcombine.low %v2727, %v2759
        %v2779 = vcombine.high %v2727, %v2759
        %v2780 = vcombine.low %v2736, %v2768
        %v2781 = vcombine.high %v2736, %v2768
        %v2782 = vcombine.low %v2743, %v2775
        %v2783 = vcombine.high %v2743, %v2775
        %v2784 = vcombine.low %v2361, %v2369
        %v2785 = vcombine.high %v2361, %v2369
        %v2787 = vunpack.c.l.s4 1983009808
        %v2788 = vunpack.c.0.s8 %v2787
        %v2789 = vlaneseq
        %v2790 = vshrl.u32 %v2789, 7
        %v2791 = vsub.s32 %v2788, %v2790
        %v2792 = vrot.slane %v2784, %v2791
        %v2794 = vunpack.c.l.s4 1983009808
        %v2795 = vunpack.c.0.s8 %v2794
        %v2796 = vlaneseq
        %v2797 = vshrl.u32 %v2796, 7
        %v2798 = vsub.s32 %v2795, %v2797
        %v2799 = vrot.slane %v2785, %v2798
        %v2800 = vcombine.low %v2365, %v2373
        %v2801 = vcombine.high %v2365, %v2373
        %v2803 = vunpack.c.l.s4 1983009808
        %v2804 = vunpack.c.0.s8 %v2803
        %v2805 = vlaneseq
        %v2806 = vshrl.u32 %v2805, 7
        %v2807 = vsub.s32 %v2804, %v2806
        %v2808 = vrot.slane %v2800, %v2807
        %v2810 = vunpack.c.l.s4 1983009808
        %v2811 = vunpack.c.0.s8 %v2810
        %v2812 = vlaneseq
        %v2813 = vshrl.u32 %v2812, 7
        %v2814 = vsub.s32 %v2811, %v2813
        %v2815 = vrot.slane %v2801, %v2814
        %v2816 = vcombine.low %v2377, %v2385
        %v2817 = vcombine.high %v2377, %v2385
        %v2819 = vunpack.c.l.s4 1983009808
        %v2820 = vunpack.c.0.s8 %v2819
        %v2821 = vlaneseq
        %v2822 = vshrl.u32 %v2821, 7
        %v2823 = vsub.s32 %v2820, %v2822
        %v2824 = vrot.slane %v2816, %v2823
        %v2826 = vunpack.c.l.s4 1983009808
        %v2827 = vunpack.c.0.s8 %v2826
        %v2828 = vlaneseq
        %v2829 = vshrl.u32 %v2828, 7
        %v2830 = vsub.s32 %v2827, %v2829
        %v2831 = vrot.slane %v2817, %v2830
        %v2832 = vcombine.low %v2381, %v2389
        %v2833 = vcombine.high %v2381, %v2389
        %v2835 = vunpack.c.l.s4 1983009808
        %v2836 = vunpack.c.0.s8 %v2835
        %v2837 = vlaneseq
        %v2838 = vshrl.u32 %v2837, 7
        %v2839 = vsub.s32 %v2836, %v2838
        %v2840 = vrot.slane %v2832, %v2839
        %v2842 = vunpack.c.l.s4 1983009808
        %v2843 = vunpack.c.0.s8 %v2842
        %v2844 = vlaneseq
        %v2845 = vshrl.u32 %v2844, 7
        %v2846 = vsub.s32 %v2843, %v2845
        %v2847 = vrot.slane %v2833, %v2846
        %v2848 = vcombine.low %v2792, %v2808
        %v2849 = vcombine.high %v2792, %v2808
        %v2851 = vunpack.c.l.s4 1934713408
        %v2852 = vunpack.c.0.s8 %v2851
        %v2853 = vlaneseq
        %v2854 = vshrl.u32 %v2853, 7
        %v2855 = vsub.s32 %v2852, %v2854
        %v2856 = vrot.slane %v2848, %v2855
        %v2858 = vunpack.c.l.s4 1934713408
        %v2859 = vunpack.c.0.s8 %v2858
        %v2860 = vlaneseq
        %v2861 = vshrl.u32 %v2860, 7
        %v2862 = vsub.s32 %v2859, %v2861
        %v2863 = vrot.slane %v2849, %v2862
        %v2864 = vcombine.low %v2799, %v2815
        %v2865 = vcombine.high %v2799, %v2815
        %v2867 = vunpack.c.l.s4 1934713408
        %v2868 = vunpack.c.0.s8 %v2867
        %v2869 = vlaneseq
        %v2870 = vshrl.u32 %v2869, 7
        %v2871 = vsub.s32 %v2868, %v2870
        %v2872 = vrot.slane %v2864, %v2871
        %v2874 = vunpack.c.l.s4 1934713408
        %v2875 = vunpack.c.0.s8 %v2874
        %v2876 = vlaneseq
        %v2877 = vshrl.u32 %v2876, 7
        %v2878 = vsub.s32 %v2875, %v2877
        %v2879 = vrot.slane %v2865, %v2878
        %v2880 = vcombine.low %v2824, %v2840
        %v2881 = vcombine.high %v2824, %v2840
        %v2883 = vunpack.c.l.s4 1934713408
        %v2884 = vunpack.c.0.s8 %v2883
        %v2885 = vlaneseq
        %v2886 = vshrl.u32 %v2885, 7
        %v2887 = vsub.s32 %v2884, %v2886
        %v2888 = vrot.slane %v2880, %v2887
        %v2890 = vunpack.c.l.s4 1934713408
        %v2891 = vunpack.c.0.s8 %v2890
        %v2892 = vlaneseq
        %v2893 = vshrl.u32 %v2892, 7
        %v2894 = vsub.s32 %v2891, %v2893
        %v2895 = vrot.slane %v2881, %v2894
        %v2896 = vcombine.low %v2831, %v2847
        %v2897 = vcombine.high %v2831, %v2847
        %v2899 = vunpack.c.l.s4 1934713408
        %v2900 = vunpack.c.0.s8 %v2899
        %v2901 = vlaneseq
        %v2902 = vshrl.u32 %v2901, 7
        %v2903 = vsub.s32 %v2900, %v2902
        %v2904 = vrot.slane %v2896, %v2903
        %v2906 = vunpack.c.l.s4 1934713408
        %v2907 = vunpack.c.0.s8 %v2906
        %v2908 = vlaneseq
        %v2909 = vshrl.u32 %v2908, 7
        %v2910 = vsub.s32 %v2907, %v2909
        %v2911 = vrot.slane %v2897, %v2910
        %v2912 = vcombine.low %v2856, %v2888
        %v2913 = vcombine.high %v2856, %v2888
        %v2914 = vcombine.low %v2863, %v2895
        %v2915 = vcombine.high %v2863, %v2895
        %v2916 = vcombine.low %v2872, %v2904
        %v2917 = vcombine.high %v2872, %v2904
        %v2918 = vcombine.low %v2879, %v2911
        %v2919 = vcombine.high %v2879, %v2911
        %v2920 = vcombine.low %v2393, %v2401
        %v2921 = vcombine.high %v2393, %v2401
        %v2923 = vunpack.c.l.s4 1983009808
        %v2924 = vunpack.c.0.s8 %v2923
        %v2925 = vlaneseq
        %v2926 = vshrl.u32 %v2925, 7
        %v2927 = vsub.s32 %v2924, %v2926
        %v2928 = vrot.slane %v2920, %v2927
        %v2930 = vunpack.c.l.s4 1983009808
        %v2931 = vunpack.c.0.s8 %v2930
        %v2932 = vlaneseq
        %v2933 = vshrl.u32 %v2932, 7
        %v2934 = vsub.s32 %v2931, %v2933
        %v2935 = vrot.slane %v2921, %v2934
        %v2936 = vcombine.low %v2397, %v2405
        %v2937 = vcombine.high %v2397, %v2405
        %v2939 = vunpack.c.l.s4 1983009808
        %v2940 = vunpack.c.0.s8 %v2939
        %v2941 = vlaneseq
        %v2942 = vshrl.u32 %v2941, 7
        %v2943 = vsub.s32 %v2940, %v2942
        %v2944 = vrot.slane %v2936, %v2943
        %v2946 = vunpack.c.l.s4 1983009808
        %v2947 = vunpack.c.0.s8 %v2946
        %v2948 = vlaneseq
        %v2949 = vshrl.u32 %v2948, 7
        %v2950 = vsub.s32 %v2947, %v2949
        %v2951 = vrot.slane %v2937, %v2950
        %v2952 = vcombine.low %v2409, %v2417
        %v2953 = vcombine.high %v2409, %v2417
        %v2955 = vunpack.c.l.s4 1983009808
        %v2956 = vunpack.c.0.s8 %v2955
        %v2957 = vlaneseq
        %v2958 = vshrl.u32 %v2957, 7
        %v2959 = vsub.s32 %v2956, %v2958
        %v2960 = vrot.slane %v2952, %v2959
        %v2962 = vunpack.c.l.s4 1983009808
        %v2963 = vunpack.c.0.s8 %v2962
        %v2964 = vlaneseq
        %v2965 = vshrl.u32 %v2964, 7
        %v2966 = vsub.s32 %v2963, %v2965
        %v2967 = vrot.slane %v2953, %v2966
        %v2968 = vcombine.low %v2413, %v2421
        %v2969 = vcombine.high %v2413, %v2421
        %v2971 = vunpack.c.l.s4 1983009808
        %v2972 = vunpack.c.0.s8 %v2971
        %v2973 = vlaneseq
        %v2974 = vshrl.u32 %v2973, 7
        %v2975 = vsub.s32 %v2972, %v2974
        %v2976 = vrot.slane %v2968, %v2975
        %v2978 = vunpack.c.l.s4 1983009808
        %v2979 = vunpack.c.0.s8 %v2978
        %v2980 = vlaneseq
        %v2981 = vshrl.u32 %v2980, 7
        %v2982 = vsub.s32 %v2979, %v2981
        %v2983 = vrot.slane %v2969, %v2982
        %v2984 = vcombine.low %v2928, %v2944
        %v2985 = vcombine.high %v2928, %v2944
        %v2987 = vunpack.c.l.s4 1934713408
        %v2988 = vunpack.c.0.s8 %v2987
        %v2989 = vlaneseq
        %v2990 = vshrl.u32 %v2989, 7
        %v2991 = vsub.s32 %v2988, %v2990
        %v2992 = vrot.slane %v2984, %v2991
        %v2994 = vunpack.c.l.s4 1934713408
        %v2995 = vunpack.c.0.s8 %v2994
        %v2996 = vlaneseq
        %v2997 = vshrl.u32 %v2996, 7
        %v2998 = vsub.s32 %v2995, %v2997
        %v2999 = vrot.slane %v2985, %v2998
        %v3000 = vcombine.low %v2935, %v2951
        %v3001 = vcombine.high %v2935, %v2951
        %v3003 = vunpack.c.l.s4 1934713408
        %v3004 = vunpack.c.0.s8 %v3003
        %v3005 = vlaneseq
        %v3006 = vshrl.u32 %v3005, 7
        %v3007 = vsub.s32 %v3004, %v3006
        %v3008 = vrot.slane %v3000, %v3007
        %v3010 = vunpack.c.l.s4 1934713408
        %v3011 = vunpack.c.0.s8 %v3010
        %v3012 = vlaneseq
        %v3013 = vshrl.u32 %v3012, 7
        %v3014 = vsub.s32 %v3011, %v3013
        %v3015 = vrot.slane %v3001, %v3014
        %v3016 = vcombine.low %v2960, %v2976
        %v3017 = vcombine.high %v2960, %v2976
        %v3019 = vunpack.c.l.s4 1934713408
        %v3020 = vunpack.c.0.s8 %v3019
        %v3021 = vlaneseq
        %v3022 = vshrl.u32 %v3021, 7
        %v3023 = vsub.s32 %v3020, %v3022
        %v3024 = vrot.slane %v3016, %v3023
        %v3026 = vunpack.c.l.s4 1934713408
        %v3027 = vunpack.c.0.s8 %v3026
        %v3028 = vlaneseq
        %v3029 = vshrl.u32 %v3028, 7
        %v3030 = vsub.s32 %v3027, %v3029
        %v3031 = vrot.slane %v3017, %v3030
        %v3032 = vcombine.low %v2967, %v2983
        %v3033 = vcombine.high %v2967, %v2983
        %v3035 = vunpack.c.l.s4 1934713408
        %v3036 = vunpack.c.0.s8 %v3035
        %v3037 = vlaneseq
        %v3038 = vshrl.u32 %v3037, 7
        %v3039 = vsub.s32 %v3036, %v3038
        %v3040 = vrot.slane %v3032, %v3039
        %v3042 = vunpack.c.l.s4 1934713408
        %v3043 = vunpack.c.0.s8 %v3042
        %v3044 = vlaneseq
        %v3045 = vshrl.u32 %v3044, 7
        %v3046 = vsub.s32 %v3043, %v3045
        %v3047 = vrot.slane %v3033, %v3046
        %v3048 = vcombine.low %v2992, %v3024
        %v3049 = vcombine.high %v2992, %v3024
        %v3050 = vcombine.low %v2999, %v3031
        %v3051 = vcombine.high %v2999, %v3031
        %v3052 = vcombine.low %v3008, %v3040
        %v3053 = vcombine.high %v3008, %v3040
        %v3054 = vcombine.low %v3015, %v3047
        %v3055 = vcombine.high %v3015, %v3047
        %v3056 = vcombine.low %v2425, %v2433
        %v3057 = vcombine.high %v2425, %v2433
        %v3059 = vunpack.c.l.s4 1983009808
        %v3060 = vunpack.c.0.s8 %v3059
        %v3061 = vlaneseq
        %v3062 = vshrl.u32 %v3061, 7
        %v3063 = vsub.s32 %v3060, %v3062
        %v3064 = vrot.slane %v3056, %v3063
        %v3066 = vunpack.c.l.s4 1983009808
        %v3067 = vunpack.c.0.s8 %v3066
        %v3068 = vlaneseq
        %v3069 = vshrl.u32 %v3068, 7
        %v3070 = vsub.s32 %v3067, %v3069
        %v3071 = vrot.slane %v3057, %v3070
        %v3072 = vcombine.low %v2429, %v2437
        %v3073 = vcombine.high %v2429, %v2437
        %v3075 = vunpack.c.l.s4 1983009808
        %v3076 = vunpack.c.0.s8 %v3075
        %v3077 = vlaneseq
        %v3078 = vshrl.u32 %v3077, 7
        %v3079 = vsub.s32 %v3076, %v3078
        %v3080 = vrot.slane %v3072, %v3079
        %v3082 = vunpack.c.l.s4 1983009808
        %v3083 = vunpack.c.0.s8 %v3082
        %v3084 = vlaneseq
        %v3085 = vshrl.u32 %v3084, 7
        %v3086 = vsub.s32 %v3083, %v3085
        %v3087 = vrot.slane %v3073, %v3086
        %v3088 = vcombine.low %v3064, %v3080
        %v3089 = vcombine.high %v3064, %v3080
        %v3091 = vunpack.c.l.s4 1934713408
        %v3092 = vunpack.c.0.s8 %v3091
        %v3093 = vlaneseq
        %v3094 = vshrl.u32 %v3093, 7
        %v3095 = vsub.s32 %v3092, %v3094
        %v3096 = vrot.slane %v3088, %v3095
        %v3098 = vunpack.c.l.s4 1934713408
        %v3099 = vunpack.c.0.s8 %v3098
        %v3100 = vlaneseq
        %v3101 = vshrl.u32 %v3100, 7
        %v3102 = vsub.s32 %v3099, %v3101
        %v3103 = vrot.slane %v3089, %v3102
        %v3104 = vcombine.low %v3071, %v3087
        %v3105 = vcombine.high %v3071, %v3087
        %v3107 = vunpack.c.l.s4 1934713408
        %v3108 = vunpack.c.0.s8 %v3107
        %v3109 = vlaneseq
        %v3110 = vshrl.u32 %v3109, 7
        %v3111 = vsub.s32 %v3108, %v3110
        %v3112 = vrot.slane %v3104, %v3111
        %v3114 = vunpack.c.l.s4 1934713408
        %v3115 = vunpack.c.0.s8 %v3114
        %v3116 = vlaneseq
        %v3117 = vshrl.u32 %v3116, 7
        %v3118 = vsub.s32 %v3115, %v3117
        %v3119 = vrot.slane %v3105, %v3118
        %v3120 = vcombine.high %v3096, 0.0
        %v3121 = vcombine.high %v3103, 0.0
        %v3122 = vcombine.high %v3112, 0.0
        %v3123 = vcombine.high %v3119, 0.0
        %v3124 = vcombine.low %v2299, %v2307
        %v3125 = vcombine.high %v2299, %v2307
        %v3127 = vunpack.c.l.s4 1983009808
        %v3128 = vunpack.c.0.s8 %v3127
        %v3129 = vlaneseq
        %v3130 = vshrl.u32 %v3129, 7
        %v3131 = vsub.s32 %v3128, %v3130
        %v3132 = vrot.slane %v3124, %v3131
        %v3134 = vunpack.c.l.s4 1983009808
        %v3135 = vunpack.c.0.s8 %v3134
        %v3136 = vlaneseq
        %v3137 = vshrl.u32 %v3136, 7
        %v3138 = vsub.s32 %v3135, %v3137
        %v3139 = vrot.slane %v3125, %v3138
        %v3140 = vcombine.low %v2303, %v2311
        %v3141 = vcombine.high %v2303, %v2311
        %v3143 = vunpack.c.l.s4 1983009808
        %v3144 = vunpack.c.0.s8 %v3143
        %v3145 = vlaneseq
        %v3146 = vshrl.u32 %v3145, 7
        %v3147 = vsub.s32 %v3144, %v3146
        %v3148 = vrot.slane %v3140, %v3147
        %v3150 = vunpack.c.l.s4 1983009808
        %v3151 = vunpack.c.0.s8 %v3150
        %v3152 = vlaneseq
        %v3153 = vshrl.u32 %v3152, 7
        %v3154 = vsub.s32 %v3151, %v3153
        %v3155 = vrot.slane %v3141, %v3154
        %v3156 = vcombine.low %v2315, %v2323
        %v3157 = vcombine.high %v2315, %v2323
        %v3159 = vunpack.c.l.s4 1983009808
        %v3160 = vunpack.c.0.s8 %v3159
        %v3161 = vlaneseq
        %v3162 = vshrl.u32 %v3161, 7
        %v3163 = vsub.s32 %v3160, %v3162
        %v3164 = vrot.slane %v3156, %v3163
        %v3166 = vunpack.c.l.s4 1983009808
        %v3167 = vunpack.c.0.s8 %v3166
        %v3168 = vlaneseq
        %v3169 = vshrl.u32 %v3168, 7
        %v3170 = vsub.s32 %v3167, %v3169
        %v3171 = vrot.slane %v3157, %v3170
        %v3172 = vcombine.low %v2319, %v2327
        %v3173 = vcombine.high %v2319, %v2327
        %v3175 = vunpack.c.l.s4 1983009808
        %v3176 = vunpack.c.0.s8 %v3175
        %v3177 = vlaneseq
        %v3178 = vshrl.u32 %v3177, 7
        %v3179 = vsub.s32 %v3176, %v3178
        %v3180 = vrot.slane %v3172, %v3179
        %v3182 = vunpack.c.l.s4 1983009808
        %v3183 = vunpack.c.0.s8 %v3182
        %v3184 = vlaneseq
        %v3185 = vshrl.u32 %v3184, 7
        %v3186 = vsub.s32 %v3183, %v3185
        %v3187 = vrot.slane %v3173, %v3186
        %v3188 = vcombine.low %v3132, %v3148
        %v3189 = vcombine.high %v3132, %v3148
        %v3191 = vunpack.c.l.s4 1934713408
        %v3192 = vunpack.c.0.s8 %v3191
        %v3193 = vlaneseq
        %v3194 = vshrl.u32 %v3193, 7
        %v3195 = vsub.s32 %v3192, %v3194
        %v3196 = vrot.slane %v3188, %v3195
        %v3198 = vunpack.c.l.s4 1934713408
        %v3199 = vunpack.c.0.s8 %v3198
        %v3200 = vlaneseq
        %v3201 = vshrl.u32 %v3200, 7
        %v3202 = vsub.s32 %v3199, %v3201
        %v3203 = vrot.slane %v3189, %v3202
        %v3204 = vcombine.low %v3139, %v3155
        %v3205 = vcombine.high %v3139, %v3155
        %v3207 = vunpack.c.l.s4 1934713408
        %v3208 = vunpack.c.0.s8 %v3207
        %v3209 = vlaneseq
        %v3210 = vshrl.u32 %v3209, 7
        %v3211 = vsub.s32 %v3208, %v3210
        %v3212 = vrot.slane %v3204, %v3211
        %v3214 = vunpack.c.l.s4 1934713408
        %v3215 = vunpack.c.0.s8 %v3214
        %v3216 = vlaneseq
        %v3217 = vshrl.u32 %v3216, 7
        %v3218 = vsub.s32 %v3215, %v3217
        %v3219 = vrot.slane %v3205, %v3218
        %v3220 = vcombine.low %v3164, %v3180
        %v3221 = vcombine.high %v3164, %v3180
        %v3223 = vunpack.c.l.s4 1934713408
        %v3224 = vunpack.c.0.s8 %v3223
        %v3225 = vlaneseq
        %v3226 = vshrl.u32 %v3225, 7
        %v3227 = vsub.s32 %v3224, %v3226
        %v3228 = vrot.slane %v3220, %v3227
        %v3230 = vunpack.c.l.s4 1934713408
        %v3231 = vunpack.c.0.s8 %v3230
        %v3232 = vlaneseq
        %v3233 = vshrl.u32 %v3232, 7
        %v3234 = vsub.s32 %v3231, %v3233
        %v3235 = vrot.slane %v3221, %v3234
        %v3236 = vcombine.low %v3171, %v3187
        %v3237 = vcombine.high %v3171, %v3187
        %v3239 = vunpack.c.l.s4 1934713408
        %v3240 = vunpack.c.0.s8 %v3239
        %v3241 = vlaneseq
        %v3242 = vshrl.u32 %v3241, 7
        %v3243 = vsub.s32 %v3240, %v3242
        %v3244 = vrot.slane %v3236, %v3243
        %v3246 = vunpack.c.l.s4 1934713408
        %v3247 = vunpack.c.0.s8 %v3246
        %v3248 = vlaneseq
        %v3249 = vshrl.u32 %v3248, 7
        %v3250 = vsub.s32 %v3247, %v3249
        %v3251 = vrot.slane %v3237, %v3250
        %v3252 = vcombine.low %v3196, %v3228
        %v3253 = vcombine.high %v3196, %v3228
        %v3254 = vcombine.low %v3203, %v3235
        %v3255 = vcombine.high %v3203, %v3235
        %v3256 = vcombine.low %v3212, %v3244
        %v3257 = vcombine.high %v3212, %v3244
        %v3258 = vcombine.low %v3219, %v3251
        %v3259 = vcombine.high %v3219, %v3251
        %v3260 = vcombine.low %v2331, %v2339
        %v3261 = vcombine.high %v2331, %v2339
        %v3263 = vunpack.c.l.s4 1983009808
        %v3264 = vunpack.c.0.s8 %v3263
        %v3265 = vlaneseq
        %v3266 = vshrl.u32 %v3265, 7
        %v3267 = vsub.s32 %v3264, %v3266
        %v3268 = vrot.slane %v3260, %v3267
        %v3270 = vunpack.c.l.s4 1983009808
        %v3271 = vunpack.c.0.s8 %v3270
        %v3272 = vlaneseq
        %v3273 = vshrl.u32 %v3272, 7
        %v3274 = vsub.s32 %v3271, %v3273
        %v3275 = vrot.slane %v3261, %v3274
        %v3276 = vcombine.low %v2335, %v2343
        %v3277 = vcombine.high %v2335, %v2343
        %v3279 = vunpack.c.l.s4 1983009808
        %v3280 = vunpack.c.0.s8 %v3279
        %v3281 = vlaneseq
        %v3282 = vshrl.u32 %v3281, 7
        %v3283 = vsub.s32 %v3280, %v3282
        %v3284 = vrot.slane %v3276, %v3283
        %v3286 = vunpack.c.l.s4 1983009808
        %v3287 = vunpack.c.0.s8 %v3286
        %v3288 = vlaneseq
        %v3289 = vshrl.u32 %v3288, 7
        %v3290 = vsub.s32 %v3287, %v3289
        %v3291 = vrot.slane %v3277, %v3290
        %v3292 = vcombine.low %v2347, %v2355
        %v3293 = vcombine.high %v2347, %v2355
        %v3295 = vunpack.c.l.s4 1983009808
        %v3296 = vunpack.c.0.s8 %v3295
        %v3297 = vlaneseq
        %v3298 = vshrl.u32 %v3297, 7
        %v3299 = vsub.s32 %v3296, %v3298
        %v3300 = vrot.slane %v3292, %v3299
        %v3302 = vunpack.c.l.s4 1983009808
        %v3303 = vunpack.c.0.s8 %v3302
        %v3304 = vlaneseq
        %v3305 = vshrl.u32 %v3304, 7
        %v3306 = vsub.s32 %v3303, %v3305
        %v3307 = vrot.slane %v3293, %v3306
        %v3308 = vcombine.low %v2351, %v2359
        %v3309 = vcombine.high %v2351, %v2359
        %v3311 = vunpack.c.l.s4 1983009808
        %v3312 = vunpack.c.0.s8 %v3311
        %v3313 = vlaneseq
        %v3314 = vshrl.u32 %v3313, 7
        %v3315 = vsub.s32 %v3312, %v3314
        %v3316 = vrot.slane %v3308, %v3315
        %v3318 = vunpack.c.l.s4 1983009808
        %v3319 = vunpack.c.0.s8 %v3318
        %v3320 = vlaneseq
        %v3321 = vshrl.u32 %v3320, 7
        %v3322 = vsub.s32 %v3319, %v3321
        %v3323 = vrot.slane %v3309, %v3322
        %v3324 = vcombine.low %v3268, %v3284
        %v3325 = vcombine.high %v3268, %v3284
        %v3327 = vunpack.c.l.s4 1934713408
        %v3328 = vunpack.c.0.s8 %v3327
        %v3329 = vlaneseq
        %v3330 = vshrl.u32 %v3329, 7
        %v3331 = vsub.s32 %v3328, %v3330
        %v3332 = vrot.slane %v3324, %v3331
        %v3334 = vunpack.c.l.s4 1934713408
        %v3335 = vunpack.c.0.s8 %v3334
        %v3336 = vlaneseq
        %v3337 = vshrl.u32 %v3336, 7
        %v3338 = vsub.s32 %v3335, %v3337
        %v3339 = vrot.slane %v3325, %v3338
        %v3340 = vcombine.low %v3275, %v3291
        %v3341 = vcombine.high %v3275, %v3291
        %v3343 = vunpack.c.l.s4 1934713408
        %v3344 = vunpack.c.0.s8 %v3343
        %v3345 = vlaneseq
        %v3346 = vshrl.u32 %v3345, 7
        %v3347 = vsub.s32 %v3344, %v3346
        %v3348 = vrot.slane %v3340, %v3347
        %v3350 = vunpack.c.l.s4 1934713408
        %v3351 = vunpack.c.0.s8 %v3350
        %v3352 = vlaneseq
        %v3353 = vshrl.u32 %v3352, 7
        %v3354 = vsub.s32 %v3351, %v3353
        %v3355 = vrot.slane %v3341, %v3354
        %v3356 = vcombine.low %v3300, %v3316
        %v3357 = vcombine.high %v3300, %v3316
        %v3359 = vunpack.c.l.s4 1934713408
        %v3360 = vunpack.c.0.s8 %v3359
        %v3361 = vlaneseq
        %v3362 = vshrl.u32 %v3361, 7
        %v3363 = vsub.s32 %v3360, %v3362
        %v3364 = vrot.slane %v3356, %v3363
        %v3366 = vunpack.c.l.s4 1934713408
        %v3367 = vunpack.c.0.s8 %v3366
        %v3368 = vlaneseq
        %v3369 = vshrl.u32 %v3368, 7
        %v3370 = vsub.s32 %v3367, %v3369
        %v3371 = vrot.slane %v3357, %v3370
        %v3372 = vcombine.low %v3307, %v3323
        %v3373 = vcombine.high %v3307, %v3323
        %v3375 = vunpack.c.l.s4 1934713408
        %v3376 = vunpack.c.0.s8 %v3375
        %v3377 = vlaneseq
        %v3378 = vshrl.u32 %v3377, 7
        %v3379 = vsub.s32 %v3376, %v3378
        %v3380 = vrot.slane %v3372, %v3379
        %v3382 = vunpack.c.l.s4 1934713408
        %v3383 = vunpack.c.0.s8 %v3382
        %v3384 = vlaneseq
        %v3385 = vshrl.u32 %v3384, 7
        %v3386 = vsub.s32 %v3383, %v3385
        %v3387 = vrot.slane %v3373, %v3386
        %v3388 = vcombine.low %v3332, %v3364
        %v3389 = vcombine.high %v3332, %v3364
        %v3390 = vcombine.low %v3339, %v3371
        %v3391 = vcombine.high %v3339, %v3371
        %v3392 = vcombine.low %v3348, %v3380
        %v3393 = vcombine.high %v3348, %v3380
        %v3394 = vcombine.low %v3355, %v3387
        %v3395 = vcombine.high %v3355, %v3387
        %v3396 = vcombine.low %v2363, %v2371
        %v3397 = vcombine.high %v2363, %v2371
        %v3399 = vunpack.c.l.s4 1983009808
        %v3400 = vunpack.c.0.s8 %v3399
        %v3401 = vlaneseq
        %v3402 = vshrl.u32 %v3401, 7
        %v3403 = vsub.s32 %v3400, %v3402
        %v3404 = vrot.slane %v3396, %v3403
        %v3406 = vunpack.c.l.s4 1983009808
        %v3407 = vunpack.c.0.s8 %v3406
        %v3408 = vlaneseq
        %v3409 = vshrl.u32 %v3408, 7
        %v3410 = vsub.s32 %v3407, %v3409
        %v3411 = vrot.slane %v3397, %v3410
        %v3412 = vcombine.low %v2367, %v2375
        %v3413 = vcombine.high %v2367, %v2375
        %v3415 = vunpack.c.l.s4 1983009808
        %v3416 = vunpack.c.0.s8 %v3415
        %v3417 = vlaneseq
        %v3418 = vshrl.u32 %v3417, 7
        %v3419 = vsub.s32 %v3416, %v3418
        %v3420 = vrot.slane %v3412, %v3419
        %v3422 = vunpack.c.l.s4 1983009808
        %v3423 = vunpack.c.0.s8 %v3422
        %v3424 = vlaneseq
        %v3425 = vshrl.u32 %v3424, 7
        %v3426 = vsub.s32 %v3423, %v3425
        %v3427 = vrot.slane %v3413, %v3426
        %v3428 = vcombine.low %v2379, %v2387
        %v3429 = vcombine.high %v2379, %v2387
        %v3431 = vunpack.c.l.s4 1983009808
        %v3432 = vunpack.c.0.s8 %v3431
        %v3433 = vlaneseq
        %v3434 = vshrl.u32 %v3433, 7
        %v3435 = vsub.s32 %v3432, %v3434
        %v3436 = vrot.slane %v3428, %v3435
        %v3438 = vunpack.c.l.s4 1983009808
        %v3439 = vunpack.c.0.s8 %v3438
        %v3440 = vlaneseq
        %v3441 = vshrl.u32 %v3440, 7
        %v3442 = vsub.s32 %v3439, %v3441
        %v3443 = vrot.slane %v3429, %v3442
        %v3444 = vcombine.low %v2383, %v2391
        %v3445 = vcombine.high %v2383, %v2391
        %v3447 = vunpack.c.l.s4 1983009808
        %v3448 = vunpack.c.0.s8 %v3447
        %v3449 = vlaneseq
        %v3450 = vshrl.u32 %v3449, 7
        %v3451 = vsub.s32 %v3448, %v3450
        %v3452 = vrot.slane %v3444, %v3451
        %v3454 = vunpack.c.l.s4 1983009808
        %v3455 = vunpack.c.0.s8 %v3454
        %v3456 = vlaneseq
        %v3457 = vshrl.u32 %v3456, 7
        %v3458 = vsub.s32 %v3455, %v3457
        %v3459 = vrot.slane %v3445, %v3458
        %v3460 = vcombine.low %v3404, %v3420
        %v3461 = vcombine.high %v3404, %v3420
        %v3463 = vunpack.c.l.s4 1934713408
        %v3464 = vunpack.c.0.s8 %v3463
        %v3465 = vlaneseq
        %v3466 = vshrl.u32 %v3465, 7
        %v3467 = vsub.s32 %v3464, %v3466
        %v3468 = vrot.slane %v3460, %v3467
        %v3470 = vunpack.c.l.s4 1934713408
        %v3471 = vunpack.c.0.s8 %v3470
        %v3472 = vlaneseq
        %v3473 = vshrl.u32 %v3472, 7
        %v3474 = vsub.s32 %v3471, %v3473
        %v3475 = vrot.slane %v3461, %v3474
        %v3476 = vcombine.low %v3411, %v3427
        %v3477 = vcombine.high %v3411, %v3427
        %v3479 = vunpack.c.l.s4 1934713408
        %v3480 = vunpack.c.0.s8 %v3479
        %v3481 = vlaneseq
        %v3482 = vshrl.u32 %v3481, 7
        %v3483 = vsub.s32 %v3480, %v3482
        %v3484 = vrot.slane %v3476, %v3483
        %v3486 = vunpack.c.l.s4 1934713408
        %v3487 = vunpack.c.0.s8 %v3486
        %v3488 = vlaneseq
        %v3489 = vshrl.u32 %v3488, 7
        %v3490 = vsub.s32 %v3487, %v3489
        %v3491 = vrot.slane %v3477, %v3490
        %v3492 = vcombine.low %v3436, %v3452
        %v3493 = vcombine.high %v3436, %v3452
        %v3495 = vunpack.c.l.s4 1934713408
        %v3496 = vunpack.c.0.s8 %v3495
        %v3497 = vlaneseq
        %v3498 = vshrl.u32 %v3497, 7
        %v3499 = vsub.s32 %v3496, %v3498
        %v3500 = vrot.slane %v3492, %v3499
        %v3502 = vunpack.c.l.s4 1934713408
        %v3503 = vunpack.c.0.s8 %v3502
        %v3504 = vlaneseq
        %v3505 = vshrl.u32 %v3504, 7
        %v3506 = vsub.s32 %v3503, %v3505
        %v3507 = vrot.slane %v3493, %v3506
        %v3508 = vcombine.low %v3443, %v3459
        %v3509 = vcombine.high %v3443, %v3459
        %v3511 = vunpack.c.l.s4 1934713408
        %v3512 = vunpack.c.0.s8 %v3511
        %v3513 = vlaneseq
        %v3514 = vshrl.u32 %v3513, 7
        %v3515 = vsub.s32 %v3512, %v3514
        %v3516 = vrot.slane %v3508, %v3515
        %v3518 = vunpack.c.l.s4 1934713408
        %v3519 = vunpack.c.0.s8 %v3518
        %v3520 = vlaneseq
        %v3521 = vshrl.u32 %v3520, 7
        %v3522 = vsub.s32 %v3519, %v3521
        %v3523 = vrot.slane %v3509, %v3522
        %v3524 = vcombine.low %v3468, %v3500
        %v3525 = vcombine.high %v3468, %v3500
        %v3526 = vcombine.low %v3475, %v3507
        %v3527 = vcombine.high %v3475, %v3507
        %v3528 = vcombine.low %v3484, %v3516
        %v3529 = vcombine.high %v3484, %v3516
        %v3530 = vcombine.low %v3491, %v3523
        %v3531 = vcombine.high %v3491, %v3523
        %v3532 = vcombine.low %v2395, %v2403
        %v3533 = vcombine.high %v2395, %v2403
        %v3535 = vunpack.c.l.s4 1983009808
        %v3536 = vunpack.c.0.s8 %v3535
        %v3537 = vlaneseq
        %v3538 = vshrl.u32 %v3537, 7
        %v3539 = vsub.s32 %v3536, %v3538
        %v3540 = vrot.slane %v3532, %v3539
        %v3542 = vunpack.c.l.s4 1983009808
        %v3543 = vunpack.c.0.s8 %v3542
        %v3544 = vlaneseq
        %v3545 = vshrl.u32 %v3544, 7
        %v3546 = vsub.s32 %v3543, %v3545
        %v3547 = vrot.slane %v3533, %v3546
        %v3548 = vcombine.low %v2399, %v2407
        %v3549 = vcombine.high %v2399, %v2407
        %v3551 = vunpack.c.l.s4 1983009808
        %v3552 = vunpack.c.0.s8 %v3551
        %v3553 = vlaneseq
        %v3554 = vshrl.u32 %v3553, 7
        %v3555 = vsub.s32 %v3552, %v3554
        %v3556 = vrot.slane %v3548, %v3555
        %v3558 = vunpack.c.l.s4 1983009808
        %v3559 = vunpack.c.0.s8 %v3558
        %v3560 = vlaneseq
        %v3561 = vshrl.u32 %v3560, 7
        %v3562 = vsub.s32 %v3559, %v3561
        %v3563 = vrot.slane %v3549, %v3562
        %v3564 = vcombine.low %v2411, %v2419
        %v3565 = vcombine.high %v2411, %v2419
        %v3567 = vunpack.c.l.s4 1983009808
        %v3568 = vunpack.c.0.s8 %v3567
        %v3569 = vlaneseq
        %v3570 = vshrl.u32 %v3569, 7
        %v3571 = vsub.s32 %v3568, %v3570
        %v3572 = vrot.slane %v3564, %v3571
        %v3574 = vunpack.c.l.s4 1983009808
        %v3575 = vunpack.c.0.s8 %v3574
        %v3576 = vlaneseq
        %v3577 = vshrl.u32 %v3576, 7
        %v3578 = vsub.s32 %v3575, %v3577
        %v3579 = vrot.slane %v3565, %v3578
        %v3580 = vcombine.low %v2415, %v2423
        %v3581 = vcombine.high %v2415, %v2423
        %v3583 = vunpack.c.l.s4 1983009808
        %v3584 = vunpack.c.0.s8 %v3583
        %v3585 = vlaneseq
        %v3586 = vshrl.u32 %v3585, 7
        %v3587 = vsub.s32 %v3584, %v3586
        %v3588 = vrot.slane %v3580, %v3587
        %v3590 = vunpack.c.l.s4 1983009808
        %v3591 = vunpack.c.0.s8 %v3590
        %v3592 = vlaneseq
        %v3593 = vshrl.u32 %v3592, 7
        %v3594 = vsub.s32 %v3591, %v3593
        %v3595 = vrot.slane %v3581, %v3594
        %v3596 = vcombine.low %v3540, %v3556
        %v3597 = vcombine.high %v3540, %v3556
        %v3599 = vunpack.c.l.s4 1934713408
        %v3600 = vunpack.c.0.s8 %v3599
        %v3601 = vlaneseq
        %v3602 = vshrl.u32 %v3601, 7
        %v3603 = vsub.s32 %v3600, %v3602
        %v3604 = vrot.slane %v3596, %v3603
        %v3606 = vunpack.c.l.s4 1934713408
        %v3607 = vunpack.c.0.s8 %v3606
        %v3608 = vlaneseq
        %v3609 = vshrl.u32 %v3608, 7
        %v3610 = vsub.s32 %v3607, %v3609
        %v3611 = vrot.slane %v3597, %v3610
        %v3612 = vcombine.low %v3547, %v3563
        %v3613 = vcombine.high %v3547, %v3563
        %v3615 = vunpack.c.l.s4 1934713408
        %v3616 = vunpack.c.0.s8 %v3615
        %v3617 = vlaneseq
        %v3618 = vshrl.u32 %v3617, 7
        %v3619 = vsub.s32 %v3616, %v3618
        %v3620 = vrot.slane %v3612, %v3619
        %v3622 = vunpack.c.l.s4 1934713408
        %v3623 = vunpack.c.0.s8 %v3622
        %v3624 = vlaneseq
        %v3625 = vshrl.u32 %v3624, 7
        %v3626 = vsub.s32 %v3623, %v3625
        %v3627 = vrot.slane %v3613, %v3626
        %v3628 = vcombine.low %v3572, %v3588
        %v3629 = vcombine.high %v3572, %v3588
        %v3631 = vunpack.c.l.s4 1934713408
        %v3632 = vunpack.c.0.s8 %v3631
        %v3633 = vlaneseq
        %v3634 = vshrl.u32 %v3633, 7
        %v3635 = vsub.s32 %v3632, %v3634
        %v3636 = vrot.slane %v3628, %v3635
        %v3638 = vunpack.c.l.s4 1934713408
        %v3639 = vunpack.c.0.s8 %v3638
        %v3640 = vlaneseq
        %v3641 = vshrl.u32 %v3640, 7
        %v3642 = vsub.s32 %v3639, %v3641
        %v3643 = vrot.slane %v3629, %v3642
        %v3644 = vcombine.low %v3579, %v3595
        %v3645 = vcombine.high %v3579, %v3595
        %v3647 = vunpack.c.l.s4 1934713408
        %v3648 = vunpack.c.0.s8 %v3647
        %v3649 = vlaneseq
        %v3650 = vshrl.u32 %v3649, 7
        %v3651 = vsub.s32 %v3648, %v3650
        %v3652 = vrot.slane %v3644, %v3651
        %v3654 = vunpack.c.l.s4 1934713408
        %v3655 = vunpack.c.0.s8 %v3654
        %v3656 = vlaneseq
        %v3657 = vshrl.u32 %v3656, 7
        %v3658 = vsub.s32 %v3655, %v3657
        %v3659 = vrot.slane %v3645, %v3658
        %v3660 = vcombine.low %v3604, %v3636
        %v3661 = vcombine.high %v3604, %v3636
        %v3662 = vcombine.low %v3611, %v3643
        %v3663 = vcombine.high %v3611, %v3643
        %v3664 = vcombine.low %v3620, %v3652
        %v3665 = vcombine.high %v3620, %v3652
        %v3666 = vcombine.low %v3627, %v3659
        %v3667 = vcombine.high %v3627, %v3659
        %v3668 = vcombine.low %v2427, %v2435
        %v3669 = vcombine.high %v2427, %v2435
        %v3671 = vunpack.c.l.s4 1983009808
        %v3672 = vunpack.c.0.s8 %v3671
        %v3673 = vlaneseq
        %v3674 = vshrl.u32 %v3673, 7
        %v3675 = vsub.s32 %v3672, %v3674
        %v3676 = vrot.slane %v3668, %v3675
        %v3678 = vunpack.c.l.s4 1983009808
        %v3679 = vunpack.c.0.s8 %v3678
        %v3680 = vlaneseq
        %v3681 = vshrl.u32 %v3680, 7
        %v3682 = vsub.s32 %v3679, %v3681
        %v3683 = vrot.slane %v3669, %v3682
        %v3684 = vcombine.low %v2431, %v2439
        %v3685 = vcombine.high %v2431, %v2439
        %v3687 = vunpack.c.l.s4 1983009808
        %v3688 = vunpack.c.0.s8 %v3687
        %v3689 = vlaneseq
        %v3690 = vshrl.u32 %v3689, 7
        %v3691 = vsub.s32 %v3688, %v3690
        %v3692 = vrot.slane %v3684, %v3691
        %v3694 = vunpack.c.l.s4 1983009808
        %v3695 = vunpack.c.0.s8 %v3694
        %v3696 = vlaneseq
        %v3697 = vshrl.u32 %v3696, 7
        %v3698 = vsub.s32 %v3695, %v3697
        %v3699 = vrot.slane %v3685, %v3698
        %v3700 = vcombine.low %v3676, %v3692
        %v3701 = vcombine.high %v3676, %v3692
        %v3703 = vunpack.c.l.s4 1934713408
        %v3704 = vunpack.c.0.s8 %v3703
        %v3705 = vlaneseq
        %v3706 = vshrl.u32 %v3705, 7
        %v3707 = vsub.s32 %v3704, %v3706
        %v3708 = vrot.slane %v3700, %v3707
        %v3710 = vunpack.c.l.s4 1934713408
        %v3711 = vunpack.c.0.s8 %v3710
        %v3712 = vlaneseq
        %v3713 = vshrl.u32 %v3712, 7
        %v3714 = vsub.s32 %v3711, %v3713
        %v3715 = vrot.slane %v3701, %v3714
        %v3716 = vcombine.low %v3683, %v3699
        %v3717 = vcombine.high %v3683, %v3699
        %v3719 = vunpack.c.l.s4 1934713408
        %v3720 = vunpack.c.0.s8 %v3719
        %v3721 = vlaneseq
        %v3722 = vshrl.u32 %v3721, 7
        %v3723 = vsub.s32 %v3720, %v3722
        %v3724 = vrot.slane %v3716, %v3723
        %v3726 = vunpack.c.l.s4 1934713408
        %v3727 = vunpack.c.0.s8 %v3726
        %v3728 = vlaneseq
        %v3729 = vshrl.u32 %v3728, 7
        %v3730 = vsub.s32 %v3727, %v3729
        %v3731 = vrot.slane %v3717, %v3730
        %v3732 = vcombine.high %v3708, 0.0
        %v3733 = vcombine.high %v3715, 0.0
        %v3734 = vcombine.high %v3724, 0.0
        %v3735 = vcombine.high %v3731, 0.0
        %3741 = vrot.lane.b32.xlu0 %v2641, 16
        %v3742 = vpop.permute.xlu0 %3741
        %3743 = vrot.lane.b32.xlu0 %v2777, 16
        %v3744 = vpop.permute.xlu0 %3743
        %3745 = vrot.lane.b32.xlu0 %v2913, 16
        %v3746 = vpop.permute.xlu0 %3745
        %3747 = vrot.lane.b32.xlu0 %v3049, 16
        %v3748 = vpop.permute.xlu0 %3747
        %3749 = vrot.lane.b32.xlu0 %v3120, 16
        %v3750 = vpop.permute.xlu0 %3749
        %3761 = vrot.lane.b32.xlu0 %v2642, 32
        %v3762 = vpop.permute.xlu0 %3761
        %3763 = vrot.lane.b32.xlu0 %v2778, 32
        %v3764 = vpop.permute.xlu0 %3763
        %3765 = vrot.lane.b32.xlu0 %v2914, 32
        %v3766 = vpop.permute.xlu0 %3765
        %3767 = vrot.lane.b32.xlu0 %v3050, 32
        %v3768 = vpop.permute.xlu0 %3767
        %3769 = vrot.lane.b32.xlu0 %v3103, 32
        %v3770 = vpop.permute.xlu0 %3769
        %3781 = vrot.lane.b32.xlu0 %v2643, 48
        %v3782 = vpop.permute.xlu0 %3781
        %3783 = vrot.lane.b32.xlu0 %v2779, 48
        %v3784 = vpop.permute.xlu0 %3783
        %3785 = vrot.lane.b32.xlu0 %v2915, 48
        %v3786 = vpop.permute.xlu0 %3785
        %3787 = vrot.lane.b32.xlu0 %v3051, 48
        %v3788 = vpop.permute.xlu0 %3787
        %3789 = vrot.lane.b32.xlu0 %v3121, 48
        %v3790 = vpop.permute.xlu0 %3789
        %3801 = vrot.lane.b32.xlu0 %v2644, 64
        %v3802 = vpop.permute.xlu0 %3801
        %3803 = vrot.lane.b32.xlu0 %v2780, 64
        %v3804 = vpop.permute.xlu0 %3803
        %3805 = vrot.lane.b32.xlu0 %v2916, 64
        %v3806 = vpop.permute.xlu0 %3805
        %3807 = vrot.lane.b32.xlu0 %v3052, 64
        %v3808 = vpop.permute.xlu0 %3807
        %3809 = vrot.lane.b32.xlu0 %v3112, 64
        %v3810 = vpop.permute.xlu0 %3809
        %3821 = vrot.lane.b32.xlu0 %v2645, 80
        %v3822 = vpop.permute.xlu0 %3821
        %3823 = vrot.lane.b32.xlu0 %v2781, 80
        %v3824 = vpop.permute.xlu0 %3823
        %3825 = vrot.lane.b32.xlu0 %v2917, 80
        %v3826 = vpop.permute.xlu0 %3825
        %3827 = vrot.lane.b32.xlu0 %v3053, 80
        %v3828 = vpop.permute.xlu0 %3827
        %3829 = vrot.lane.b32.xlu0 %v3122, 80
        %v3830 = vpop.permute.xlu0 %3829
        %3841 = vrot.lane.b32.xlu0 %v2646, 96
        %v3842 = vpop.permute.xlu0 %3841
        %3843 = vrot.lane.b32.xlu0 %v2782, 96
        %v3844 = vpop.permute.xlu0 %3843
        %3845 = vrot.lane.b32.xlu0 %v2918, 96
        %v3846 = vpop.permute.xlu0 %3845
        %3847 = vrot.lane.b32.xlu0 %v3054, 96
        %v3848 = vpop.permute.xlu0 %3847
        %3849 = vrot.lane.b32.xlu0 %v3119, 96
        %v3850 = vpop.permute.xlu0 %3849
        %3861 = vrot.lane.b32.xlu0 %v2647, 112
        %v3862 = vpop.permute.xlu0 %3861
        %3863 = vrot.lane.b32.xlu0 %v2783, 112
        %v3864 = vpop.permute.xlu0 %3863
        %3865 = vrot.lane.b32.xlu0 %v2919, 112
        %v3866 = vpop.permute.xlu0 %3865
        %3867 = vrot.lane.b32.xlu0 %v3055, 112
        %v3868 = vpop.permute.xlu0 %3867
        %3869 = vrot.lane.b32.xlu0 %v3123, 112
        %v3870 = vpop.permute.xlu0 %3869
        %3881 = vrot.lane.b32.xlu0 %v3253, 16
        %v3882 = vpop.permute.xlu0 %3881
        %3883 = vrot.lane.b32.xlu0 %v3389, 16
        %v3884 = vpop.permute.xlu0 %3883
        %3885 = vrot.lane.b32.xlu0 %v3525, 16
        %v3886 = vpop.permute.xlu0 %3885
        %3887 = vrot.lane.b32.xlu0 %v3661, 16
        %v3888 = vpop.permute.xlu0 %3887
        %3889 = vrot.lane.b32.xlu0 %v3732, 16
        %v3890 = vpop.permute.xlu0 %3889
        %3901 = vrot.lane.b32.xlu0 %v3254, 32
        %v3902 = vpop.permute.xlu0 %3901
        %3903 = vrot.lane.b32.xlu0 %v3390, 32
        %v3904 = vpop.permute.xlu0 %3903
        %3905 = vrot.lane.b32.xlu0 %v3526, 32
        %v3906 = vpop.permute.xlu0 %3905
        %3907 = vrot.lane.b32.xlu0 %v3662, 32
        %v3908 = vpop.permute.xlu0 %3907
        %3909 = vrot.lane.b32.xlu0 %v3715, 32
        %v3910 = vpop.permute.xlu0 %3909
        %3921 = vrot.lane.b32.xlu0 %v3255, 48
        %v3922 = vpop.permute.xlu0 %3921
        %3923 = vrot.lane.b32.xlu0 %v3391, 48
        %v3924 = vpop.permute.xlu0 %3923
        %3925 = vrot.lane.b32.xlu0 %v3527, 48
        %v3926 = vpop.permute.xlu0 %3925
        %3927 = vrot.lane.b32.xlu0 %v3663, 48
        %v3928 = vpop.permute.xlu0 %3927
        %3929 = vrot.lane.b32.xlu0 %v3733, 48
        %v3930 = vpop.permute.xlu0 %3929
        %3941 = vrot.lane.b32.xlu0 %v3256, 64
        %v3942 = vpop.permute.xlu0 %3941
        %3943 = vrot.lane.b32.xlu0 %v3392, 64
        %v3944 = vpop.permute.xlu0 %3943
        %3945 = vrot.lane.b32.xlu0 %v3528, 64
        %v3946 = vpop.permute.xlu0 %3945
        %3947 = vrot.lane.b32.xlu0 %v3664, 64
        %v3948 = vpop.permute.xlu0 %3947
        %3949 = vrot.lane.b32.xlu0 %v3724, 64
        %v3950 = vpop.permute.xlu0 %3949
        %3961 = vrot.lane.b32.xlu0 %v3257, 80
        %v3962 = vpop.permute.xlu0 %3961
        %3963 = vrot.lane.b32.xlu0 %v3393, 80
        %v3964 = vpop.permute.xlu0 %3963
        %3965 = vrot.lane.b32.xlu0 %v3529, 80
        %v3966 = vpop.permute.xlu0 %3965
        %3967 = vrot.lane.b32.xlu0 %v3665, 80
        %v3968 = vpop.permute.xlu0 %3967
        %3969 = vrot.lane.b32.xlu0 %v3734, 80
        %v3970 = vpop.permute.xlu0 %3969
        %3981 = vrot.lane.b32.xlu0 %v3258, 96
        %v3982 = vpop.permute.xlu0 %3981
        %3983 = vrot.lane.b32.xlu0 %v3394, 96
        %v3984 = vpop.permute.xlu0 %3983
        %3985 = vrot.lane.b32.xlu0 %v3530, 96
        %v3986 = vpop.permute.xlu0 %3985
        %3987 = vrot.lane.b32.xlu0 %v3666, 96
        %v3988 = vpop.permute.xlu0 %3987
        %3989 = vrot.lane.b32.xlu0 %v3731, 96
        %v3990 = vpop.permute.xlu0 %3989
        %4001 = vrot.lane.b32.xlu0 %v3259, 112
        %v4002 = vpop.permute.xlu0 %4001
        %4003 = vrot.lane.b32.xlu0 %v3395, 112
        %v4004 = vpop.permute.xlu0 %4003
        %4005 = vrot.lane.b32.xlu0 %v3531, 112
        %v4006 = vpop.permute.xlu0 %4005
        %4007 = vrot.lane.b32.xlu0 %v3667, 112
        %v4008 = vpop.permute.xlu0 %4007
        %4009 = vrot.lane.b32.xlu0 %v3735, 112
        %v4010 = vpop.permute.xlu0 %4009
        %v4016 = vsel %vm2217, %v2640, %v3742
        %v4017 = vsel %vm2217, %v2776, %v3744
        %v4018 = vsel %vm2217, %v2912, %v3746
        %v4019 = vsel %vm2217, %v3048, %v3748
        %v4020 = vsel %vm2217, %v3096, %v3750
        %v4021 = vsel %vm2223, %v4016, %v3762
        %v4022 = vsel %vm2223, %v4017, %v3764
        %v4023 = vsel %vm2223, %v4018, %v3766
        %v4024 = vsel %vm2223, %v4019, %v3768
        %v4025 = vsel %vm2223, %v4020, %v3770
        %v4026 = vsel %vm2229, %v4021, %v3782
        %v4027 = vsel %vm2229, %v4022, %v3784
        %v4028 = vsel %vm2229, %v4023, %v3786
        %v4029 = vsel %vm2229, %v4024, %v3788
        %v4030 = vsel %vm2229, %v4025, %v3790
        %v4031 = vsel %vm2235, %v4026, %v3802
        %v4032 = vsel %vm2235, %v4027, %v3804
        %v4033 = vsel %vm2235, %v4028, %v3806
        %v4034 = vsel %vm2235, %v4029, %v3808
        %v4035 = vsel %vm2235, %v4030, %v3810
        %v4036 = vsel %vm2241, %v4031, %v3822
        %v4037 = vsel %vm2241, %v4032, %v3824
        %v4038 = vsel %vm2241, %v4033, %v3826
        %v4039 = vsel %vm2241, %v4034, %v3828
        %v4040 = vsel %vm2241, %v4035, %v3830
        %v4041 = vsel %vm2247, %v4036, %v3842
        %v4042 = vsel %vm2247, %v4037, %v3844
        %v4043 = vsel %vm2247, %v4038, %v3846
        %v4044 = vsel %vm2247, %v4039, %v3848
        %v4045 = vsel %vm2247, %v4040, %v3850
        %v4046 = vsel %vm2253, %v4041, %v3862
        %v4047 = vsel %vm2253, %v4042, %v3864
        %v4048 = vsel %vm2253, %v4043, %v3866
        %v4049 = vsel %vm2253, %v4044, %v3868
        %v4050 = vsel %vm2253, %v4045, %v3870
        %v4051 = vsel %vm2217, %v3252, %v3882
        %v4052 = vsel %vm2217, %v3388, %v3884
        %v4053 = vsel %vm2217, %v3524, %v3886
        %v4054 = vsel %vm2217, %v3660, %v3888
        %v4055 = vsel %vm2217, %v3708, %v3890
        %v4056 = vsel %vm2223, %v4051, %v3902
        %v4057 = vsel %vm2223, %v4052, %v3904
        %v4058 = vsel %vm2223, %v4053, %v3906
        %v4059 = vsel %vm2223, %v4054, %v3908
        %v4060 = vsel %vm2223, %v4055, %v3910
        %v4061 = vsel %vm2229, %v4056, %v3922
        %v4062 = vsel %vm2229, %v4057, %v3924
        %v4063 = vsel %vm2229, %v4058, %v3926
        %v4064 = vsel %vm2229, %v4059, %v3928
        %v4065 = vsel %vm2229, %v4060, %v3930
        %v4066 = vsel %vm2235, %v4061, %v3942
        %v4067 = vsel %vm2235, %v4062, %v3944
        %v4068 = vsel %vm2235, %v4063, %v3946
        %v4069 = vsel %vm2235, %v4064, %v3948
        %v4070 = vsel %vm2235, %v4065, %v3950
        %v4071 = vsel %vm2241, %v4066, %v3962
        %v4072 = vsel %vm2241, %v4067, %v3964
        %v4073 = vsel %vm2241, %v4068, %v3966
        %v4074 = vsel %vm2241, %v4069, %v3968
        %v4075 = vsel %vm2241, %v4070, %v3970
        %v4076 = vsel %vm2247, %v4071, %v3982
        %v4077 = vsel %vm2247, %v4072, %v3984
        %v4078 = vsel %vm2247, %v4073, %v3986
        %v4079 = vsel %vm2247, %v4074, %v3988
        %v4080 = vsel %vm2247, %v4075, %v3990
        %v4081 = vsel %vm2253, %v4076, %v4002
        %v4082 = vsel %vm2253, %v4077, %v4004
        %v4083 = vsel %vm2253, %v4078, %v4006
        %v4084 = vsel %vm2253, %v4079, %v4008
        %v4085 = vsel %vm2253, %v4080, %v4010
        %vm4086 = vcmask 293888
        %v4088 = vsel %vm4086, %v2295, 0
        %vm4090 = vcmask 1043456
        %v4092 = vsel %vm4090, %v4050, 0
        %v4095 = vsel %vm4090, %v4085, 0
        %4097 = vmatprep.subr.mxu0 %v4081
        %4098 = vmatpush1.msra.mxu0 %v4046
        %4099 = vmatprep.subr.mxu0 %v4082
        %4100 = vmatpush1.msra.mxu0 %v4047
        %4101 = vmatprep.subr.mxu0 %v4083
        %4102 = vmatpush1.msra.mxu0 %v4048
        %4103 = vmatprep.subr.mxu0 %v4084
        %4104 = vmatpush1.msra.mxu0 %v4049
        %4105 = vmatprep.subr.mxu0 %v4095
        %4106 = vmatpush1.msra.mxu0 %v4092
        %4107 = vmatprep.subr.mxu0 0.0
        %4108 = vmatpush1.msra.mxu0 0.0
        %4109 = vmatprep.subr.mxu0 0.0
        %4110 = vmatpush1.msra.mxu0 0.0
        %4111 = vmatprep.subr.mxu0 0.0
        %4112 = vmatpush1.msra.mxu0 0.0
        %4113 = vmatprep.subr.mxu0 0.0
        %4114 = vmatpush1.msra.mxu0 0.0
        %4115 = vmatprep.subr.mxu0 0.0
        %4116 = vmatpush1.msra.mxu0 0.0
        %4117 = vmatprep.subr.mxu0 0.0
        %4118 = vmatpush1.msra.mxu0 0.0
        %4119 = vmatprep.subr.mxu0 0.0
        %4120 = vmatpush1.msra.mxu0 0.0
        %4121 = vmatprep.subr.mxu0 0.0
        %4122 = vmatpush1.msra.mxu0 0.0
        %4123 = vmatprep.subr.mxu0 0.0
        %4124 = vmatpush1.msra.mxu0 0.0
        %4125 = vmatprep.subr.mxu0 0.0
        %4126 = vmatpush1.msra.mxu0 0.0
        %4127 = vmatprep.subr.mxu0 0.0
        %4128 = vmatpush1.msra.mxu0 0.0
        %4129 = vmatprep.subr.mxu0 0.0
        %4130 = vmatpush1.msra.mxu0 0.0
        %4131 = vmatprep.subr.mxu0 0.0
        %4132 = vmatpush1.msra.mxu0 0.0
        %4133 = vmatprep.subr.mxu0 0.0
        %4134 = vmatpush1.msra.mxu0 0.0
        %4135 = vmatprep.subr.mxu0 0.0
        %4136 = vmatpush1.msra.mxu0 0.0
        %4137 = vmatprep.subr.mxu0 0.0
        %4138 = vmatpush1.msra.mxu0 0.0
        %4139 = vmatprep.subr.mxu0 0.0
        %4140 = vmatpush1.msra.mxu0 0.0
        %4141 = vmatprep.subr.mxu0 0.0
        %4142 = vmatpush1.msra.mxu0 0.0
        %4143 = vmatprep.subr.mxu0 0.0
        %4144 = vmatpush1.msra.mxu0 0.0
        %4145 = vmatprep.subr.mxu0 0.0
        %4146 = vmatpush1.msra.mxu0 0.0
        %4147 = vmatprep.subr.mxu0 0.0
        %4148 = vmatpush1.msra.mxu0 0.0
        %4149 = vmatprep.subr.mxu0 0.0
        %4150 = vmatpush1.msra.mxu0 0.0
        %4151 = vmatprep.subr.mxu0 0.0
        %4152 = vmatpush1.msra.mxu0 0.0
        %4153 = vmatprep.subr.mxu0 0.0
        %4154 = vmatpush1.msra.mxu0 0.0
        %4155 = vmatprep.subr.mxu0 0.0
        %4156 = vmatpush1.msra.mxu0 0.0
        %4157 = vmatprep.subr.mxu0 0.0
        %4158 = vmatpush1.msra.mxu0 0.0
        %4159 = vmatprep.subr.mxu0 0.0
        %4160 = vmatpush1.msra.mxu0 0.0
        %4161 = vmatprep.mubr.f32.mxu0 0.0
        %4162 = vmatmul.mubr.f32.gmra.mrb[0].mxu0 %v4088
        %v4163 = vpop.f32.mrb[0].mxu0
        %v4164 = vadd.f32 0.0, %v4163
        %v4165 = vpop.f32.mrb[0].mxu0
        %v4166 = vadd.f32 0.0, %v4165
        %4167 = vdwg.mxu0
        %v4169 = vsel %vm4086, %v712, 0
        %v4172 = vsel %vm4090, %v2258, 0
        %v4175 = vsel %vm4090, %v2293, 0
        %4177 = vmatprep.subr.mxu0 %v2289
        %4178 = vmatpush1.msra.mxu0 %v2254
        %4179 = vmatprep.subr.mxu0 %v2290
        %4180 = vmatpush1.msra.mxu0 %v2255
        %4181 = vmatprep.subr.mxu0 %v2291
        %4182 = vmatpush1.msra.mxu0 %v2256
        %4183 = vmatprep.subr.mxu0 %v2292
        %4184 = vmatpush1.msra.mxu0 %v2257
        %4185 = vmatprep.subr.mxu0 %v4175
        %4186 = vmatpush1.msra.mxu0 %v4172
        %4187 = vmatprep.subr.mxu0 0.0
        %4188 = vmatpush1.msra.mxu0 0.0
        %4189 = vmatprep.subr.mxu0 0.0
        %4190 = vmatpush1.msra.mxu0 0.0
        %4191 = vmatprep.subr.mxu0 0.0
        %4192 = vmatpush1.msra.mxu0 0.0
        %4193 = vmatprep.subr.mxu0 0.0
        %4194 = vmatpush1.msra.mxu0 0.0
        %4195 = vmatprep.subr.mxu0 0.0
        %4196 = vmatpush1.msra.mxu0 0.0
        %4197 = vmatprep.subr.mxu0 0.0
        %4198 = vmatpush1.msra.mxu0 0.0
        %4199 = vmatprep.subr.mxu0 0.0
        %4200 = vmatpush1.msra.mxu0 0.0
        %4201 = vmatprep.subr.mxu0 0.0
        %4202 = vmatpush1.msra.mxu0 0.0
        %4203 = vmatprep.subr.mxu0 0.0
        %4204 = vmatpush1.msra.mxu0 0.0
        %4205 = vmatprep.subr.mxu0 0.0
        %4206 = vmatpush1.msra.mxu0 0.0
        %4207 = vmatprep.subr.mxu0 0.0
        %4208 = vmatpush1.msra.mxu0 0.0
        %4209 = vmatprep.subr.mxu0 0.0
        %4210 = vmatpush1.msra.mxu0 0.0
        %4211 = vmatprep.subr.mxu0 0.0
        %4212 = vmatpush1.msra.mxu0 0.0
        %4213 = vmatprep.subr.mxu0 0.0
        %4214 = vmatpush1.msra.mxu0 0.0
        %4215 = vmatprep.subr.mxu0 0.0
        %4216 = vmatpush1.msra.mxu0 0.0
        %4217 = vmatprep.subr.mxu0 0.0
        %4218 = vmatpush1.msra.mxu0 0.0
        %4219 = vmatprep.subr.mxu0 0.0
        %4220 = vmatpush1.msra.mxu0 0.0
        %4221 = vmatprep.subr.mxu0 0.0
        %4222 = vmatpush1.msra.mxu0 0.0
        %4223 = vmatprep.subr.mxu0 0.0
        %4224 = vmatpush1.msra.mxu0 0.0
        %4225 = vmatprep.subr.mxu0 0.0
        %4226 = vmatpush1.msra.mxu0 0.0
        %4227 = vmatprep.subr.mxu0 0.0
        %4228 = vmatpush1.msra.mxu0 0.0
        %4229 = vmatprep.subr.mxu0 0.0
        %4230 = vmatpush1.msra.mxu0 0.0
        %4231 = vmatprep.subr.mxu0 0.0
        %4232 = vmatpush1.msra.mxu0 0.0
        %4233 = vmatprep.subr.mxu0 0.0
        %4234 = vmatpush1.msra.mxu0 0.0
        %4235 = vmatprep.subr.mxu0 0.0
        %4236 = vmatpush1.msra.mxu0 0.0
        %4237 = vmatprep.subr.mxu0 0.0
        %4238 = vmatpush1.msra.mxu0 0.0
        %4239 = vmatprep.subr.mxu0 0.0
        %4240 = vmatpush1.msra.mxu0 0.0
        %4241 = vmatprep.mubr.f32.mxu0 0.0
        %4242 = vmatmul.mubr.f32.gmra.mrb[0].mxu0 %v4169
        %v4243 = vpop.f32.mrb[0].mxu0
        %v4244 = vadd.f32 %v4164, %v4243
        %v4245 = vpop.f32.mrb[0].mxu0
        %v4246 = vadd.f32 %v4166, %v4245
        %4247 = vdwg.mxu0
        %s4248 = scalar_lea.vmem [#allocation6], 16
        %v4249 = vld [vmem:[%s4248] sm:$0xff]
        %4250 = vrot.lane.b32.xlu0 %v470, 126
        %v4251 = vpop.permute.xlu0 %4250
        %4252 = vrot.lane.b32.xlu0 %v471, 126
        %v4253 = vpop.permute.xlu0 %4252
        %4254 = vrot.lane.b32.xlu0 %v473, 126
        %v4255 = vpop.permute.xlu0 %4254
        %4256 = vrot.lane.b32.xlu0 %v474, 126
        %v4257 = vpop.permute.xlu0 %4256
        %4258 = vrot.lane.b32.xlu0 %v476, 126
        %v4259 = vpop.permute.xlu0 %4258
        %4260 = vrot.lane.b32.xlu0 %v477, 126
        %v4261 = vpop.permute.xlu0 %4260
        %4262 = vrot.lane.b32.xlu0 %v479, 126
        %v4263 = vpop.permute.xlu0 %4262
        %4264 = vrot.lane.b32.xlu0 %v480, 126
        %v4265 = vpop.permute.xlu0 %4264
        %4266 = vrot.lane.b32.xlu0 %v482, 126
        %v4267 = vpop.permute.xlu0 %4266
        %4268 = vrot.lane.b32.xlu0 %v483, 126
        %v4269 = vpop.permute.xlu0 %4268
        %4270 = vrot.lane.b32.xlu0 %v485, 126
        %v4271 = vpop.permute.xlu0 %4270
        %4272 = vrot.lane.b32.xlu0 %v486, 126
        %v4273 = vpop.permute.xlu0 %4272
        %4274 = vrot.lane.b32.xlu0 %v488, 126
        %v4275 = vpop.permute.xlu0 %4274
        %4276 = vrot.lane.b32.xlu0 %v489, 126
        %v4277 = vpop.permute.xlu0 %4276
        %4278 = vrot.lane.b32.xlu0 %v491, 126
        %v4279 = vpop.permute.xlu0 %4278
        %4280 = vrot.lane.b32.xlu0 %v492, 126
        %v4281 = vpop.permute.xlu0 %4280
        %4282 = vrot.lane.b32.xlu0 %v494, 126
        %v4283 = vpop.permute.xlu0 %4282
        %4284 = vrot.lane.b32.xlu0 %v495, 126
        %v4285 = vpop.permute.xlu0 %4284
        %4286 = vrot.lane.b32.xlu0 %v497, 126
        %v4287 = vpop.permute.xlu0 %4286
        %4288 = vrot.lane.b32.xlu0 %v498, 126
        %v4289 = vpop.permute.xlu0 %4288
        %4290 = vrot.lane.b32.xlu0 %v500, 126
        %v4291 = vpop.permute.xlu0 %4290
        %4292 = vrot.lane.b32.xlu0 %v501, 126
        %v4293 = vpop.permute.xlu0 %4292
        %4294 = vrot.lane.b32.xlu0 %v503, 126
        %v4295 = vpop.permute.xlu0 %4294
        %4296 = vrot.lane.b32.xlu0 %v504, 126
        %v4297 = vpop.permute.xlu0 %4296
        %4298 = vrot.lane.b32.xlu0 %v545, 126
        %v4299 = vpop.permute.xlu0 %4298
        %4300 = vrot.lane.b32.xlu0 %v547, 126
        %v4301 = vpop.permute.xlu0 %4300
        %4302 = vrot.lane.b32.xlu0 %v550, 126
        %v4303 = vpop.permute.xlu0 %4302
        %4304 = vrot.lane.b32.xlu0 %v552, 126
        %v4305 = vpop.permute.xlu0 %4304
        %4306 = vrot.lane.b32.xlu0 %v555, 126
        %v4307 = vpop.permute.xlu0 %4306
        %4308 = vrot.lane.b32.xlu0 %v557, 126
        %v4309 = vpop.permute.xlu0 %4308
        %4310 = vrot.lane.b32.xlu0 %v560, 126
        %v4311 = vpop.permute.xlu0 %4310
        %4312 = vrot.lane.b32.xlu0 %v562, 126
        %v4313 = vpop.permute.xlu0 %4312
        %4314 = vrot.lane.b32.xlu0 %v565, 126
        %v4315 = vpop.permute.xlu0 %4314
        %4316 = vrot.lane.b32.xlu0 %v567, 126
        %v4317 = vpop.permute.xlu0 %4316
        %4318 = vrot.lane.b32.xlu0 %v570, 126
        %v4319 = vpop.permute.xlu0 %4318
        %4320 = vrot.lane.b32.xlu0 %v572, 126
        %v4321 = vpop.permute.xlu0 %4320
        %4322 = vrot.lane.b32.xlu0 %v575, 126
        %v4323 = vpop.permute.xlu0 %4322
        %4324 = vrot.lane.b32.xlu0 %v577, 126
        %v4325 = vpop.permute.xlu0 %4324
        %4326 = vrot.lane.b32.xlu0 %v580, 126
        %v4327 = vpop.permute.xlu0 %4326
        %4328 = vrot.lane.b32.xlu0 %v582, 126
        %v4329 = vpop.permute.xlu0 %4328
        %4330 = vrot.lane.b32.xlu0 %v585, 126
        %v4331 = vpop.permute.xlu0 %4330
        %4332 = vrot.lane.b32.xlu0 %v587, 126
        %v4333 = vpop.permute.xlu0 %4332
        %4334 = vrot.lane.b32.xlu0 %v590, 126
        %v4335 = vpop.permute.xlu0 %4334
        %4336 = vrot.lane.b32.xlu0 %v592, 126
        %v4337 = vpop.permute.xlu0 %4336
        %4338 = vrot.lane.b32.xlu0 %v595, 126
        %v4339 = vpop.permute.xlu0 %4338
        %4340 = vrot.lane.b32.xlu0 %v597, 126
        %v4341 = vpop.permute.xlu0 %4340
        %4342 = vrot.lane.b32.xlu0 %v600, 126
        %v4343 = vpop.permute.xlu0 %4342
        %4344 = vrot.lane.b32.xlu0 %v602, 126
        %v4345 = vpop.permute.xlu0 %4344
        %4346 = vrot.lane.b32.xlu0 %v630, 126
        %v4347 = vpop.permute.xlu0 %4346
        %4348 = vrot.lane.b32.xlu0 %v632, 126
        %v4349 = vpop.permute.xlu0 %4348
        %4350 = vrot.lane.b32.xlu0 %v635, 126
        %v4351 = vpop.permute.xlu0 %4350
        %4352 = vrot.lane.b32.xlu0 %v637, 126
        %v4353 = vpop.permute.xlu0 %4352
        %4354 = vrot.lane.b32.xlu0 %v640, 126
        %v4355 = vpop.permute.xlu0 %4354
        %4356 = vrot.lane.b32.xlu0 %v642, 126
        %v4357 = vpop.permute.xlu0 %4356
        %4358 = vrot.lane.b32.xlu0 %v645, 126
        %v4359 = vpop.permute.xlu0 %4358
        %4360 = vrot.lane.b32.xlu0 %v647, 126
        %v4361 = vpop.permute.xlu0 %4360
        %4362 = vrot.lane.b32.xlu0 %v650, 126
        %v4363 = vpop.permute.xlu0 %4362
        %4364 = vrot.lane.b32.xlu0 %v652, 126
        %v4365 = vpop.permute.xlu0 %4364
        %4366 = vrot.lane.b32.xlu0 %v655, 126
        %v4367 = vpop.permute.xlu0 %4366
        %4368 = vrot.lane.b32.xlu0 %v657, 126
        %v4369 = vpop.permute.xlu0 %4368
        %4370 = vrot.lane.b32.xlu0 %v660, 126
        %v4371 = vpop.permute.xlu0 %4370
        %4372 = vrot.lane.b32.xlu0 %v662, 126
        %v4373 = vpop.permute.xlu0 %4372
        %4374 = vrot.lane.b32.xlu0 %v665, 126
        %v4375 = vpop.permute.xlu0 %4374
        %4376 = vrot.lane.b32.xlu0 %v667, 126
        %v4377 = vpop.permute.xlu0 %4376
        %4378 = vrot.lane.b32.xlu0 %v670, 126
        %v4379 = vpop.permute.xlu0 %4378
        %4380 = vrot.lane.b32.xlu0 %v672, 126
        %v4381 = vpop.permute.xlu0 %4380
        %4382 = vrot.lane.b32.xlu0 %v675, 126
        %v4383 = vpop.permute.xlu0 %4382
        %4384 = vrot.lane.b32.xlu0 %v677, 126
        %v4385 = vpop.permute.xlu0 %4384
        %4386 = vrot.lane.b32.xlu0 %v680, 126
        %v4387 = vpop.permute.xlu0 %4386
        %4388 = vrot.lane.b32.xlu0 %v682, 126
        %v4389 = vpop.permute.xlu0 %4388
        %4390 = vrot.lane.b32.xlu0 %v685, 126
        %v4391 = vpop.permute.xlu0 %4390
        %4392 = vrot.lane.b32.xlu0 %v687, 126
        %v4393 = vpop.permute.xlu0 %4392
        %v4466 = vcombine.low %v4251, %v4259
        %v4467 = vcombine.high %v4251, %v4259
        %v4469 = vunpack.c.l.s4 1983009808
        %v4470 = vunpack.c.0.s8 %v4469
        %v4471 = vlaneseq
        %v4472 = vshrl.u32 %v4471, 7
        %v4473 = vsub.s32 %v4470, %v4472
        %v4474 = vrot.slane %v4466, %v4473
        %v4476 = vunpack.c.l.s4 1983009808
        %v4477 = vunpack.c.0.s8 %v4476
        %v4478 = vlaneseq
        %v4479 = vshrl.u32 %v4478, 7
        %v4480 = vsub.s32 %v4477, %v4479
        %v4481 = vrot.slane %v4467, %v4480
        %v4482 = vcombine.low %v4255, %v4263
        %v4483 = vcombine.high %v4255, %v4263
        %v4485 = vunpack.c.l.s4 1983009808
        %v4486 = vunpack.c.0.s8 %v4485
        %v4487 = vlaneseq
        %v4488 = vshrl.u32 %v4487, 7
        %v4489 = vsub.s32 %v4486, %v4488
        %v4490 = vrot.slane %v4482, %v4489
        %v4492 = vunpack.c.l.s4 1983009808
        %v4493 = vunpack.c.0.s8 %v4492
        %v4494 = vlaneseq
        %v4495 = vshrl.u32 %v4494, 7
        %v4496 = vsub.s32 %v4493, %v4495
        %v4497 = vrot.slane %v4483, %v4496
        %v4498 = vcombine.low %v4267, %v4275
        %v4499 = vcombine.high %v4267, %v4275
        %v4501 = vunpack.c.l.s4 1983009808
        %v4502 = vunpack.c.0.s8 %v4501
        %v4503 = vlaneseq
        %v4504 = vshrl.u32 %v4503, 7
        %v4505 = vsub.s32 %v4502, %v4504
        %v4506 = vrot.slane %v4498, %v4505
        %v4508 = vunpack.c.l.s4 1983009808
        %v4509 = vunpack.c.0.s8 %v4508
        %v4510 = vlaneseq
        %v4511 = vshrl.u32 %v4510, 7
        %v4512 = vsub.s32 %v4509, %v4511
        %v4513 = vrot.slane %v4499, %v4512
        %v4514 = vcombine.low %v4271, %v4279
        %v4515 = vcombine.high %v4271, %v4279
        %v4517 = vunpack.c.l.s4 1983009808
        %v4518 = vunpack.c.0.s8 %v4517
        %v4519 = vlaneseq
        %v4520 = vshrl.u32 %v4519, 7
        %v4521 = vsub.s32 %v4518, %v4520
        %v4522 = vrot.slane %v4514, %v4521
        %v4524 = vunpack.c.l.s4 1983009808
        %v4525 = vunpack.c.0.s8 %v4524
        %v4526 = vlaneseq
        %v4527 = vshrl.u32 %v4526, 7
        %v4528 = vsub.s32 %v4525, %v4527
        %v4529 = vrot.slane %v4515, %v4528
        %v4530 = vcombine.low %v4474, %v4490
        %v4531 = vcombine.high %v4474, %v4490
        %v4533 = vunpack.c.l.s4 1934713408
        %v4534 = vunpack.c.0.s8 %v4533
        %v4535 = vlaneseq
        %v4536 = vshrl.u32 %v4535, 7
        %v4537 = vsub.s32 %v4534, %v4536
        %v4538 = vrot.slane %v4530, %v4537
        %v4540 = vunpack.c.l.s4 1934713408
        %v4541 = vunpack.c.0.s8 %v4540
        %v4542 = vlaneseq
        %v4543 = vshrl.u32 %v4542, 7
        %v4544 = vsub.s32 %v4541, %v4543
        %v4545 = vrot.slane %v4531, %v4544
        %v4546 = vcombine.low %v4481, %v4497
        %v4547 = vcombine.high %v4481, %v4497
        %v4549 = vunpack.c.l.s4 1934713408
        %v4550 = vunpack.c.0.s8 %v4549
        %v4551 = vlaneseq
        %v4552 = vshrl.u32 %v4551, 7
        %v4553 = vsub.s32 %v4550, %v4552
        %v4554 = vrot.slane %v4546, %v4553
        %v4556 = vunpack.c.l.s4 1934713408
        %v4557 = vunpack.c.0.s8 %v4556
        %v4558 = vlaneseq
        %v4559 = vshrl.u32 %v4558, 7
        %v4560 = vsub.s32 %v4557, %v4559
        %v4561 = vrot.slane %v4547, %v4560
        %v4562 = vcombine.low %v4506, %v4522
        %v4563 = vcombine.high %v4506, %v4522
        %v4565 = vunpack.c.l.s4 1934713408
        %v4566 = vunpack.c.0.s8 %v4565
        %v4567 = vlaneseq
        %v4568 = vshrl.u32 %v4567, 7
        %v4569 = vsub.s32 %v4566, %v4568
        %v4570 = vrot.slane %v4562, %v4569
        %v4572 = vunpack.c.l.s4 1934713408
        %v4573 = vunpack.c.0.s8 %v4572
        %v4574 = vlaneseq
        %v4575 = vshrl.u32 %v4574, 7
        %v4576 = vsub.s32 %v4573, %v4575
        %v4577 = vrot.slane %v4563, %v4576
        %v4578 = vcombine.low %v4513, %v4529
        %v4579 = vcombine.high %v4513, %v4529
        %v4581 = vunpack.c.l.s4 1934713408
        %v4582 = vunpack.c.0.s8 %v4581
        %v4583 = vlaneseq
        %v4584 = vshrl.u32 %v4583, 7
        %v4585 = vsub.s32 %v4582, %v4584
        %v4586 = vrot.slane %v4578, %v4585
        %v4588 = vunpack.c.l.s4 1934713408
        %v4589 = vunpack.c.0.s8 %v4588
        %v4590 = vlaneseq
        %v4591 = vshrl.u32 %v4590, 7
        %v4592 = vsub.s32 %v4589, %v4591
        %v4593 = vrot.slane %v4579, %v4592
        %v4594 = vcombine.low %v4538, %v4570
        %v4595 = vcombine.high %v4538, %v4570
        %v4596 = vcombine.low %v4545, %v4577
        %v4597 = vcombine.high %v4545, %v4577
        %v4598 = vcombine.low %v4554, %v4586
        %v4599 = vcombine.high %v4554, %v4586
        %v4600 = vcombine.low %v4561, %v4593
        %v4601 = vcombine.high %v4561, %v4593
        %v4602 = vcombine.low %v4283, %v4291
        %v4603 = vcombine.high %v4283, %v4291
        %v4605 = vunpack.c.l.s4 1983009808
        %v4606 = vunpack.c.0.s8 %v4605
        %v4607 = vlaneseq
        %v4608 = vshrl.u32 %v4607, 7
        %v4609 = vsub.s32 %v4606, %v4608
        %v4610 = vrot.slane %v4602, %v4609
        %v4612 = vunpack.c.l.s4 1983009808
        %v4613 = vunpack.c.0.s8 %v4612
        %v4614 = vlaneseq
        %v4615 = vshrl.u32 %v4614, 7
        %v4616 = vsub.s32 %v4613, %v4615
        %v4617 = vrot.slane %v4603, %v4616
        %v4618 = vcombine.low %v4287, %v4295
        %v4619 = vcombine.high %v4287, %v4295
        %v4621 = vunpack.c.l.s4 1983009808
        %v4622 = vunpack.c.0.s8 %v4621
        %v4623 = vlaneseq
        %v4624 = vshrl.u32 %v4623, 7
        %v4625 = vsub.s32 %v4622, %v4624
        %v4626 = vrot.slane %v4618, %v4625
        %v4628 = vunpack.c.l.s4 1983009808
        %v4629 = vunpack.c.0.s8 %v4628
        %v4630 = vlaneseq
        %v4631 = vshrl.u32 %v4630, 7
        %v4632 = vsub.s32 %v4629, %v4631
        %v4633 = vrot.slane %v4619, %v4632
        %v4634 = vcombine.low %v4299, %v4307
        %v4635 = vcombine.high %v4299, %v4307
        %v4637 = vunpack.c.l.s4 1983009808
        %v4638 = vunpack.c.0.s8 %v4637
        %v4639 = vlaneseq
        %v4640 = vshrl.u32 %v4639, 7
        %v4641 = vsub.s32 %v4638, %v4640
        %v4642 = vrot.slane %v4634, %v4641
        %v4644 = vunpack.c.l.s4 1983009808
        %v4645 = vunpack.c.0.s8 %v4644
        %v4646 = vlaneseq
        %v4647 = vshrl.u32 %v4646, 7
        %v4648 = vsub.s32 %v4645, %v4647
        %v4649 = vrot.slane %v4635, %v4648
        %v4650 = vcombine.low %v4303, %v4311
        %v4651 = vcombine.high %v4303, %v4311
        %v4653 = vunpack.c.l.s4 1983009808
        %v4654 = vunpack.c.0.s8 %v4653
        %v4655 = vlaneseq
        %v4656 = vshrl.u32 %v4655, 7
        %v4657 = vsub.s32 %v4654, %v4656
        %v4658 = vrot.slane %v4650, %v4657
        %v4660 = vunpack.c.l.s4 1983009808
        %v4661 = vunpack.c.0.s8 %v4660
        %v4662 = vlaneseq
        %v4663 = vshrl.u32 %v4662, 7
        %v4664 = vsub.s32 %v4661, %v4663
        %v4665 = vrot.slane %v4651, %v4664
        %v4666 = vcombine.low %v4610, %v4626
        %v4667 = vcombine.high %v4610, %v4626
        %v4669 = vunpack.c.l.s4 1934713408
        %v4670 = vunpack.c.0.s8 %v4669
        %v4671 = vlaneseq
        %v4672 = vshrl.u32 %v4671, 7
        %v4673 = vsub.s32 %v4670, %v4672
        %v4674 = vrot.slane %v4666, %v4673
        %v4676 = vunpack.c.l.s4 1934713408
        %v4677 = vunpack.c.0.s8 %v4676
        %v4678 = vlaneseq
        %v4679 = vshrl.u32 %v4678, 7
        %v4680 = vsub.s32 %v4677, %v4679
        %v4681 = vrot.slane %v4667, %v4680
        %v4682 = vcombine.low %v4617, %v4633
        %v4683 = vcombine.high %v4617, %v4633
        %v4685 = vunpack.c.l.s4 1934713408
        %v4686 = vunpack.c.0.s8 %v4685
        %v4687 = vlaneseq
        %v4688 = vshrl.u32 %v4687, 7
        %v4689 = vsub.s32 %v4686, %v4688
        %v4690 = vrot.slane %v4682, %v4689
        %v4692 = vunpack.c.l.s4 1934713408
        %v4693 = vunpack.c.0.s8 %v4692
        %v4694 = vlaneseq
        %v4695 = vshrl.u32 %v4694, 7
        %v4696 = vsub.s32 %v4693, %v4695
        %v4697 = vrot.slane %v4683, %v4696
        %v4698 = vcombine.low %v4642, %v4658
        %v4699 = vcombine.high %v4642, %v4658
        %v4701 = vunpack.c.l.s4 1934713408
        %v4702 = vunpack.c.0.s8 %v4701
        %v4703 = vlaneseq
        %v4704 = vshrl.u32 %v4703, 7
        %v4705 = vsub.s32 %v4702, %v4704
        %v4706 = vrot.slane %v4698, %v4705
        %v4708 = vunpack.c.l.s4 1934713408
        %v4709 = vunpack.c.0.s8 %v4708
        %v4710 = vlaneseq
        %v4711 = vshrl.u32 %v4710, 7
        %v4712 = vsub.s32 %v4709, %v4711
        %v4713 = vrot.slane %v4699, %v4712
        %v4714 = vcombine.low %v4649, %v4665
        %v4715 = vcombine.high %v4649, %v4665
        %v4717 = vunpack.c.l.s4 1934713408
        %v4718 = vunpack.c.0.s8 %v4717
        %v4719 = vlaneseq
        %v4720 = vshrl.u32 %v4719, 7
        %v4721 = vsub.s32 %v4718, %v4720
        %v4722 = vrot.slane %v4714, %v4721
        %v4724 = vunpack.c.l.s4 1934713408
        %v4725 = vunpack.c.0.s8 %v4724
        %v4726 = vlaneseq
        %v4727 = vshrl.u32 %v4726, 7
        %v4728 = vsub.s32 %v4725, %v4727
        %v4729 = vrot.slane %v4715, %v4728
        %v4730 = vcombine.low %v4674, %v4706
        %v4731 = vcombine.high %v4674, %v4706
        %v4732 = vcombine.low %v4681, %v4713
        %v4733 = vcombine.high %v4681, %v4713
        %v4734 = vcombine.low %v4690, %v4722
        %v4735 = vcombine.high %v4690, %v4722
        %v4736 = vcombine.low %v4697, %v4729
        %v4737 = vcombine.high %v4697, %v4729
        %v4738 = vcombine.low %v4315, %v4323
        %v4739 = vcombine.high %v4315, %v4323
        %v4741 = vunpack.c.l.s4 1983009808
        %v4742 = vunpack.c.0.s8 %v4741
        %v4743 = vlaneseq
        %v4744 = vshrl.u32 %v4743, 7
        %v4745 = vsub.s32 %v4742, %v4744
        %v4746 = vrot.slane %v4738, %v4745
        %v4748 = vunpack.c.l.s4 1983009808
        %v4749 = vunpack.c.0.s8 %v4748
        %v4750 = vlaneseq
        %v4751 = vshrl.u32 %v4750, 7
        %v4752 = vsub.s32 %v4749, %v4751
        %v4753 = vrot.slane %v4739, %v4752
        %v4754 = vcombine.low %v4319, %v4327
        %v4755 = vcombine.high %v4319, %v4327
        %v4757 = vunpack.c.l.s4 1983009808
        %v4758 = vunpack.c.0.s8 %v4757
        %v4759 = vlaneseq
        %v4760 = vshrl.u32 %v4759, 7
        %v4761 = vsub.s32 %v4758, %v4760
        %v4762 = vrot.slane %v4754, %v4761
        %v4764 = vunpack.c.l.s4 1983009808
        %v4765 = vunpack.c.0.s8 %v4764
        %v4766 = vlaneseq
        %v4767 = vshrl.u32 %v4766, 7
        %v4768 = vsub.s32 %v4765, %v4767
        %v4769 = vrot.slane %v4755, %v4768
        %v4770 = vcombine.low %v4331, %v4339
        %v4771 = vcombine.high %v4331, %v4339
        %v4773 = vunpack.c.l.s4 1983009808
        %v4774 = vunpack.c.0.s8 %v4773
        %v4775 = vlaneseq
        %v4776 = vshrl.u32 %v4775, 7
        %v4777 = vsub.s32 %v4774, %v4776
        %v4778 = vrot.slane %v4770, %v4777
        %v4780 = vunpack.c.l.s4 1983009808
        %v4781 = vunpack.c.0.s8 %v4780
        %v4782 = vlaneseq
        %v4783 = vshrl.u32 %v4782, 7
        %v4784 = vsub.s32 %v4781, %v4783
        %v4785 = vrot.slane %v4771, %v4784
        %v4786 = vcombine.low %v4335, %v4343
        %v4787 = vcombine.high %v4335, %v4343
        %v4789 = vunpack.c.l.s4 1983009808
        %v4790 = vunpack.c.0.s8 %v4789
        %v4791 = vlaneseq
        %v4792 = vshrl.u32 %v4791, 7
        %v4793 = vsub.s32 %v4790, %v4792
        %v4794 = vrot.slane %v4786, %v4793
        %v4796 = vunpack.c.l.s4 1983009808
        %v4797 = vunpack.c.0.s8 %v4796
        %v4798 = vlaneseq
        %v4799 = vshrl.u32 %v4798, 7
        %v4800 = vsub.s32 %v4797, %v4799
        %v4801 = vrot.slane %v4787, %v4800
        %v4802 = vcombine.low %v4746, %v4762
        %v4803 = vcombine.high %v4746, %v4762
        %v4805 = vunpack.c.l.s4 1934713408
        %v4806 = vunpack.c.0.s8 %v4805
        %v4807 = vlaneseq
        %v4808 = vshrl.u32 %v4807, 7
        %v4809 = vsub.s32 %v4806, %v4808
        %v4810 = vrot.slane %v4802, %v4809
        %v4812 = vunpack.c.l.s4 1934713408
        %v4813 = vunpack.c.0.s8 %v4812
        %v4814 = vlaneseq
        %v4815 = vshrl.u32 %v4814, 7
        %v4816 = vsub.s32 %v4813, %v4815
        %v4817 = vrot.slane %v4803, %v4816
        %v4818 = vcombine.low %v4753, %v4769
        %v4819 = vcombine.high %v4753, %v4769
        %v4821 = vunpack.c.l.s4 1934713408
        %v4822 = vunpack.c.0.s8 %v4821
        %v4823 = vlaneseq
        %v4824 = vshrl.u32 %v4823, 7
        %v4825 = vsub.s32 %v4822, %v4824
        %v4826 = vrot.slane %v4818, %v4825
        %v4828 = vunpack.c.l.s4 1934713408
        %v4829 = vunpack.c.0.s8 %v4828
        %v4830 = vlaneseq
        %v4831 = vshrl.u32 %v4830, 7
        %v4832 = vsub.s32 %v4829, %v4831
        %v4833 = vrot.slane %v4819, %v4832
        %v4834 = vcombine.low %v4778, %v4794
        %v4835 = vcombine.high %v4778, %v4794
        %v4837 = vunpack.c.l.s4 1934713408
        %v4838 = vunpack.c.0.s8 %v4837
        %v4839 = vlaneseq
        %v4840 = vshrl.u32 %v4839, 7
        %v4841 = vsub.s32 %v4838, %v4840
        %v4842 = vrot.slane %v4834, %v4841
        %v4844 = vunpack.c.l.s4 1934713408
        %v4845 = vunpack.c.0.s8 %v4844
        %v4846 = vlaneseq
        %v4847 = vshrl.u32 %v4846, 7
        %v4848 = vsub.s32 %v4845, %v4847
        %v4849 = vrot.slane %v4835, %v4848
        %v4850 = vcombine.low %v4785, %v4801
        %v4851 = vcombine.high %v4785, %v4801
        %v4853 = vunpack.c.l.s4 1934713408
        %v4854 = vunpack.c.0.s8 %v4853
        %v4855 = vlaneseq
        %v4856 = vshrl.u32 %v4855, 7
        %v4857 = vsub.s32 %v4854, %v4856
        %v4858 = vrot.slane %v4850, %v4857
        %v4860 = vunpack.c.l.s4 1934713408
        %v4861 = vunpack.c.0.s8 %v4860
        %v4862 = vlaneseq
        %v4863 = vshrl.u32 %v4862, 7
        %v4864 = vsub.s32 %v4861, %v4863
        %v4865 = vrot.slane %v4851, %v4864
        %v4866 = vcombine.low %v4810, %v4842
        %v4867 = vcombine.high %v4810, %v4842
        %v4868 = vcombine.low %v4817, %v4849
        %v4869 = vcombine.high %v4817, %v4849
        %v4870 = vcombine.low %v4826, %v4858
        %v4871 = vcombine.high %v4826, %v4858
        %v4872 = vcombine.low %v4833, %v4865
        %v4873 = vcombine.high %v4833, %v4865
        %v4874 = vcombine.low %v4347, %v4355
        %v4875 = vcombine.high %v4347, %v4355
        %v4877 = vunpack.c.l.s4 1983009808
        %v4878 = vunpack.c.0.s8 %v4877
        %v4879 = vlaneseq
        %v4880 = vshrl.u32 %v4879, 7
        %v4881 = vsub.s32 %v4878, %v4880
        %v4882 = vrot.slane %v4874, %v4881
        %v4884 = vunpack.c.l.s4 1983009808
        %v4885 = vunpack.c.0.s8 %v4884
        %v4886 = vlaneseq
        %v4887 = vshrl.u32 %v4886, 7
        %v4888 = vsub.s32 %v4885, %v4887
        %v4889 = vrot.slane %v4875, %v4888
        %v4890 = vcombine.low %v4351, %v4359
        %v4891 = vcombine.high %v4351, %v4359
        %v4893 = vunpack.c.l.s4 1983009808
        %v4894 = vunpack.c.0.s8 %v4893
        %v4895 = vlaneseq
        %v4896 = vshrl.u32 %v4895, 7
        %v4897 = vsub.s32 %v4894, %v4896
        %v4898 = vrot.slane %v4890, %v4897
        %v4900 = vunpack.c.l.s4 1983009808
        %v4901 = vunpack.c.0.s8 %v4900
        %v4902 = vlaneseq
        %v4903 = vshrl.u32 %v4902, 7
        %v4904 = vsub.s32 %v4901, %v4903
        %v4905 = vrot.slane %v4891, %v4904
        %v4906 = vcombine.low %v4363, %v4371
        %v4907 = vcombine.high %v4363, %v4371
        %v4909 = vunpack.c.l.s4 1983009808
        %v4910 = vunpack.c.0.s8 %v4909
        %v4911 = vlaneseq
        %v4912 = vshrl.u32 %v4911, 7
        %v4913 = vsub.s32 %v4910, %v4912
        %v4914 = vrot.slane %v4906, %v4913
        %v4916 = vunpack.c.l.s4 1983009808
        %v4917 = vunpack.c.0.s8 %v4916
        %v4918 = vlaneseq
        %v4919 = vshrl.u32 %v4918, 7
        %v4920 = vsub.s32 %v4917, %v4919
        %v4921 = vrot.slane %v4907, %v4920
        %v4922 = vcombine.low %v4367, %v4375
        %v4923 = vcombine.high %v4367, %v4375
        %v4925 = vunpack.c.l.s4 1983009808
        %v4926 = vunpack.c.0.s8 %v4925
        %v4927 = vlaneseq
        %v4928 = vshrl.u32 %v4927, 7
        %v4929 = vsub.s32 %v4926, %v4928
        %v4930 = vrot.slane %v4922, %v4929
        %v4932 = vunpack.c.l.s4 1983009808
        %v4933 = vunpack.c.0.s8 %v4932
        %v4934 = vlaneseq
        %v4935 = vshrl.u32 %v4934, 7
        %v4936 = vsub.s32 %v4933, %v4935
        %v4937 = vrot.slane %v4923, %v4936
        %v4938 = vcombine.low %v4882, %v4898
        %v4939 = vcombine.high %v4882, %v4898
        %v4941 = vunpack.c.l.s4 1934713408
        %v4942 = vunpack.c.0.s8 %v4941
        %v4943 = vlaneseq
        %v4944 = vshrl.u32 %v4943, 7
        %v4945 = vsub.s32 %v4942, %v4944
        %v4946 = vrot.slane %v4938, %v4945
        %v4948 = vunpack.c.l.s4 1934713408
        %v4949 = vunpack.c.0.s8 %v4948
        %v4950 = vlaneseq
        %v4951 = vshrl.u32 %v4950, 7
        %v4952 = vsub.s32 %v4949, %v4951
        %v4953 = vrot.slane %v4939, %v4952
        %v4954 = vcombine.low %v4889, %v4905
        %v4955 = vcombine.high %v4889, %v4905
        %v4957 = vunpack.c.l.s4 1934713408
        %v4958 = vunpack.c.0.s8 %v4957
        %v4959 = vlaneseq
        %v4960 = vshrl.u32 %v4959, 7
        %v4961 = vsub.s32 %v4958, %v4960
        %v4962 = vrot.slane %v4954, %v4961
        %v4964 = vunpack.c.l.s4 1934713408
        %v4965 = vunpack.c.0.s8 %v4964
        %v4966 = vlaneseq
        %v4967 = vshrl.u32 %v4966, 7
        %v4968 = vsub.s32 %v4965, %v4967
        %v4969 = vrot.slane %v4955, %v4968
        %v4970 = vcombine.low %v4914, %v4930
        %v4971 = vcombine.high %v4914, %v4930
        %v4973 = vunpack.c.l.s4 1934713408
        %v4974 = vunpack.c.0.s8 %v4973
        %v4975 = vlaneseq
        %v4976 = vshrl.u32 %v4975, 7
        %v4977 = vsub.s32 %v4974, %v4976
        %v4978 = vrot.slane %v4970, %v4977
        %v4980 = vunpack.c.l.s4 1934713408
        %v4981 = vunpack.c.0.s8 %v4980
        %v4982 = vlaneseq
        %v4983 = vshrl.u32 %v4982, 7
        %v4984 = vsub.s32 %v4981, %v4983
        %v4985 = vrot.slane %v4971, %v4984
        %v4986 = vcombine.low %v4921, %v4937
        %v4987 = vcombine.high %v4921, %v4937
        %v4989 = vunpack.c.l.s4 1934713408
        %v4990 = vunpack.c.0.s8 %v4989
        %v4991 = vlaneseq
        %v4992 = vshrl.u32 %v4991, 7
        %v4993 = vsub.s32 %v4990, %v4992
        %v4994 = vrot.slane %v4986, %v4993
        %v4996 = vunpack.c.l.s4 1934713408
        %v4997 = vunpack.c.0.s8 %v4996
        %v4998 = vlaneseq
        %v4999 = vshrl.u32 %v4998, 7
        %v5000 = vsub.s32 %v4997, %v4999
        %v5001 = vrot.slane %v4987, %v5000
        %v5002 = vcombine.low %v4946, %v4978
        %v5003 = vcombine.high %v4946, %v4978
        %v5004 = vcombine.low %v4953, %v4985
        %v5005 = vcombine.high %v4953, %v4985
        %v5006 = vcombine.low %v4962, %v4994
        %v5007 = vcombine.high %v4962, %v4994
        %v5008 = vcombine.low %v4969, %v5001
        %v5009 = vcombine.high %v4969, %v5001
        %v5010 = vcombine.low %v4379, %v4387
        %v5011 = vcombine.high %v4379, %v4387
        %v5013 = vunpack.c.l.s4 1983009808
        %v5014 = vunpack.c.0.s8 %v5013
        %v5015 = vlaneseq
        %v5016 = vshrl.u32 %v5015, 7
        %v5017 = vsub.s32 %v5014, %v5016
        %v5018 = vrot.slane %v5010, %v5017
        %v5020 = vunpack.c.l.s4 1983009808
        %v5021 = vunpack.c.0.s8 %v5020
        %v5022 = vlaneseq
        %v5023 = vshrl.u32 %v5022, 7
        %v5024 = vsub.s32 %v5021, %v5023
        %v5025 = vrot.slane %v5011, %v5024
        %v5026 = vcombine.low %v4383, %v4391
        %v5027 = vcombine.high %v4383, %v4391
        %v5029 = vunpack.c.l.s4 1983009808
        %v5030 = vunpack.c.0.s8 %v5029
        %v5031 = vlaneseq
        %v5032 = vshrl.u32 %v5031, 7
        %v5033 = vsub.s32 %v5030, %v5032
        %v5034 = vrot.slane %v5026, %v5033
        %v5036 = vunpack.c.l.s4 1983009808
        %v5037 = vunpack.c.0.s8 %v5036
        %v5038 = vlaneseq
        %v5039 = vshrl.u32 %v5038, 7
        %v5040 = vsub.s32 %v5037, %v5039
        %v5041 = vrot.slane %v5027, %v5040
        %v5042 = vcombine.low %v5018, %v5034
        %v5043 = vcombine.high %v5018, %v5034
        %v5045 = vunpack.c.l.s4 1934713408
        %v5046 = vunpack.c.0.s8 %v5045
        %v5047 = vlaneseq
        %v5048 = vshrl.u32 %v5047, 7
        %v5049 = vsub.s32 %v5046, %v5048
        %v5050 = vrot.slane %v5042, %v5049
        %v5052 = vunpack.c.l.s4 1934713408
        %v5053 = vunpack.c.0.s8 %v5052
        %v5054 = vlaneseq
        %v5055 = vshrl.u32 %v5054, 7
        %v5056 = vsub.s32 %v5053, %v5055
        %v5057 = vrot.slane %v5043, %v5056
        %v5058 = vcombine.low %v5025, %v5041
        %v5059 = vcombine.high %v5025, %v5041
        %v5061 = vunpack.c.l.s4 1934713408
        %v5062 = vunpack.c.0.s8 %v5061
        %v5063 = vlaneseq
        %v5064 = vshrl.u32 %v5063, 7
        %v5065 = vsub.s32 %v5062, %v5064
        %v5066 = vrot.slane %v5058, %v5065
        %v5068 = vunpack.c.l.s4 1934713408
        %v5069 = vunpack.c.0.s8 %v5068
        %v5070 = vlaneseq
        %v5071 = vshrl.u32 %v5070, 7
        %v5072 = vsub.s32 %v5069, %v5071
        %v5073 = vrot.slane %v5059, %v5072
        %v5074 = vcombine.high %v5050, 0.0
        %v5075 = vcombine.high %v5057, 0.0
        %v5076 = vcombine.high %v5066, 0.0
        %v5077 = vcombine.high %v5073, 0.0
        %v5078 = vcombine.low %v4253, %v4261
        %v5079 = vcombine.high %v4253, %v4261
        %v5081 = vunpack.c.l.s4 1983009808
        %v5082 = vunpack.c.0.s8 %v5081
        %v5083 = vlaneseq
        %v5084 = vshrl.u32 %v5083, 7
        %v5085 = vsub.s32 %v5082, %v5084
        %v5086 = vrot.slane %v5078, %v5085
        %v5088 = vunpack.c.l.s4 1983009808
        %v5089 = vunpack.c.0.s8 %v5088
        %v5090 = vlaneseq
        %v5091 = vshrl.u32 %v5090, 7
        %v5092 = vsub.s32 %v5089, %v5091
        %v5093 = vrot.slane %v5079, %v5092
        %v5094 = vcombine.low %v4257, %v4265
        %v5095 = vcombine.high %v4257, %v4265
        %v5097 = vunpack.c.l.s4 1983009808
        %v5098 = vunpack.c.0.s8 %v5097
        %v5099 = vlaneseq
        %v5100 = vshrl.u32 %v5099, 7
        %v5101 = vsub.s32 %v5098, %v5100
        %v5102 = vrot.slane %v5094, %v5101
        %v5104 = vunpack.c.l.s4 1983009808
        %v5105 = vunpack.c.0.s8 %v5104
        %v5106 = vlaneseq
        %v5107 = vshrl.u32 %v5106, 7
        %v5108 = vsub.s32 %v5105, %v5107
        %v5109 = vrot.slane %v5095, %v5108
        %v5110 = vcombine.low %v4269, %v4277
        %v5111 = vcombine.high %v4269, %v4277
        %v5113 = vunpack.c.l.s4 1983009808
        %v5114 = vunpack.c.0.s8 %v5113
        %v5115 = vlaneseq
        %v5116 = vshrl.u32 %v5115, 7
        %v5117 = vsub.s32 %v5114, %v5116
        %v5118 = vrot.slane %v5110, %v5117
        %v5120 = vunpack.c.l.s4 1983009808
        %v5121 = vunpack.c.0.s8 %v5120
        %v5122 = vlaneseq
        %v5123 = vshrl.u32 %v5122, 7
        %v5124 = vsub.s32 %v5121, %v5123
        %v5125 = vrot.slane %v5111, %v5124
        %v5126 = vcombine.low %v4273, %v4281
        %v5127 = vcombine.high %v4273, %v4281
        %v5129 = vunpack.c.l.s4 1983009808
        %v5130 = vunpack.c.0.s8 %v5129
        %v5131 = vlaneseq
        %v5132 = vshrl.u32 %v5131, 7
        %v5133 = vsub.s32 %v5130, %v5132
        %v5134 = vrot.slane %v5126, %v5133
        %v5136 = vunpack.c.l.s4 1983009808
        %v5137 = vunpack.c.0.s8 %v5136
        %v5138 = vlaneseq
        %v5139 = vshrl.u32 %v5138, 7
        %v5140 = vsub.s32 %v5137, %v5139
        %v5141 = vrot.slane %v5127, %v5140
        %v5142 = vcombine.low %v5086, %v5102
        %v5143 = vcombine.high %v5086, %v5102
        %v5145 = vunpack.c.l.s4 1934713408
        %v5146 = vunpack.c.0.s8 %v5145
        %v5147 = vlaneseq
        %v5148 = vshrl.u32 %v5147, 7
        %v5149 = vsub.s32 %v5146, %v5148
        %v5150 = vrot.slane %v5142, %v5149
        %v5152 = vunpack.c.l.s4 1934713408
        %v5153 = vunpack.c.0.s8 %v5152
        %v5154 = vlaneseq
        %v5155 = vshrl.u32 %v5154, 7
        %v5156 = vsub.s32 %v5153, %v5155
        %v5157 = vrot.slane %v5143, %v5156
        %v5158 = vcombine.low %v5093, %v5109
        %v5159 = vcombine.high %v5093, %v5109
        %v5161 = vunpack.c.l.s4 1934713408
        %v5162 = vunpack.c.0.s8 %v5161
        %v5163 = vlaneseq
        %v5164 = vshrl.u32 %v5163, 7
        %v5165 = vsub.s32 %v5162, %v5164
        %v5166 = vrot.slane %v5158, %v5165
        %v5168 = vunpack.c.l.s4 1934713408
        %v5169 = vunpack.c.0.s8 %v5168
        %v5170 = vlaneseq
        %v5171 = vshrl.u32 %v5170, 7
        %v5172 = vsub.s32 %v5169, %v5171
        %v5173 = vrot.slane %v5159, %v5172
        %v5174 = vcombine.low %v5118, %v5134
        %v5175 = vcombine.high %v5118, %v5134
        %v5177 = vunpack.c.l.s4 1934713408
        %v5178 = vunpack.c.0.s8 %v5177
        %v5179 = vlaneseq
        %v5180 = vshrl.u32 %v5179, 7
        %v5181 = vsub.s32 %v5178, %v5180
        %v5182 = vrot.slane %v5174, %v5181
        %v5184 = vunpack.c.l.s4 1934713408
        %v5185 = vunpack.c.0.s8 %v5184
        %v5186 = vlaneseq
        %v5187 = vshrl.u32 %v5186, 7
        %v5188 = vsub.s32 %v5185, %v5187
        %v5189 = vrot.slane %v5175, %v5188
        %v5190 = vcombine.low %v5125, %v5141
        %v5191 = vcombine.high %v5125, %v5141
        %v5193 = vunpack.c.l.s4 1934713408
        %v5194 = vunpack.c.0.s8 %v5193
        %v5195 = vlaneseq
        %v5196 = vshrl.u32 %v5195, 7
        %v5197 = vsub.s32 %v5194, %v5196
        %v5198 = vrot.slane %v5190, %v5197
        %v5200 = vunpack.c.l.s4 1934713408
        %v5201 = vunpack.c.0.s8 %v5200
        %v5202 = vlaneseq
        %v5203 = vshrl.u32 %v5202, 7
        %v5204 = vsub.s32 %v5201, %v5203
        %v5205 = vrot.slane %v5191, %v5204
        %v5206 = vcombine.low %v5150, %v5182
        %v5207 = vcombine.high %v5150, %v5182
        %v5208 = vcombine.low %v5157, %v5189
        %v5209 = vcombine.high %v5157, %v5189
        %v5210 = vcombine.low %v5166, %v5198
        %v5211 = vcombine.high %v5166, %v5198
        %v5212 = vcombine.low %v5173, %v5205
        %v5213 = vcombine.high %v5173, %v5205
        %v5214 = vcombine.low %v4285, %v4293
        %v5215 = vcombine.high %v4285, %v4293
        %v5217 = vunpack.c.l.s4 1983009808
        %v5218 = vunpack.c.0.s8 %v5217
        %v5219 = vlaneseq
        %v5220 = vshrl.u32 %v5219, 7
        %v5221 = vsub.s32 %v5218, %v5220
        %v5222 = vrot.slane %v5214, %v5221
        %v5224 = vunpack.c.l.s4 1983009808
        %v5225 = vunpack.c.0.s8 %v5224
        %v5226 = vlaneseq
        %v5227 = vshrl.u32 %v5226, 7
        %v5228 = vsub.s32 %v5225, %v5227
        %v5229 = vrot.slane %v5215, %v5228
        %v5230 = vcombine.low %v4289, %v4297
        %v5231 = vcombine.high %v4289, %v4297
        %v5233 = vunpack.c.l.s4 1983009808
        %v5234 = vunpack.c.0.s8 %v5233
        %v5235 = vlaneseq
        %v5236 = vshrl.u32 %v5235, 7
        %v5237 = vsub.s32 %v5234, %v5236
        %v5238 = vrot.slane %v5230, %v5237
        %v5240 = vunpack.c.l.s4 1983009808
        %v5241 = vunpack.c.0.s8 %v5240
        %v5242 = vlaneseq
        %v5243 = vshrl.u32 %v5242, 7
        %v5244 = vsub.s32 %v5241, %v5243
        %v5245 = vrot.slane %v5231, %v5244
        %v5246 = vcombine.low %v4301, %v4309
        %v5247 = vcombine.high %v4301, %v4309
        %v5249 = vunpack.c.l.s4 1983009808
        %v5250 = vunpack.c.0.s8 %v5249
        %v5251 = vlaneseq
        %v5252 = vshrl.u32 %v5251, 7
        %v5253 = vsub.s32 %v5250, %v5252
        %v5254 = vrot.slane %v5246, %v5253
        %v5256 = vunpack.c.l.s4 1983009808
        %v5257 = vunpack.c.0.s8 %v5256
        %v5258 = vlaneseq
        %v5259 = vshrl.u32 %v5258, 7
        %v5260 = vsub.s32 %v5257, %v5259
        %v5261 = vrot.slane %v5247, %v5260
        %v5262 = vcombine.low %v4305, %v4313
        %v5263 = vcombine.high %v4305, %v4313
        %v5265 = vunpack.c.l.s4 1983009808
        %v5266 = vunpack.c.0.s8 %v5265
        %v5267 = vlaneseq
        %v5268 = vshrl.u32 %v5267, 7
        %v5269 = vsub.s32 %v5266, %v5268
        %v5270 = vrot.slane %v5262, %v5269
        %v5272 = vunpack.c.l.s4 1983009808
        %v5273 = vunpack.c.0.s8 %v5272
        %v5274 = vlaneseq
        %v5275 = vshrl.u32 %v5274, 7
        %v5276 = vsub.s32 %v5273, %v5275
        %v5277 = vrot.slane %v5263, %v5276
        %v5278 = vcombine.low %v5222, %v5238
        %v5279 = vcombine.high %v5222, %v5238
        %v5281 = vunpack.c.l.s4 1934713408
        %v5282 = vunpack.c.0.s8 %v5281
        %v5283 = vlaneseq
        %v5284 = vshrl.u32 %v5283, 7
        %v5285 = vsub.s32 %v5282, %v5284
        %v5286 = vrot.slane %v5278, %v5285
        %v5288 = vunpack.c.l.s4 1934713408
        %v5289 = vunpack.c.0.s8 %v5288
        %v5290 = vlaneseq
        %v5291 = vshrl.u32 %v5290, 7
        %v5292 = vsub.s32 %v5289, %v5291
        %v5293 = vrot.slane %v5279, %v5292
        %v5294 = vcombine.low %v5229, %v5245
        %v5295 = vcombine.high %v5229, %v5245
        %v5297 = vunpack.c.l.s4 1934713408
        %v5298 = vunpack.c.0.s8 %v5297
        %v5299 = vlaneseq
        %v5300 = vshrl.u32 %v5299, 7
        %v5301 = vsub.s32 %v5298, %v5300
        %v5302 = vrot.slane %v5294, %v5301
        %v5304 = vunpack.c.l.s4 1934713408
        %v5305 = vunpack.c.0.s8 %v5304
        %v5306 = vlaneseq
        %v5307 = vshrl.u32 %v5306, 7
        %v5308 = vsub.s32 %v5305, %v5307
        %v5309 = vrot.slane %v5295, %v5308
        %v5310 = vcombine.low %v5254, %v5270
        %v5311 = vcombine.high %v5254, %v5270
        %v5313 = vunpack.c.l.s4 1934713408
        %v5314 = vunpack.c.0.s8 %v5313
        %v5315 = vlaneseq
        %v5316 = vshrl.u32 %v5315, 7
        %v5317 = vsub.s32 %v5314, %v5316
        %v5318 = vrot.slane %v5310, %v5317
        %v5320 = vunpack.c.l.s4 1934713408
        %v5321 = vunpack.c.0.s8 %v5320
        %v5322 = vlaneseq
        %v5323 = vshrl.u32 %v5322, 7
        %v5324 = vsub.s32 %v5321, %v5323
        %v5325 = vrot.slane %v5311, %v5324
        %v5326 = vcombine.low %v5261, %v5277
        %v5327 = vcombine.high %v5261, %v5277
        %v5329 = vunpack.c.l.s4 1934713408
        %v5330 = vunpack.c.0.s8 %v5329
        %v5331 = vlaneseq
        %v5332 = vshrl.u32 %v5331, 7
        %v5333 = vsub.s32 %v5330, %v5332
        %v5334 = vrot.slane %v5326, %v5333
        %v5336 = vunpack.c.l.s4 1934713408
        %v5337 = vunpack.c.0.s8 %v5336
        %v5338 = vlaneseq
        %v5339 = vshrl.u32 %v5338, 7
        %v5340 = vsub.s32 %v5337, %v5339
        %v5341 = vrot.slane %v5327, %v5340
        %v5342 = vcombine.low %v5286, %v5318
        %v5343 = vcombine.high %v5286, %v5318
        %v5344 = vcombine.low %v5293, %v5325
        %v5345 = vcombine.high %v5293, %v5325
        %v5346 = vcombine.low %v5302, %v5334
        %v5347 = vcombine.high %v5302, %v5334
        %v5348 = vcombine.low %v5309, %v5341
        %v5349 = vcombine.high %v5309, %v5341
        %v5350 = vcombine.low %v4317, %v4325
        %v5351 = vcombine.high %v4317, %v4325
        %v5353 = vunpack.c.l.s4 1983009808
        %v5354 = vunpack.c.0.s8 %v5353
        %v5355 = vlaneseq
        %v5356 = vshrl.u32 %v5355, 7
        %v5357 = vsub.s32 %v5354, %v5356
        %v5358 = vrot.slane %v5350, %v5357
        %v5360 = vunpack.c.l.s4 1983009808
        %v5361 = vunpack.c.0.s8 %v5360
        %v5362 = vlaneseq
        %v5363 = vshrl.u32 %v5362, 7
        %v5364 = vsub.s32 %v5361, %v5363
        %v5365 = vrot.slane %v5351, %v5364
        %v5366 = vcombine.low %v4321, %v4329
        %v5367 = vcombine.high %v4321, %v4329
        %v5369 = vunpack.c.l.s4 1983009808
        %v5370 = vunpack.c.0.s8 %v5369
        %v5371 = vlaneseq
        %v5372 = vshrl.u32 %v5371, 7
        %v5373 = vsub.s32 %v5370, %v5372
        %v5374 = vrot.slane %v5366, %v5373
        %v5376 = vunpack.c.l.s4 1983009808
        %v5377 = vunpack.c.0.s8 %v5376
        %v5378 = vlaneseq
        %v5379 = vshrl.u32 %v5378, 7
        %v5380 = vsub.s32 %v5377, %v5379
        %v5381 = vrot.slane %v5367, %v5380
        %v5382 = vcombine.low %v4333, %v4341
        %v5383 = vcombine.high %v4333, %v4341
        %v5385 = vunpack.c.l.s4 1983009808
        %v5386 = vunpack.c.0.s8 %v5385
        %v5387 = vlaneseq
        %v5388 = vshrl.u32 %v5387, 7
        %v5389 = vsub.s32 %v5386, %v5388
        %v5390 = vrot.slane %v5382, %v5389
        %v5392 = vunpack.c.l.s4 1983009808
        %v5393 = vunpack.c.0.s8 %v5392
        %v5394 = vlaneseq
        %v5395 = vshrl.u32 %v5394, 7
        %v5396 = vsub.s32 %v5393, %v5395
        %v5397 = vrot.slane %v5383, %v5396
        %v5398 = vcombine.low %v4337, %v4345
        %v5399 = vcombine.high %v4337, %v4345
        %v5401 = vunpack.c.l.s4 1983009808
        %v5402 = vunpack.c.0.s8 %v5401
        %v5403 = vlaneseq
        %v5404 = vshrl.u32 %v5403, 7
        %v5405 = vsub.s32 %v5402, %v5404
        %v5406 = vrot.slane %v5398, %v5405
        %v5408 = vunpack.c.l.s4 1983009808
        %v5409 = vunpack.c.0.s8 %v5408
        %v5410 = vlaneseq
        %v5411 = vshrl.u32 %v5410, 7
        %v5412 = vsub.s32 %v5409, %v5411
        %v5413 = vrot.slane %v5399, %v5412
        %v5414 = vcombine.low %v5358, %v5374
        %v5415 = vcombine.high %v5358, %v5374
        %v5417 = vunpack.c.l.s4 1934713408
        %v5418 = vunpack.c.0.s8 %v5417
        %v5419 = vlaneseq
        %v5420 = vshrl.u32 %v5419, 7
        %v5421 = vsub.s32 %v5418, %v5420
        %v5422 = vrot.slane %v5414, %v5421
        %v5424 = vunpack.c.l.s4 1934713408
        %v5425 = vunpack.c.0.s8 %v5424
        %v5426 = vlaneseq
        %v5427 = vshrl.u32 %v5426, 7
        %v5428 = vsub.s32 %v5425, %v5427
        %v5429 = vrot.slane %v5415, %v5428
        %v5430 = vcombine.low %v5365, %v5381
        %v5431 = vcombine.high %v5365, %v5381
        %v5433 = vunpack.c.l.s4 1934713408
        %v5434 = vunpack.c.0.s8 %v5433
        %v5435 = vlaneseq
        %v5436 = vshrl.u32 %v5435, 7
        %v5437 = vsub.s32 %v5434, %v5436
        %v5438 = vrot.slane %v5430, %v5437
        %v5440 = vunpack.c.l.s4 1934713408
        %v5441 = vunpack.c.0.s8 %v5440
        %v5442 = vlaneseq
        %v5443 = vshrl.u32 %v5442, 7
        %v5444 = vsub.s32 %v5441, %v5443
        %v5445 = vrot.slane %v5431, %v5444
        %v5446 = vcombine.low %v5390, %v5406
        %v5447 = vcombine.high %v5390, %v5406
        %v5449 = vunpack.c.l.s4 1934713408
        %v5450 = vunpack.c.0.s8 %v5449
        %v5451 = vlaneseq
        %v5452 = vshrl.u32 %v5451, 7
        %v5453 = vsub.s32 %v5450, %v5452
        %v5454 = vrot.slane %v5446, %v5453
        %v5456 = vunpack.c.l.s4 1934713408
        %v5457 = vunpack.c.0.s8 %v5456
        %v5458 = vlaneseq
        %v5459 = vshrl.u32 %v5458, 7
        %v5460 = vsub.s32 %v5457, %v5459
        %v5461 = vrot.slane %v5447, %v5460
        %v5462 = vcombine.low %v5397, %v5413
        %v5463 = vcombine.high %v5397, %v5413
        %v5465 = vunpack.c.l.s4 1934713408
        %v5466 = vunpack.c.0.s8 %v5465
        %v5467 = vlaneseq
        %v5468 = vshrl.u32 %v5467, 7
        %v5469 = vsub.s32 %v5466, %v5468
        %v5470 = vrot.slane %v5462, %v5469
        %v5472 = vunpack.c.l.s4 1934713408
        %v5473 = vunpack.c.0.s8 %v5472
        %v5474 = vlaneseq
        %v5475 = vshrl.u32 %v5474, 7
        %v5476 = vsub.s32 %v5473, %v5475
        %v5477 = vrot.slane %v5463, %v5476
        %v5478 = vcombine.low %v5422, %v5454
        %v5479 = vcombine.high %v5422, %v5454
        %v5480 = vcombine.low %v5429, %v5461
        %v5481 = vcombine.high %v5429, %v5461
        %v5482 = vcombine.low %v5438, %v5470
        %v5483 = vcombine.high %v5438, %v5470
        %v5484 = vcombine.low %v5445, %v5477
        %v5485 = vcombine.high %v5445, %v5477
        %v5486 = vcombine.low %v4349, %v4357
        %v5487 = vcombine.high %v4349, %v4357
        %v5489 = vunpack.c.l.s4 1983009808
        %v5490 = vunpack.c.0.s8 %v5489
        %v5491 = vlaneseq
        %v5492 = vshrl.u32 %v5491, 7
        %v5493 = vsub.s32 %v5490, %v5492
        %v5494 = vrot.slane %v5486, %v5493
        %v5496 = vunpack.c.l.s4 1983009808
        %v5497 = vunpack.c.0.s8 %v5496
        %v5498 = vlaneseq
        %v5499 = vshrl.u32 %v5498, 7
        %v5500 = vsub.s32 %v5497, %v5499
        %v5501 = vrot.slane %v5487, %v5500
        %v5502 = vcombine.low %v4353, %v4361
        %v5503 = vcombine.high %v4353, %v4361
        %v5505 = vunpack.c.l.s4 1983009808
        %v5506 = vunpack.c.0.s8 %v5505
        %v5507 = vlaneseq
        %v5508 = vshrl.u32 %v5507, 7
        %v5509 = vsub.s32 %v5506, %v5508
        %v5510 = vrot.slane %v5502, %v5509
        %v5512 = vunpack.c.l.s4 1983009808
        %v5513 = vunpack.c.0.s8 %v5512
        %v5514 = vlaneseq
        %v5515 = vshrl.u32 %v5514, 7
        %v5516 = vsub.s32 %v5513, %v5515
        %v5517 = vrot.slane %v5503, %v5516
        %v5518 = vcombine.low %v4365, %v4373
        %v5519 = vcombine.high %v4365, %v4373
        %v5521 = vunpack.c.l.s4 1983009808
        %v5522 = vunpack.c.0.s8 %v5521
        %v5523 = vlaneseq
        %v5524 = vshrl.u32 %v5523, 7
        %v5525 = vsub.s32 %v5522, %v5524
        %v5526 = vrot.slane %v5518, %v5525
        %v5528 = vunpack.c.l.s4 1983009808
        %v5529 = vunpack.c.0.s8 %v5528
        %v5530 = vlaneseq
        %v5531 = vshrl.u32 %v5530, 7
        %v5532 = vsub.s32 %v5529, %v5531
        %v5533 = vrot.slane %v5519, %v5532
        %v5534 = vcombine.low %v4369, %v4377
        %v5535 = vcombine.high %v4369, %v4377
        %v5537 = vunpack.c.l.s4 1983009808
        %v5538 = vunpack.c.0.s8 %v5537
        %v5539 = vlaneseq
        %v5540 = vshrl.u32 %v5539, 7
        %v5541 = vsub.s32 %v5538, %v5540
        %v5542 = vrot.slane %v5534, %v5541
        %v5544 = vunpack.c.l.s4 1983009808
        %v5545 = vunpack.c.0.s8 %v5544
        %v5546 = vlaneseq
        %v5547 = vshrl.u32 %v5546, 7
        %v5548 = vsub.s32 %v5545, %v5547
        %v5549 = vrot.slane %v5535, %v5548
        %v5550 = vcombine.low %v5494, %v5510
        %v5551 = vcombine.high %v5494, %v5510
        %v5553 = vunpack.c.l.s4 1934713408
        %v5554 = vunpack.c.0.s8 %v5553
        %v5555 = vlaneseq
        %v5556 = vshrl.u32 %v5555, 7
        %v5557 = vsub.s32 %v5554, %v5556
        %v5558 = vrot.slane %v5550, %v5557
        %v5560 = vunpack.c.l.s4 1934713408
        %v5561 = vunpack.c.0.s8 %v5560
        %v5562 = vlaneseq
        %v5563 = vshrl.u32 %v5562, 7
        %v5564 = vsub.s32 %v5561, %v5563
        %v5565 = vrot.slane %v5551, %v5564
        %v5566 = vcombine.low %v5501, %v5517
        %v5567 = vcombine.high %v5501, %v5517
        %v5569 = vunpack.c.l.s4 1934713408
        %v5570 = vunpack.c.0.s8 %v5569
        %v5571 = vlaneseq
        %v5572 = vshrl.u32 %v5571, 7
        %v5573 = vsub.s32 %v5570, %v5572
        %v5574 = vrot.slane %v5566, %v5573
        %v5576 = vunpack.c.l.s4 1934713408
        %v5577 = vunpack.c.0.s8 %v5576
        %v5578 = vlaneseq
        %v5579 = vshrl.u32 %v5578, 7
        %v5580 = vsub.s32 %v5577, %v5579
        %v5581 = vrot.slane %v5567, %v5580
        %v5582 = vcombine.low %v5526, %v5542
        %v5583 = vcombine.high %v5526, %v5542
        %v5585 = vunpack.c.l.s4 1934713408
        %v5586 = vunpack.c.0.s8 %v5585
        %v5587 = vlaneseq
        %v5588 = vshrl.u32 %v5587, 7
        %v5589 = vsub.s32 %v5586, %v5588
        %v5590 = vrot.slane %v5582, %v5589
        %v5592 = vunpack.c.l.s4 1934713408
        %v5593 = vunpack.c.0.s8 %v5592
        %v5594 = vlaneseq
        %v5595 = vshrl.u32 %v5594, 7
        %v5596 = vsub.s32 %v5593, %v5595
        %v5597 = vrot.slane %v5583, %v5596
        %v5598 = vcombine.low %v5533, %v5549
        %v5599 = vcombine.high %v5533, %v5549
        %v5601 = vunpack.c.l.s4 1934713408
        %v5602 = vunpack.c.0.s8 %v5601
        %v5603 = vlaneseq
        %v5604 = vshrl.u32 %v5603, 7
        %v5605 = vsub.s32 %v5602, %v5604
        %v5606 = vrot.slane %v5598, %v5605
        %v5608 = vunpack.c.l.s4 1934713408
        %v5609 = vunpack.c.0.s8 %v5608
        %v5610 = vlaneseq
        %v5611 = vshrl.u32 %v5610, 7
        %v5612 = vsub.s32 %v5609, %v5611
        %v5613 = vrot.slane %v5599, %v5612
        %v5614 = vcombine.low %v5558, %v5590
        %v5615 = vcombine.high %v5558, %v5590
        %v5616 = vcombine.low %v5565, %v5597
        %v5617 = vcombine.high %v5565, %v5597
        %v5618 = vcombine.low %v5574, %v5606
        %v5619 = vcombine.high %v5574, %v5606
        %v5620 = vcombine.low %v5581, %v5613
        %v5621 = vcombine.high %v5581, %v5613
        %v5622 = vcombine.low %v4381, %v4389
        %v5623 = vcombine.high %v4381, %v4389
        %v5625 = vunpack.c.l.s4 1983009808
        %v5626 = vunpack.c.0.s8 %v5625
        %v5627 = vlaneseq
        %v5628 = vshrl.u32 %v5627, 7
        %v5629 = vsub.s32 %v5626, %v5628
        %v5630 = vrot.slane %v5622, %v5629
        %v5632 = vunpack.c.l.s4 1983009808
        %v5633 = vunpack.c.0.s8 %v5632
        %v5634 = vlaneseq
        %v5635 = vshrl.u32 %v5634, 7
        %v5636 = vsub.s32 %v5633, %v5635
        %v5637 = vrot.slane %v5623, %v5636
        %v5638 = vcombine.low %v4385, %v4393
        %v5639 = vcombine.high %v4385, %v4393
        %v5641 = vunpack.c.l.s4 1983009808
        %v5642 = vunpack.c.0.s8 %v5641
        %v5643 = vlaneseq
        %v5644 = vshrl.u32 %v5643, 7
        %v5645 = vsub.s32 %v5642, %v5644
        %v5646 = vrot.slane %v5638, %v5645
        %v5648 = vunpack.c.l.s4 1983009808
        %v5649 = vunpack.c.0.s8 %v5648
        %v5650 = vlaneseq
        %v5651 = vshrl.u32 %v5650, 7
        %v5652 = vsub.s32 %v5649, %v5651
        %v5653 = vrot.slane %v5639, %v5652
        %v5654 = vcombine.low %v5630, %v5646
        %v5655 = vcombine.high %v5630, %v5646
        %v5657 = vunpack.c.l.s4 1934713408
        %v5658 = vunpack.c.0.s8 %v5657
        %v5659 = vlaneseq
        %v5660 = vshrl.u32 %v5659, 7
        %v5661 = vsub.s32 %v5658, %v5660
        %v5662 = vrot.slane %v5654, %v5661
        %v5664 = vunpack.c.l.s4 1934713408
        %v5665 = vunpack.c.0.s8 %v5664
        %v5666 = vlaneseq
        %v5667 = vshrl.u32 %v5666, 7
        %v5668 = vsub.s32 %v5665, %v5667
        %v5669 = vrot.slane %v5655, %v5668
        %v5670 = vcombine.low %v5637, %v5653
        %v5671 = vcombine.high %v5637, %v5653
        %v5673 = vunpack.c.l.s4 1934713408
        %v5674 = vunpack.c.0.s8 %v5673
        %v5675 = vlaneseq
        %v5676 = vshrl.u32 %v5675, 7
        %v5677 = vsub.s32 %v5674, %v5676
        %v5678 = vrot.slane %v5670, %v5677
        %v5680 = vunpack.c.l.s4 1934713408
        %v5681 = vunpack.c.0.s8 %v5680
        %v5682 = vlaneseq
        %v5683 = vshrl.u32 %v5682, 7
        %v5684 = vsub.s32 %v5681, %v5683
        %v5685 = vrot.slane %v5671, %v5684
        %v5686 = vcombine.high %v5662, 0.0
        %v5687 = vcombine.high %v5669, 0.0
        %v5688 = vcombine.high %v5678, 0.0
        %v5689 = vcombine.high %v5685, 0.0
        %5695 = vrot.lane.b32.xlu0 %v4595, 16
        %v5696 = vpop.permute.xlu0 %5695
        %5697 = vrot.lane.b32.xlu0 %v4731, 16
        %v5698 = vpop.permute.xlu0 %5697
        %5699 = vrot.lane.b32.xlu0 %v4867, 16
        %v5700 = vpop.permute.xlu0 %5699
        %5701 = vrot.lane.b32.xlu0 %v5003, 16
        %v5702 = vpop.permute.xlu0 %5701
        %5703 = vrot.lane.b32.xlu0 %v5074, 16
        %v5704 = vpop.permute.xlu0 %5703
        %5715 = vrot.lane.b32.xlu0 %v4596, 32
        %v5716 = vpop.permute.xlu0 %5715
        %5717 = vrot.lane.b32.xlu0 %v4732, 32
        %v5718 = vpop.permute.xlu0 %5717
        %5719 = vrot.lane.b32.xlu0 %v4868, 32
        %v5720 = vpop.permute.xlu0 %5719
        %5721 = vrot.lane.b32.xlu0 %v5004, 32
        %v5722 = vpop.permute.xlu0 %5721
        %5723 = vrot.lane.b32.xlu0 %v5057, 32
        %v5724 = vpop.permute.xlu0 %5723
        %5735 = vrot.lane.b32.xlu0 %v4597, 48
        %v5736 = vpop.permute.xlu0 %5735
        %5737 = vrot.lane.b32.xlu0 %v4733, 48
        %v5738 = vpop.permute.xlu0 %5737
        %5739 = vrot.lane.b32.xlu0 %v4869, 48
        %v5740 = vpop.permute.xlu0 %5739
        %5741 = vrot.lane.b32.xlu0 %v5005, 48
        %v5742 = vpop.permute.xlu0 %5741
        %5743 = vrot.lane.b32.xlu0 %v5075, 48
        %v5744 = vpop.permute.xlu0 %5743
        %5755 = vrot.lane.b32.xlu0 %v4598, 64
        %v5756 = vpop.permute.xlu0 %5755
        %5757 = vrot.lane.b32.xlu0 %v4734, 64
        %v5758 = vpop.permute.xlu0 %5757
        %5759 = vrot.lane.b32.xlu0 %v4870, 64
        %v5760 = vpop.permute.xlu0 %5759
        %5761 = vrot.lane.b32.xlu0 %v5006, 64
        %v5762 = vpop.permute.xlu0 %5761
        %5763 = vrot.lane.b32.xlu0 %v5066, 64
        %v5764 = vpop.permute.xlu0 %5763
        %5775 = vrot.lane.b32.xlu0 %v4599, 80
        %v5776 = vpop.permute.xlu0 %5775
        %5777 = vrot.lane.b32.xlu0 %v4735, 80
        %v5778 = vpop.permute.xlu0 %5777
        %5779 = vrot.lane.b32.xlu0 %v4871, 80
        %v5780 = vpop.permute.xlu0 %5779
        %5781 = vrot.lane.b32.xlu0 %v5007, 80
        %v5782 = vpop.permute.xlu0 %5781
        %5783 = vrot.lane.b32.xlu0 %v5076, 80
        %v5784 = vpop.permute.xlu0 %5783
        %5795 = vrot.lane.b32.xlu0 %v4600, 96
        %v5796 = vpop.permute.xlu0 %5795
        %5797 = vrot.lane.b32.xlu0 %v4736, 96
        %v5798 = vpop.permute.xlu0 %5797
        %5799 = vrot.lane.b32.xlu0 %v4872, 96
        %v5800 = vpop.permute.xlu0 %5799
        %5801 = vrot.lane.b32.xlu0 %v5008, 96
        %v5802 = vpop.permute.xlu0 %5801
        %5803 = vrot.lane.b32.xlu0 %v5073, 96
        %v5804 = vpop.permute.xlu0 %5803
        %5815 = vrot.lane.b32.xlu0 %v4601, 112
        %v5816 = vpop.permute.xlu0 %5815
        %5817 = vrot.lane.b32.xlu0 %v4737, 112
        %v5818 = vpop.permute.xlu0 %5817
        %5819 = vrot.lane.b32.xlu0 %v4873, 112
        %v5820 = vpop.permute.xlu0 %5819
        %5821 = vrot.lane.b32.xlu0 %v5009, 112
        %v5822 = vpop.permute.xlu0 %5821
        %5823 = vrot.lane.b32.xlu0 %v5077, 112
        %v5824 = vpop.permute.xlu0 %5823
        %5835 = vrot.lane.b32.xlu0 %v5207, 16
        %v5836 = vpop.permute.xlu0 %5835
        %5837 = vrot.lane.b32.xlu0 %v5343, 16
        %v5838 = vpop.permute.xlu0 %5837
        %5839 = vrot.lane.b32.xlu0 %v5479, 16
        %v5840 = vpop.permute.xlu0 %5839
        %5841 = vrot.lane.b32.xlu0 %v5615, 16
        %v5842 = vpop.permute.xlu0 %5841
        %5843 = vrot.lane.b32.xlu0 %v5686, 16
        %v5844 = vpop.permute.xlu0 %5843
        %5855 = vrot.lane.b32.xlu0 %v5208, 32
        %v5856 = vpop.permute.xlu0 %5855
        %5857 = vrot.lane.b32.xlu0 %v5344, 32
        %v5858 = vpop.permute.xlu0 %5857
        %5859 = vrot.lane.b32.xlu0 %v5480, 32
        %v5860 = vpop.permute.xlu0 %5859
        %5861 = vrot.lane.b32.xlu0 %v5616, 32
        %v5862 = vpop.permute.xlu0 %5861
        %5863 = vrot.lane.b32.xlu0 %v5669, 32
        %v5864 = vpop.permute.xlu0 %5863
        %5875 = vrot.lane.b32.xlu0 %v5209, 48
        %v5876 = vpop.permute.xlu0 %5875
        %5877 = vrot.lane.b32.xlu0 %v5345, 48
        %v5878 = vpop.permute.xlu0 %5877
        %5879 = vrot.lane.b32.xlu0 %v5481, 48
        %v5880 = vpop.permute.xlu0 %5879
        %5881 = vrot.lane.b32.xlu0 %v5617, 48
        %v5882 = vpop.permute.xlu0 %5881
        %5883 = vrot.lane.b32.xlu0 %v5687, 48
        %v5884 = vpop.permute.xlu0 %5883
        %5895 = vrot.lane.b32.xlu0 %v5210, 64
        %v5896 = vpop.permute.xlu0 %5895
        %5897 = vrot.lane.b32.xlu0 %v5346, 64
        %v5898 = vpop.permute.xlu0 %5897
        %5899 = vrot.lane.b32.xlu0 %v5482, 64
        %v5900 = vpop.permute.xlu0 %5899
        %5901 = vrot.lane.b32.xlu0 %v5618, 64
        %v5902 = vpop.permute.xlu0 %5901
        %5903 = vrot.lane.b32.xlu0 %v5678, 64
        %v5904 = vpop.permute.xlu0 %5903
        %5915 = vrot.lane.b32.xlu0 %v5211, 80
        %v5916 = vpop.permute.xlu0 %5915
        %5917 = vrot.lane.b32.xlu0 %v5347, 80
        %v5918 = vpop.permute.xlu0 %5917
        %5919 = vrot.lane.b32.xlu0 %v5483, 80
        %v5920 = vpop.permute.xlu0 %5919
        %5921 = vrot.lane.b32.xlu0 %v5619, 80
        %v5922 = vpop.permute.xlu0 %5921
        %5923 = vrot.lane.b32.xlu0 %v5688, 80
        %v5924 = vpop.permute.xlu0 %5923
        %5935 = vrot.lane.b32.xlu0 %v5212, 96
        %v5936 = vpop.permute.xlu0 %5935
        %5937 = vrot.lane.b32.xlu0 %v5348, 96
        %v5938 = vpop.permute.xlu0 %5937
        %5939 = vrot.lane.b32.xlu0 %v5484, 96
        %v5940 = vpop.permute.xlu0 %5939
        %5941 = vrot.lane.b32.xlu0 %v5620, 96
        %v5942 = vpop.permute.xlu0 %5941
        %5943 = vrot.lane.b32.xlu0 %v5685, 96
        %v5944 = vpop.permute.xlu0 %5943
        %5955 = vrot.lane.b32.xlu0 %v5213, 112
        %v5956 = vpop.permute.xlu0 %5955
        %5957 = vrot.lane.b32.xlu0 %v5349, 112
        %v5958 = vpop.permute.xlu0 %5957
        %5959 = vrot.lane.b32.xlu0 %v5485, 112
        %v5960 = vpop.permute.xlu0 %5959
        %5961 = vrot.lane.b32.xlu0 %v5621, 112
        %v5962 = vpop.permute.xlu0 %5961
        %5963 = vrot.lane.b32.xlu0 %v5689, 112
        %v5964 = vpop.permute.xlu0 %5963
        %v5970 = vsel %vm2217, %v4594, %v5696
        %v5971 = vsel %vm2217, %v4730, %v5698
        %v5972 = vsel %vm2217, %v4866, %v5700
        %v5973 = vsel %vm2217, %v5002, %v5702
        %v5974 = vsel %vm2217, %v5050, %v5704
        %v5975 = vsel %vm2223, %v5970, %v5716
        %v5976 = vsel %vm2223, %v5971, %v5718
        %v5977 = vsel %vm2223, %v5972, %v5720
        %v5978 = vsel %vm2223, %v5973, %v5722
        %v5979 = vsel %vm2223, %v5974, %v5724
        %v5980 = vsel %vm2229, %v5975, %v5736
        %v5981 = vsel %vm2229, %v5976, %v5738
        %v5982 = vsel %vm2229, %v5977, %v5740
        %v5983 = vsel %vm2229, %v5978, %v5742
        %v5984 = vsel %vm2229, %v5979, %v5744
        %v5985 = vsel %vm2235, %v5980, %v5756
        %v5986 = vsel %vm2235, %v5981, %v5758
        %v5987 = vsel %vm2235, %v5982, %v5760
        %v5988 = vsel %vm2235, %v5983, %v5762
        %v5989 = vsel %vm2235, %v5984, %v5764
        %v5990 = vsel %vm2241, %v5985, %v5776
        %v5991 = vsel %vm2241, %v5986, %v5778
        %v5992 = vsel %vm2241, %v5987, %v5780
        %v5993 = vsel %vm2241, %v5988, %v5782
        %v5994 = vsel %vm2241, %v5989, %v5784
        %v5995 = vsel %vm2247, %v5990, %v5796
        %v5996 = vsel %vm2247, %v5991, %v5798
        %v5997 = vsel %vm2247, %v5992, %v5800
        %v5998 = vsel %vm2247, %v5993, %v5802
        %v5999 = vsel %vm2247, %v5994, %v5804
        %v6000 = vsel %vm2253, %v5995, %v5816
        %v6001 = vsel %vm2253, %v5996, %v5818
        %v6002 = vsel %vm2253, %v5997, %v5820
        %v6003 = vsel %vm2253, %v5998, %v5822
        %v6004 = vsel %vm2253, %v5999, %v5824
        %v6005 = vsel %vm2217, %v5206, %v5836
        %v6006 = vsel %vm2217, %v5342, %v5838
        %v6007 = vsel %vm2217, %v5478, %v5840
        %v6008 = vsel %vm2217, %v5614, %v5842
        %v6009 = vsel %vm2217, %v5662, %v5844
        %v6010 = vsel %vm2223, %v6005, %v5856
        %v6011 = vsel %vm2223, %v6006, %v5858
        %v6012 = vsel %vm2223, %v6007, %v5860
        %v6013 = vsel %vm2223, %v6008, %v5862
        %v6014 = vsel %vm2223, %v6009, %v5864
        %v6015 = vsel %vm2229, %v6010, %v5876
        %v6016 = vsel %vm2229, %v6011, %v5878
        %v6017 = vsel %vm2229, %v6012, %v5880
        %v6018 = vsel %vm2229, %v6013, %v5882
        %v6019 = vsel %vm2229, %v6014, %v5884
        %v6020 = vsel %vm2235, %v6015, %v5896
        %v6021 = vsel %vm2235, %v6016, %v5898
        %v6022 = vsel %vm2235, %v6017, %v5900
        %v6023 = vsel %vm2235, %v6018, %v5902
        %v6024 = vsel %vm2235, %v6019, %v5904
        %v6025 = vsel %vm2241, %v6020, %v5916
        %v6026 = vsel %vm2241, %v6021, %v5918
        %v6027 = vsel %vm2241, %v6022, %v5920
        %v6028 = vsel %vm2241, %v6023, %v5922
        %v6029 = vsel %vm2241, %v6024, %v5924
        %v6030 = vsel %vm2247, %v6025, %v5936
        %v6031 = vsel %vm2247, %v6026, %v5938
        %v6032 = vsel %vm2247, %v6027, %v5940
        %v6033 = vsel %vm2247, %v6028, %v5942
        %v6034 = vsel %vm2247, %v6029, %v5944
        %v6035 = vsel %vm2253, %v6030, %v5956
        %v6036 = vsel %vm2253, %v6031, %v5958
        %v6037 = vsel %vm2253, %v6032, %v5960
        %v6038 = vsel %vm2253, %v6033, %v5962
        %v6039 = vsel %vm2253, %v6034, %v5964
        %v6041 = vsel %vm4086, %v4249, 0
        %v6044 = vsel %vm4090, %v6004, 0
        %v6047 = vsel %vm4090, %v6039, 0
        %6049 = vmatprep.subr.mxu0 %v6035
        %6050 = vmatpush1.msra.mxu0 %v6000
        %6051 = vmatprep.subr.mxu0 %v6036
        %6052 = vmatpush1.msra.mxu0 %v6001
        %6053 = vmatprep.subr.mxu0 %v6037
        %6054 = vmatpush1.msra.mxu0 %v6002
        %6055 = vmatprep.subr.mxu0 %v6038
        %6056 = vmatpush1.msra.mxu0 %v6003
        %6057 = vmatprep.subr.mxu0 %v6047
        %6058 = vmatpush1.msra.mxu0 %v6044
        %6059 = vmatprep.subr.mxu0 0.0
        %6060 = vmatpush1.msra.mxu0 0.0
        %6061 = vmatprep.subr.mxu0 0.0
        %6062 = vmatpush1.msra.mxu0 0.0
        %6063 = vmatprep.subr.mxu0 0.0
        %6064 = vmatpush1.msra.mxu0 0.0
        %6065 = vmatprep.subr.mxu0 0.0
        %6066 = vmatpush1.msra.mxu0 0.0
        %6067 = vmatprep.subr.mxu0 0.0
        %6068 = vmatpush1.msra.mxu0 0.0
        %6069 = vmatprep.subr.mxu0 0.0
        %6070 = vmatpush1.msra.mxu0 0.0
        %6071 = vmatprep.subr.mxu0 0.0
        %6072 = vmatpush1.msra.mxu0 0.0
        %6073 = vmatprep.subr.mxu0 0.0
        %6074 = vmatpush1.msra.mxu0 0.0
        %6075 = vmatprep.subr.mxu0 0.0
        %6076 = vmatpush1.msra.mxu0 0.0
        %6077 = vmatprep.subr.mxu0 0.0
        %6078 = vmatpush1.msra.mxu0 0.0
        %6079 = vmatprep.subr.mxu0 0.0
        %6080 = vmatpush1.msra.mxu0 0.0
        %6081 = vmatprep.subr.mxu0 0.0
        %6082 = vmatpush1.msra.mxu0 0.0
        %6083 = vmatprep.subr.mxu0 0.0
        %6084 = vmatpush1.msra.mxu0 0.0
        %6085 = vmatprep.subr.mxu0 0.0
        %6086 = vmatpush1.msra.mxu0 0.0
        %6087 = vmatprep.subr.mxu0 0.0
        %6088 = vmatpush1.msra.mxu0 0.0
        %6089 = vmatprep.subr.mxu0 0.0
        %6090 = vmatpush1.msra.mxu0 0.0
        %6091 = vmatprep.subr.mxu0 0.0
        %6092 = vmatpush1.msra.mxu0 0.0
        %6093 = vmatprep.subr.mxu0 0.0
        %6094 = vmatpush1.msra.mxu0 0.0
        %6095 = vmatprep.subr.mxu0 0.0
        %6096 = vmatpush1.msra.mxu0 0.0
        %6097 = vmatprep.subr.mxu0 0.0
        %6098 = vmatpush1.msra.mxu0 0.0
        %6099 = vmatprep.subr.mxu0 0.0
        %6100 = vmatpush1.msra.mxu0 0.0
        %6101 = vmatprep.subr.mxu0 0.0
        %6102 = vmatpush1.msra.mxu0 0.0
        %6103 = vmatprep.subr.mxu0 0.0
        %6104 = vmatpush1.msra.mxu0 0.0
        %6105 = vmatprep.subr.mxu0 0.0
        %6106 = vmatpush1.msra.mxu0 0.0
        %6107 = vmatprep.subr.mxu0 0.0
        %6108 = vmatpush1.msra.mxu0 0.0
        %6109 = vmatprep.subr.mxu0 0.0
        %6110 = vmatpush1.msra.mxu0 0.0
        %6111 = vmatprep.subr.mxu0 0.0
        %6112 = vmatpush1.msra.mxu0 0.0
        %6113 = vmatprep.mubr.f32.mxu0 0.0
        %6114 = vmatmul.mubr.f32.gmra.mrb[0].mxu0 %v6041
        %v6115 = vpop.f32.mrb[0].mxu0
        %v6116 = vadd.f32 0.0, %v6115
        %v6117 = vpop.f32.mrb[0].mxu0
        %v6118 = vadd.f32 0.0, %v6117
        %6119 = vdwg.mxu0
        %v6120 = vadd.f32 %v4244, %v6116
        %v6121 = vadd.f32 %v4246, %v6118
        %v6122 = vld [vmem:[%s2] sm:$0xff]
        %6124 = vset.pattern.permute.xlu0 0
        %6125 = vperm.xlu0 %6124, %v6122
        %v6126 = vpop.permute.xlu0 %6125
        %v6128 = vadd.f32 %v6120, %v6126
        %v6129 = vadd.f32 %v6121, %v6126
        %6130 = vst [vmem:[%s217] sm:$0xff] %v6128
        %6131 = vst [vmem:[%s217 + $0x8] sm:$0xff] %v6129
        %s6132 = sand.u32 %s111, 1
        %s6133 = scalar_lea.sflag [#allocation5], %s6132
        %s6134 = sand.u32 %s111, 1
        %s6135 = smul.addr %s6134, 16
        %s6136 = scalar_lea.vmem [#allocation8], %s6135
        // Predicated region
        $region45: #{tpu_custom_call.1} parent=31 // pred_check
          %p6137 = pneg %p121
        $region46: #{tpu_custom_call.1} parent=31 // pred_check_branch
          %6139 = sbr.rel (%p6137) target = $region48
        $region47: #{tpu_custom_call.1} parent=31 // pred_region
          %s6140 = smul.u32 2, %s26
          %s6142 = ssub.s32 256, 256
          %6143 = vsyncadd %s6133, %s6142
          %s6144 = smul.addr %s25, 2
          %s6145 = sadd.s32 %s6140, %s6144
          %s6146 = smul.addr %s6145, 128
          %s6147 = scalar_lea.hbm %s3, %s6146
          %s6149 = sshll.u32 %s6136, 4
          %s6150 = int_to_ptr.vmem [resolvable:$true] %s6149
          %6152 = dma.vmem_to_hbm [thread:$0]  %s6150, 256, %s6147, %s6133
        $region48: #{tpu_custom_call.1} parent=31 // pred_fallthru
          _
      $region32: #{tpu_custom_call.1} parent=5 // pred_fallthru
        _
      %p6153 = scmp.le.s32.totalorder 2, %s16
      // Predicated region
      $region49: #{tpu_custom_call.1} parent=5 // pred_check
        %p6154 = pneg %p6153
      $region50: #{tpu_custom_call.1} parent=5 // pred_check_branch
        %6156 = sbr.rel (%p6154) target = $region52
      $region51: #{tpu_custom_call.1} parent=5 // pred_region
        %s6157 = ssub.s32 %s16, 2
        // Predicated region
        $region53: #{tpu_custom_call.1} parent=51 // pred_check
          %p6158 = pneg %p127
        $region54: #{tpu_custom_call.1} parent=51 // pred_check_branch
          %6160 = sbr.rel (%p6158) target = $region56
        $region55: #{tpu_custom_call.1} parent=51 // pred_region
          %s6161 = sand.u32 %s112, 1
          %s6162 = scalar_lea.sflag [#allocation5], %s6161
          %s6163 = sand.u32 %s112, 1
          %s6164 = smul.addr %s6163, 16
          %s6165 = scalar_lea.vmem [#allocation8], %s6164
          %6166 = dma.done %s6162, 256
        $region56: #{tpu_custom_call.1} parent=51 // pred_fallthru
          _
      $region52: #{tpu_custom_call.1} parent=5 // pred_fallthru
        _
    $region6: #{tpu_custom_call.1} parent=1 // loop_footer
      %s20 = sadd.s32 1, %s16
    $region7: #{tpu_custom_call.1} parent=1 // loop_footer_branch
      %15 = sbr.rel target = $region3
    $region8: #{tpu_custom_call.1} parent=1 // loop_exit
      _
    %6167 = vsyncpa [#allocation4], 1
    %s6168 = scalar_lea.sflag [#allocation4], 1
    %6169 = vsyncpa %s6168, 1
    %6170 = vsyncpa [#allocation7], 1
    %6171 = vsyncpa [#allocation5], 1
    %s6172 = scalar_lea.sflag [#allocation5], 1
    %6173 = vsyncpa %s6172, 1

</llo_original>
